<compile_context>
chip_gen: v7x
topology: tpu7x:2x2x1
jax: 0.10.0
libtpu: 0.0.40
codegen_flags: <defaults>
</compile_context>

<pallas_src>
import math
import functools

import jax
import jax.numpy as jnp
from jax.experimental import pallas as pl
from jax.experimental.pallas import tpu as pltpu


# ----------------------------------------------------------------------------
# helpers used inside kernel bodies
# ----------------------------------------------------------------------------
def _layernorm(x, w, b, eps=1e-5):
    x = x.astype(jnp.float32)
    mu = jnp.mean(x, axis=-1, keepdims=True)
    var = jnp.mean((x - mu) ** 2, axis=-1, keepdims=True)
    return (x - mu) * jax.lax.rsqrt(var + eps) * w + b


def _gelu_exact(x):
    # matches torch.nn.GELU() (erf form)
    return 0.5 * x * (1.0 + jax.lax.erf(x / math.sqrt(2.0)))


# ----------------------------------------------------------------------------
# Kernel 1: fused [emb LayerNorm + all Graphormer layers]
#   grid = (batch, layer); residual stream kept resident in VMEM scratch.
# ----------------------------------------------------------------------------
def graphormer_stack_kernel(x_ref, bias_ref, embw_ref, embb_ref,
                            ln1w, ln1b, wq, bq, wk, bk, wv, bv, wo, bo,
                            ln2w, ln2b, w1, b1, w2, b2,
                            o_ref, xres, *, num_heads, head_dim):
    f32 = jnp.float32
    bf16 = jnp.bfloat16
    layer = pl.program_id(1)

    @pl.when(layer == 0)
    def _():
        # embedding LayerNorm once per graph, result becomes the residual stream
        xres[...] = _layernorm(x_ref[0], embw_ref[0], embb_ref[0])

    x = xres[...]                                   # (S, D) f32 residual stream
    S, D = x.shape
    H, hd = num_heads, head_dim

    # ------------------ biased multi-head attention (pre-LN) ------------------
    h = _layernorm(x, ln1w[0], ln1b[0]).astype(bf16)            # (S, D)

    # feature-major projections: (D, S) = W[out, in] . h^T  (contract last dims)
    nt2d = (((1,), (1,)), ((), ()))
    qT = jax.lax.dot_general(wq[0], h, nt2d, preferred_element_type=f32) + bq[0]
    kT = jax.lax.dot_general(wk[0], h, nt2d, preferred_element_type=f32) + bk[0]
    vT = jax.lax.dot_general(wv[0], h, nt2d, preferred_element_type=f32) + bv[0]
    qT = qT * (hd ** -0.5)

    # head-major views: leading-dim split keeps the lane dim untouched
    q3 = jnp.transpose(qT.reshape(H, hd, S), (0, 2, 1)).astype(bf16)   # (H, S, hd)
    k3 = kT.reshape(H, hd, S).astype(bf16)                              # (H, hd, S)
    v3 = vT.reshape(H, hd, S).astype(bf16)                              # (H, hd, S)

    # batched scores for all heads at once: (H, S, S)
    s = jax.lax.dot_general(q3, k3, (((2,), (1,)), ((0,), (0,))),
                            preferred_element_type=f32)
    s = s + bias_ref[0].astype(f32)             # attn bias (mask already folded in)

    smax = jnp.max(s, axis=-1, keepdims=True)
    e = jnp.exp(s - smax)
    p = e * pl.reciprocal(jnp.sum(e, axis=-1, keepdims=True), approx=True)

    # batched PV, feature-major context: (H, hd, S)
    ctxT = jax.lax.dot_general(v3, p.astype(bf16), (((2,), (2,)), ((0,), (0,))),
                               preferred_element_type=f32)
    ctx = ctxT.reshape(D, S).T.astype(bf16)                             # (S, D)
    attn = jnp.dot(ctx, wo[0], preferred_element_type=f32) + bo[0]
    x = x + attn

    # --------------------------- feed-forward (pre-LN) ------------------------
    h2 = _layernorm(x, ln2w[0], ln2b[0]).astype(bf16)
    f = jnp.dot(h2, w1[0], preferred_element_type=f32) + b1[0]
    f = _gelu_exact(f).astype(bf16)
    f = jnp.dot(f, w2[0], preferred_element_type=f32) + b2[0]
    out = x + f

    xres[...] = out
    o_ref[0] = out.astype(o_ref.dtype)


_STACK_KEYS = ('ln1_w', 'ln1_b', 'wq_t', 'bq_c', 'wk_t', 'bk_c', 'wv_t', 'bv_c',
               'wo_io', 'bo_r', 'ln2_w', 'ln2_b', 'w1_io', 'b1_r', 'w2_io', 'b2_r')


def _stack_layer_params(layers):
    """Stack per-layer params on a leading layer axis, in kernel-friendly layout."""
    bf16 = jnp.bfloat16

    def st(fn):
        return jnp.stack([fn(lp) for lp in layers], axis=0)

    return {
        'ln1_w': st(lambda lp: lp['ln1_w'].reshape(1, -1)),
        'ln1_b': st(lambda lp: lp['ln1_b'].reshape(1, -1)),
        'wq_t':  st(lambda lp: lp['wq'].T).astype(bf16),     # (L, D, D) out-major
        'bq_c':  st(lambda lp: lp['bq'].reshape(-1, 1)),     # (L, D, 1) column
        'wk_t':  st(lambda lp: lp['wk'].T).astype(bf16),
        'bk_c':  st(lambda lp: lp['bk'].reshape(-1, 1)),
        'wv_t':  st(lambda lp: lp['wv'].T).astype(bf16),
        'bv_c':  st(lambda lp: lp['bv'].reshape(-1, 1)),
        'wo_io': st(lambda lp: lp['wo']).astype(bf16),       # (L, D, D) in-major
        'bo_r':  st(lambda lp: lp['bo'].reshape(1, -1)),     # (L, 1, D) row
        'ln2_w': st(lambda lp: lp['ln2_w'].reshape(1, -1)),
        'ln2_b': st(lambda lp: lp['ln2_b'].reshape(1, -1)),
        'w1_io': st(lambda lp: lp['w1']).astype(bf16),       # (L, D, Hd)
        'b1_r':  st(lambda lp: lp['b1'].reshape(1, -1)),
        'w2_io': st(lambda lp: lp['w2']).astype(bf16),       # (L, Hd, D)
        'b2_r':  st(lambda lp: lp['b2'].reshape(1, -1)),
    }


def graphormer_stack_call(x, bias_bhss, emb_ln_w, emb_ln_b, stacked, num_heads):
    B, S, D = x.shape
    L = stacked['wq_t'].shape[0]
    head_dim = D // num_heads

    kernel = functools.partial(graphormer_stack_kernel,
                               num_heads=num_heads, head_dim=head_dim)

    def batch_spec(shape):           # varies with graph, constant across layers
        nd = len(shape)
        return pl.BlockSpec((1,) + tuple(shape[1:]),
                            lambda b, l, _nd=nd: (b,) + (0,) * (_nd - 1))

    def const_spec(shape):           # fully constant
        nd = len(shape)
        return pl.BlockSpec(tuple(shape), lambda b, l, _nd=nd: (0,) * _nd)

    def layer_spec(shape):           # streamed / prefetched per layer
        nd = len(shape)
        return pl.BlockSpec((1,) + tuple(shape[1:]),
                            lambda b, l, _nd=nd: (l,) + (0,) * (_nd - 1))

    weights = [stacked[k] for k in _STACK_KEYS]
    in_specs = [batch_spec(x.shape), batch_spec(bias_bhss.shape),
                const_spec(emb_ln_w.shape), const_spec(emb_ln_b.shape)]
    in_specs += [layer_spec(w.shape) for w in weights]

    return pl.pallas_call(
        kernel,
        out_shape=jax.ShapeDtypeStruct((B, S, D), jnp.float32),
        grid=(B, L),
        in_specs=in_specs,
        out_specs=pl.BlockSpec((1, S, D), lambda b, l: (b, 0, 0)),
        scratch_shapes=[pltpu.VMEM((S, D), jnp.float32)],
        compiler_params=pltpu.CompilerParams(
            dimension_semantics=("parallel", "arbitrary"),
            vmem_limit_bytes=64 * 1024 * 1024),
    )(x, bias_bhss, emb_ln_w, emb_ln_b, *weights)


# ----------------------------------------------------------------------------
# Kernel 2: LM head — LN(GELU(W1 x + b1)) @ W2 + learned bias, tiled over out_dim
# ----------------------------------------------------------------------------
def head_kernel(g_ref, w1, b1, lnw, lnb, w2, bias, o_ref):
    f32 = jnp.float32
    g = g_ref[...].astype(jnp.bfloat16)                                   # (B, D)
    h = jnp.dot(g, w1[...], preferred_element_type=f32) + b1[0]
    h = _gelu_exact(h)
    h = _layernorm(h, lnw[0], lnb[0]).astype(jnp.bfloat16)
    o_ref[...] = (jnp.dot(h, w2[...], preferred_element_type=f32)
                  + bias[0]).astype(o_ref.dtype)


def head_call(graph_rep, p, tile_n=512):
    B, D = graph_rep.shape
    out_dim = p['embed_out_w'].shape[1]
    tn = min(tile_n, out_dim)
    w1 = p['lm_w'].astype(jnp.bfloat16)
    w2 = p['embed_out_w'].astype(jnp.bfloat16)
    return pl.pallas_call(
        head_kernel,
        out_shape=jax.ShapeDtypeStruct((B, out_dim), jnp.float32),
        grid=(pl.cdiv(out_dim, tn),),
        in_specs=[
            pl.BlockSpec((B, D), lambda j: (0, 0)),
            pl.BlockSpec((D, D), lambda j: (0, 0)),
            pl.BlockSpec((1, D), lambda j: (0, 0)),
            pl.BlockSpec((1, D), lambda j: (0, 0)),
            pl.BlockSpec((1, D), lambda j: (0, 0)),
            pl.BlockSpec((D, tn), lambda j: (0, j)),
            pl.BlockSpec((1, tn), lambda j: (0, j)),
        ],
        out_specs=pl.BlockSpec((B, tn), lambda j: (0, j)),
        compiler_params=pltpu.CompilerParams(dimension_semantics=("parallel",)),
    )(graph_rep, w1, p['lm_b'], p['head_ln_w'], p['head_ln_b'], w2, p['lm_bias'])


# ----------------------------------------------------------------------------
# Full GraphormerEncoder forward (JAX glue + Pallas kernels)
# ----------------------------------------------------------------------------
def graphormer_forward(params, node_feat, in_degree, out_degree, attn_mask,
                       path_data, dist, *, num_heads, max_degree, num_spatial,
                       multi_hop_max_dist):
    B, N, D = node_feat.shape
    S = N + 1
    L = multi_hop_max_dist

    # DegreeEncoder (embedding gathers — glue)
    ind = jnp.clip(in_degree, 0, max_degree)
    outd = jnp.clip(out_degree, 0, max_degree)
    deg_emb = params['deg_in_table'][ind] + params['deg_out_table'][outd]   # (B,N,D)
    node_feat = node_feat + deg_emb

    # graph token + concat
    graph_token = jnp.broadcast_to(params['graph_token'][None], (B, 1, D))
    x = jnp.concatenate([graph_token, node_feat], axis=1)                   # (B,S,D)

    # PathEncoder — built directly head-major (B, H, N, N)
    edge_emb = params['path_table'].reshape(L, num_heads, -1)               # (L,H,E)
    sd = jnp.clip(dist, 1, L).astype(jnp.float32)                           # (B,N,N)
    path_enc = jnp.einsum('bijld,lhd->bhij', path_data, edge_emb) / sd[:, None, :, :]

    # SpatialEncoder — head-major
    sp_idx = jnp.clip(dist, -1, num_spatial) + 1
    spatial_enc = jnp.moveaxis(params['spatial_table'][sp_idx], -1, 1)      # (B,H,N,N)

    # assemble attention bias directly in (B, H, S, S) (keys on the lane dim)
    attn_bias = jnp.zeros((B, num_heads, S, S), jnp.float32)
    attn_bias = attn_bias.at[:, :, 1:, 1:].set(path_enc + spatial_enc)
    t = params['vd_token'].reshape(1, num_heads, 1)
    attn_bias = attn_bias.at[:, :, 1:, 0].add(t)
    attn_bias = attn_bias.at[:, :, 0, :].add(t)

    # fold the attention mask into the bias (finite -1e9 avoids NaN on masked rows)
    attn_bias = attn_bias + jnp.where(attn_mask[:, None, :, :] != 0.0, -1e9, 0.0)
    bias_bhss = attn_bias.astype(jnp.bfloat16)

    # fused [emb LayerNorm + all transformer layers] (Pallas)
    stacked = _stack_layer_params(params['layers'])
    x = graphormer_stack_call(x.astype(jnp.float32), bias_bhss,
                              params['emb_ln_w'], params['emb_ln_b'],
                              stacked, num_heads)

    # graph readout + LM head (Pallas)
    graph_rep = x[:, 0, :]
    return head_call(graph_rep, params)


# ----------------------------------------------------------------------------
# Deterministic parameter construction (shapes follow the torch __init__)
# ----------------------------------------------------------------------------
def init_params(key, D, Hd, out_dim, H, num_layers, max_degree, num_spatial,
                L, edge_dim):
    keys = iter(jax.random.split(key, 64))

    def rnd(shape, scale=0.1):
        return jax.random.normal(next(keys), shape, jnp.float32) * scale

    p = {}
    p['graph_token'] = rnd((1, D), 1.0)                          # Embedding(1, D)
    p['deg_in_table'] = rnd((max_degree + 1, D)).at[0].set(0.0)  # padding_idx=0
    p['deg_out_table'] = rnd((max_degree + 1, D)).at[0].set(0.0)
    p['path_table'] = rnd((L * H, edge_dim))                     # Embedding(L*H, edge_dim)
    p['spatial_table'] = rnd((num_spatial + 2, H)).at[0].set(0.0)
    p['vd_token'] = rnd((1, H))                                  # virtual distance
    p['emb_ln_w'] = jnp.ones((1, D), jnp.float32)
    p['emb_ln_b'] = jnp.zeros((1, D), jnp.float32)

    layers = []
    for _ in range(num_layers):
        layers.append(dict(
            ln1_w=jnp.ones((1, D), jnp.float32), ln1_b=jnp.zeros((1, D), jnp.float32),
            wq=rnd((D, D)), bq=rnd((1, D), 0.01),
            wk=rnd((D, D)), bk=rnd((1, D), 0.01),
            wv=rnd((D, D)), bv=rnd((1, D), 0.01),
            wo=rnd((D, D)), bo=rnd((1, D), 0.01),
            ln2_w=jnp.ones((1, D), jnp.float32), ln2_b=jnp.zeros((1, D), jnp.float32),
            w1=rnd((D, Hd)), b1=rnd((1, Hd), 0.01),
            w2=rnd((Hd, D)), b2=rnd((1, D), 0.01),
        ))
    p['layers'] = layers

    p['lm_w'] = rnd((D, D))
    p['lm_b'] = rnd((1, D), 0.01)
    p['head_ln_w'] = jnp.ones((1, D), jnp.float32)
    p['head_ln_b'] = jnp.zeros((1, D), jnp.float32)
    p['embed_out_w'] = rnd((D, out_dim))
    p['lm_bias'] = jnp.zeros((1, out_dim), jnp.float32)          # lm_output_learned_bias
    return p


# ----------------------------------------------------------------------------
if __name__ == "__main__":
    # small shapes consistent with the module
    B, N = 2, 8                      # graphs, max nodes  -> sequence S = N + 1 = 9
    D, HIDDEN, OUT = 32, 64, 8       # embedding_dim, hidden_dim, out_dim
    H = 4                            # num_heads
    L, EDGE = 5, 1                   # multi_hop_max_dist, edge_dim
    MAX_DEG, NUM_SPATIAL = 512, 511
    NUM_LAYERS = 2

    root = jax.random.PRNGKey(0)
    k_par, k_nf, k_id, k_od, k_pd, k_ds = jax.random.split(root, 6)

    params = init_params(k_par, D, HIDDEN, OUT, H, NUM_LAYERS,
                         MAX_DEG, NUM_SPATIAL, L, EDGE)

    node_feat = jax.random.normal(k_nf, (B, N, D), jnp.float32)
    in_degree = jax.random.randint(k_id, (B, N), 0, 10, jnp.int32)
    out_degree = jax.random.randint(k_od, (B, N), 0, 10, jnp.int32)
    attn_mask = jnp.zeros((B, N + 1, N + 1), jnp.float32)        # no padding mask
    path_data = jax.random.normal(k_pd, (B, N, N, L, EDGE), jnp.float32) * 0.1
    dist = jax.random.randint(k_ds, (B, N, N), -1, 8, jnp.int32)

    out = graphormer_forward(params, node_feat, in_degree, out_degree, attn_mask,
                             path_data, dist,
                             num_heads=H, max_degree=MAX_DEG,
                             num_spatial=NUM_SPATIAL, multi_hop_max_dist=L)
    out = jax.block_until_ready(out)
    assert out.shape == (B, OUT) and jnp.all(jnp.isfinite(out))
    print("KERNEL_OK")
</pallas_src>

<mosaic_0001>
module attributes {stable_mosaic.version = 11 : i64} {
  func.func @graphormer_stack_kernel(%arg0: i32, %arg1: i32, %arg2: memref<1x9x32xf32, #tpu.memory_space<vmem>>, %arg3: memref<1x4x9x9xbf16, #tpu.memory_space<vmem>>, %arg4: memref<1x32xf32, #tpu.memory_space<vmem>>, %arg5: memref<1x32xf32, #tpu.memory_space<vmem>>, %arg6: memref<1x1x32xf32, #tpu.memory_space<vmem>>, %arg7: memref<1x1x32xf32, #tpu.memory_space<vmem>>, %arg8: memref<1x32x32xbf16, #tpu.memory_space<vmem>>, %arg9: memref<1x32x1xf32, #tpu.memory_space<vmem>>, %arg10: memref<1x32x32xbf16, #tpu.memory_space<vmem>>, %arg11: memref<1x32x1xf32, #tpu.memory_space<vmem>>, %arg12: memref<1x32x32xbf16, #tpu.memory_space<vmem>>, %arg13: memref<1x32x1xf32, #tpu.memory_space<vmem>>, %arg14: memref<1x32x32xbf16, #tpu.memory_space<vmem>>, %arg15: memref<1x1x32xf32, #tpu.memory_space<vmem>>, %arg16: memref<1x1x32xf32, #tpu.memory_space<vmem>>, %arg17: memref<1x1x32xf32, #tpu.memory_space<vmem>>, %arg18: memref<1x32x64xbf16, #tpu.memory_space<vmem>>, %arg19: memref<1x1x64xf32, #tpu.memory_space<vmem>>, %arg20: memref<1x64x32xbf16, #tpu.memory_space<vmem>>, %arg21: memref<1x1x32xf32, #tpu.memory_space<vmem>>, %arg22: memref<1x9x32xf32, #tpu.memory_space<vmem>>, %arg23: memref<9x32xf32, #tpu.memory_space<vmem>>) attributes {dimension_semantics = [#tpu.dimension_semantics<parallel>, #tpu.dimension_semantics<arbitrary>], iteration_bounds = array<i64: 2, 2>, scalar_prefetch = 0 : i64, scratch_operands = 1 : i64, tpu.core_type = #tpu.core_type<tc>, window_params = [{transform_indices = @transform_0, window_bounds = array<i64: 1, 9, 32>}, {transform_indices = @transform_1, window_bounds = array<i64: 1, 4, 9, 9>}, {pipeline_mode = #tpu.pipeline_mode<synchronous>, transform_indices = @transform_2, window_bounds = array<i64: 1, 32>}, {pipeline_mode = #tpu.pipeline_mode<synchronous>, transform_indices = @transform_3, window_bounds = array<i64: 1, 32>}, {transform_indices = @transform_4, window_bounds = array<i64: 1, 1, 32>}, {transform_indices = @transform_5, window_bounds = array<i64: 1, 1, 32>}, {transform_indices = @transform_6, window_bounds = array<i64: 1, 32, 32>}, {transform_indices = @transform_7, window_bounds = array<i64: 1, 32, 1>}, {transform_indices = @transform_8, window_bounds = array<i64: 1, 32, 32>}, {transform_indices = @transform_9, window_bounds = array<i64: 1, 32, 1>}, {transform_indices = @transform_10, window_bounds = array<i64: 1, 32, 32>}, {transform_indices = @transform_11, window_bounds = array<i64: 1, 32, 1>}, {transform_indices = @transform_12, window_bounds = array<i64: 1, 32, 32>}, {transform_indices = @transform_13, window_bounds = array<i64: 1, 1, 32>}, {transform_indices = @transform_14, window_bounds = array<i64: 1, 1, 32>}, {transform_indices = @transform_15, window_bounds = array<i64: 1, 1, 32>}, {transform_indices = @transform_16, window_bounds = array<i64: 1, 32, 64>}, {transform_indices = @transform_17, window_bounds = array<i64: 1, 1, 64>}, {transform_indices = @transform_18, window_bounds = array<i64: 1, 64, 32>}, {transform_indices = @transform_19, window_bounds = array<i64: 1, 1, 32>}, {transform_indices = @transform_20, window_bounds = array<i64: 1, 9, 32>}]} {
    %c0_i32 = arith.constant 0 : i32
    %0 = arith.cmpi eq, %arg1, %c0_i32 : i32
    %1 = arith.extui %0 : i1 to i32
    %c0_i32_0 = arith.constant 0 : i32
    %2 = arith.cmpi ne, %1, %c0_i32_0 : i32
    scf.if %2 {
      %c0_82 = arith.constant 0 : index
      %c0_83 = arith.constant 0 : index
      %c0_84 = arith.constant 0 : index
      %144 = vector.load %arg2[%c0_82, %c0_83, %c0_84] : memref<1x9x32xf32, #tpu.memory_space<vmem>>, vector<1x9x32xf32>
      %145 = vector.shape_cast %144 : vector<1x9x32xf32> to vector<9x32xf32>
      %c0_85 = arith.constant 0 : index
      %c0_86 = arith.constant 0 : index
      %146 = vector.load %arg4[%c0_85, %c0_86] : memref<1x32xf32, #tpu.memory_space<vmem>>, vector<1x32xf32>
      %147 = vector.shape_cast %146 : vector<1x32xf32> to vector<32xf32>
      %c0_87 = arith.constant 0 : index
      %c0_88 = arith.constant 0 : index
      %148 = vector.load %arg5[%c0_87, %c0_88] : memref<1x32xf32, #tpu.memory_space<vmem>>, vector<1x32xf32>
      %149 = vector.shape_cast %148 : vector<1x32xf32> to vector<32xf32>
      %cst_89 = arith.constant dense<0.000000e+00> : vector<9xf32>
      %150 = vector.multi_reduction <add>, %145, %cst_89 [1] : vector<9x32xf32> to vector<9xf32>
      %151 = vector.shape_cast %150 : vector<9xf32> to vector<9x1xf32>
      %cst_90 = arith.constant 3.200000e+01 : f32
      %152 = vector.broadcast %cst_90 : f32 to vector<9x1xf32>
      %153 = arith.divf %151, %152 : vector<9x1xf32>
      %154 = vector.broadcast %153 : vector<9x1xf32> to vector<9x32xf32>
      %155 = arith.subf %145, %154 : vector<9x32xf32>
      %156 = arith.mulf %155, %155 : vector<9x32xf32>
      %cst_91 = arith.constant dense<0.000000e+00> : vector<9xf32>
      %157 = vector.multi_reduction <add>, %156, %cst_91 [1] : vector<9x32xf32> to vector<9xf32>
      %158 = vector.shape_cast %157 : vector<9xf32> to vector<9x1xf32>
      %cst_92 = arith.constant 3.200000e+01 : f32
      %159 = vector.broadcast %cst_92 : f32 to vector<9x1xf32>
      %160 = arith.divf %158, %159 : vector<9x1xf32>
      %161 = vector.broadcast %153 : vector<9x1xf32> to vector<9x32xf32>
      %162 = arith.subf %145, %161 : vector<9x32xf32>
      %cst_93 = arith.constant 9.99999974E-6 : f32
      %163 = vector.broadcast %cst_93 : f32 to vector<9x1xf32>
      %164 = arith.addf %160, %163 : vector<9x1xf32>
      %165 = math.rsqrt %164 : vector<9x1xf32>
      %166 = vector.broadcast %165 : vector<9x1xf32> to vector<9x32xf32>
      %167 = arith.mulf %162, %166 : vector<9x32xf32>
      %168 = vector.shape_cast %147 : vector<32xf32> to vector<1x32xf32>
      %169 = vector.broadcast %168 : vector<1x32xf32> to vector<9x32xf32>
      %170 = arith.mulf %167, %169 : vector<9x32xf32>
      %171 = vector.shape_cast %149 : vector<32xf32> to vector<1x32xf32>
      %172 = vector.broadcast %171 : vector<1x32xf32> to vector<9x32xf32>
      %173 = arith.addf %170, %172 : vector<9x32xf32>
      %c0_94 = arith.constant 0 : index
      %c0_95 = arith.constant 0 : index
      %174 = vector.load %arg23[%c0_94, %c0_95] : memref<9x32xf32, #tpu.memory_space<vmem>>, vector<9x32xf32>
      tpu.vector_store %arg23[%c0_94, %c0_95], %173 {strides = array<i32>} : memref<9x32xf32, #tpu.memory_space<vmem>>, vector<9x32xf32>,
    } else {
    }
    %c0 = arith.constant 0 : index
    %c0_1 = arith.constant 0 : index
    %3 = vector.load %arg23[%c0, %c0_1] : memref<9x32xf32, #tpu.memory_space<vmem>>, vector<9x32xf32>
    %c0_2 = arith.constant 0 : index
    %c0_3 = arith.constant 0 : index
    %c0_4 = arith.constant 0 : index
    %4 = vector.load %arg6[%c0_2, %c0_3, %c0_4] : memref<1x1x32xf32, #tpu.memory_space<vmem>>, vector<1x1x32xf32>
    %5 = vector.shape_cast %4 : vector<1x1x32xf32> to vector<1x32xf32>
    %c0_5 = arith.constant 0 : index
    %c0_6 = arith.constant 0 : index
    %c0_7 = arith.constant 0 : index
    %6 = vector.load %arg7[%c0_5, %c0_6, %c0_7] : memref<1x1x32xf32, #tpu.memory_space<vmem>>, vector<1x1x32xf32>
    %7 = vector.shape_cast %6 : vector<1x1x32xf32> to vector<1x32xf32>
    %cst = arith.constant dense<0.000000e+00> : vector<9xf32>
    %8 = vector.multi_reduction <add>, %3, %cst [1] : vector<9x32xf32> to vector<9xf32>
    %9 = vector.shape_cast %8 : vector<9xf32> to vector<9x1xf32>
    %cst_8 = arith.constant 3.200000e+01 : f32
    %10 = vector.broadcast %cst_8 : f32 to vector<9x1xf32>
    %11 = arith.divf %9, %10 : vector<9x1xf32>
    %12 = vector.broadcast %11 : vector<9x1xf32> to vector<9x32xf32>
    %13 = arith.subf %3, %12 : vector<9x32xf32>
    %14 = arith.mulf %13, %13 : vector<9x32xf32>
    %cst_9 = arith.constant dense<0.000000e+00> : vector<9xf32>
    %15 = vector.multi_reduction <add>, %14, %cst_9 [1] : vector<9x32xf32> to vector<9xf32>
    %16 = vector.shape_cast %15 : vector<9xf32> to vector<9x1xf32>
    %cst_10 = arith.constant 3.200000e+01 : f32
    %17 = vector.broadcast %cst_10 : f32 to vector<9x1xf32>
    %18 = arith.divf %16, %17 : vector<9x1xf32>
    %19 = vector.broadcast %11 : vector<9x1xf32> to vector<9x32xf32>
    %20 = arith.subf %3, %19 : vector<9x32xf32>
    %cst_11 = arith.constant 9.99999974E-6 : f32
    %21 = vector.broadcast %cst_11 : f32 to vector<9x1xf32>
    %22 = arith.addf %18, %21 : vector<9x1xf32>
    %23 = math.rsqrt %22 : vector<9x1xf32>
    %24 = vector.broadcast %23 : vector<9x1xf32> to vector<9x32xf32>
    %25 = arith.mulf %20, %24 : vector<9x32xf32>
    %26 = vector.broadcast %5 : vector<1x32xf32> to vector<9x32xf32>
    %27 = arith.mulf %25, %26 : vector<9x32xf32>
    %28 = vector.broadcast %7 : vector<1x32xf32> to vector<9x32xf32>
    %29 = arith.addf %27, %28 : vector<9x32xf32>
    %30 = arith.truncf %29 : vector<9x32xf32> to vector<9x32xbf16>
    %c0_12 = arith.constant 0 : index
    %c0_13 = arith.constant 0 : index
    %c0_14 = arith.constant 0 : index
    %31 = vector.load %arg8[%c0_12, %c0_13, %c0_14] : memref<1x32x32xbf16, #tpu.memory_space<vmem>>, vector<1x32x32xbf16>
    %32 = vector.shape_cast %31 : vector<1x32x32xbf16> to vector<32x32xbf16>
    %cst_15 = arith.constant dense<0.000000e+00> : vector<32x9xf32>
    %33 = tpu.matmul %32, %30, %cst_15 {dimension_numbers = #tpu.dot_dimension_numbers<[1], [1], [0], [0], [0, 0, 1, 0], [], []>} : vector<32x32xbf16>, vector<9x32xbf16>, vector<32x9xf32> -> vector<32x9xf32>
    %c0_16 = arith.constant 0 : index
    %c0_17 = arith.constant 0 : index
    %c0_18 = arith.constant 0 : index
    %34 = vector.load %arg9[%c0_16, %c0_17, %c0_18] : memref<1x32x1xf32, #tpu.memory_space<vmem>>, vector<1x32x1xf32>
    %35 = vector.shape_cast %34 : vector<1x32x1xf32> to vector<32x1xf32>
    %36 = vector.broadcast %35 : vector<32x1xf32> to vector<32x9xf32>
    %37 = arith.addf %33, %36 : vector<32x9xf32>
    %c0_19 = arith.constant 0 : index
    %c0_20 = arith.constant 0 : index
    %c0_21 = arith.constant 0 : index
    %38 = vector.load %arg10[%c0_19, %c0_20, %c0_21] : memref<1x32x32xbf16, #tpu.memory_space<vmem>>, vector<1x32x32xbf16>
    %39 = vector.shape_cast %38 : vector<1x32x32xbf16> to vector<32x32xbf16>
    %cst_22 = arith.constant dense<0.000000e+00> : vector<32x9xf32>
    %40 = tpu.matmul %39, %30, %cst_22 {dimension_numbers = #tpu.dot_dimension_numbers<[1], [1], [0], [0], [0, 0, 1, 0], [], []>} : vector<32x32xbf16>, vector<9x32xbf16>, vector<32x9xf32> -> vector<32x9xf32>
    %c0_23 = arith.constant 0 : index
    %c0_24 = arith.constant 0 : index
    %c0_25 = arith.constant 0 : index
    %41 = vector.load %arg11[%c0_23, %c0_24, %c0_25] : memref<1x32x1xf32, #tpu.memory_space<vmem>>, vector<1x32x1xf32>
    %42 = vector.shape_cast %41 : vector<1x32x1xf32> to vector<32x1xf32>
    %43 = vector.broadcast %42 : vector<32x1xf32> to vector<32x9xf32>
    %44 = arith.addf %40, %43 : vector<32x9xf32>
    %c0_26 = arith.constant 0 : index
    %c0_27 = arith.constant 0 : index
    %c0_28 = arith.constant 0 : index
    %45 = vector.load %arg12[%c0_26, %c0_27, %c0_28] : memref<1x32x32xbf16, #tpu.memory_space<vmem>>, vector<1x32x32xbf16>
    %46 = vector.shape_cast %45 : vector<1x32x32xbf16> to vector<32x32xbf16>
    %cst_29 = arith.constant dense<0.000000e+00> : vector<32x9xf32>
    %47 = tpu.matmul %46, %30, %cst_29 {dimension_numbers = #tpu.dot_dimension_numbers<[1], [1], [0], [0], [0, 0, 1, 0], [], []>} : vector<32x32xbf16>, vector<9x32xbf16>, vector<32x9xf32> -> vector<32x9xf32>
    %c0_30 = arith.constant 0 : index
    %c0_31 = arith.constant 0 : index
    %c0_32 = arith.constant 0 : index
    %48 = vector.load %arg13[%c0_30, %c0_31, %c0_32] : memref<1x32x1xf32, #tpu.memory_space<vmem>>, vector<1x32x1xf32>
    %49 = vector.shape_cast %48 : vector<1x32x1xf32> to vector<32x1xf32>
    %50 = vector.broadcast %49 : vector<32x1xf32> to vector<32x9xf32>
    %51 = arith.addf %47, %50 : vector<32x9xf32>
    %cst_33 = arith.constant 0.353553385 : f32
    %52 = vector.broadcast %cst_33 : f32 to vector<32x9xf32>
    %53 = arith.mulf %37, %52 : vector<32x9xf32>
    %54 = vector.shape_cast %53 : vector<32x9xf32> to vector<4x8x9xf32>
    %55 = tpu.transpose %54, [0, 2, 1] : vector<4x8x9xf32> -> vector<4x9x8xf32>
    %56 = arith.truncf %55 : vector<4x9x8xf32> to vector<4x9x8xbf16>
    %57 = vector.shape_cast %44 : vector<32x9xf32> to vector<4x8x9xf32>
    %58 = arith.truncf %57 : vector<4x8x9xf32> to vector<4x8x9xbf16>
    %59 = vector.shape_cast %51 : vector<32x9xf32> to vector<4x8x9xf32>
    %60 = arith.truncf %59 : vector<4x8x9xf32> to vector<4x8x9xbf16>
    %cst_34 = arith.constant dense<0.000000e+00> : vector<4x9x9xf32>
    %61 = tpu.matmul %56, %58, %cst_34 {dimension_numbers = #tpu.dot_dimension_numbers<[2], [1], [1], [2], [0, 0, 0, 1, 1, 2], [0], [0]>} : vector<4x9x8xbf16>, vector<4x8x9xbf16>, vector<4x9x9xf32> -> vector<4x9x9xf32>
    %c0_35 = arith.constant 0 : index
    %c0_36 = arith.constant 0 : index
    %c0_37 = arith.constant 0 : index
    %c0_38 = arith.constant 0 : index
    %62 = vector.load %arg3[%c0_35, %c0_36, %c0_37, %c0_38] : memref<1x4x9x9xbf16, #tpu.memory_space<vmem>>, vector<1x4x9x9xbf16>
    %63 = vector.shape_cast %62 : vector<1x4x9x9xbf16> to vector<4x9x9xbf16>
    %64 = arith.extf %63 : vector<4x9x9xbf16> to vector<4x9x9xf32>
    %65 = arith.addf %61, %64 : vector<4x9x9xf32>
    %cst_39 = arith.constant dense<0xFF800000> : vector<4x9xf32>
    %66 = vector.multi_reduction <maximumf>, %65, %cst_39 [2] : vector<4x9x9xf32> to vector<4x9xf32>
    %67 = vector.shape_cast %66 : vector<4x9xf32> to vector<4x9x1xf32>
    %68 = vector.broadcast %67 : vector<4x9x1xf32> to vector<4x9x9xf32>
    %69 = arith.subf %65, %68 : vector<4x9x9xf32>
    %70 = math.exp %69 : vector<4x9x9xf32>
    %cst_40 = arith.constant dense<0.000000e+00> : vector<4x9xf32>
    %71 = vector.multi_reduction <add>, %70, %cst_40 [2] : vector<4x9x9xf32> to vector<4x9xf32>
    %72 = vector.shape_cast %71 : vector<4x9xf32> to vector<4x9x1xf32>
    %73 = tpu.reciprocal %72 {approx = true} : vector<4x9x1xf32> -> vector<4x9x1xf32>
    %74 = vector.broadcast %73 : vector<4x9x1xf32> to vector<4x9x9xf32>
    %75 = arith.mulf %70, %74 : vector<4x9x9xf32>
    %76 = arith.truncf %75 : vector<4x9x9xf32> to vector<4x9x9xbf16>
    %cst_41 = arith.constant dense<0.000000e+00> : vector<4x8x9xf32>
    %77 = tpu.matmul %60, %76, %cst_41 {dimension_numbers = #tpu.dot_dimension_numbers<[2], [2], [1], [1], [0, 0, 0, 1, 1, 1], [0], [0]>} : vector<4x8x9xbf16>, vector<4x9x9xbf16>, vector<4x8x9xf32> -> vector<4x8x9xf32>
    %78 = vector.shape_cast %77 : vector<4x8x9xf32> to vector<32x9xf32>
    %79 = tpu.transpose %78, [1, 0] : vector<32x9xf32> -> vector<9x32xf32>
    %80 = arith.truncf %79 : vector<9x32xf32> to vector<9x32xbf16>
    %c0_42 = arith.constant 0 : index
    %c0_43 = arith.constant 0 : index
    %c0_44 = arith.constant 0 : index
    %81 = vector.load %arg14[%c0_42, %c0_43, %c0_44] : memref<1x32x32xbf16, #tpu.memory_space<vmem>>, vector<1x32x32xbf16>
    %82 = vector.shape_cast %81 : vector<1x32x32xbf16> to vector<32x32xbf16>
    %cst_45 = arith.constant dense<0.000000e+00> : vector<9x32xf32>
    %83 = tpu.matmul %80, %82, %cst_45 {dimension_numbers = #tpu.dot_dimension_numbers<[1], [0], [0], [1], [0, 0, 1, 1], [], []>} : vector<9x32xbf16>, vector<32x32xbf16>, vector<9x32xf32> -> vector<9x32xf32>
    %c0_46 = arith.constant 0 : index
    %c0_47 = arith.constant 0 : index
    %c0_48 = arith.constant 0 : index
    %84 = vector.load %arg15[%c0_46, %c0_47, %c0_48] : memref<1x1x32xf32, #tpu.memory_space<vmem>>, vector<1x1x32xf32>
    %85 = vector.shape_cast %84 : vector<1x1x32xf32> to vector<1x32xf32>
    %86 = vector.broadcast %85 : vector<1x32xf32> to vector<9x32xf32>
    %87 = arith.addf %83, %86 : vector<9x32xf32>
    %88 = arith.addf %3, %87 : vector<9x32xf32>
    %c0_49 = arith.constant 0 : index
    %c0_50 = arith.constant 0 : index
    %c0_51 = arith.constant 0 : index
    %89 = vector.load %arg16[%c0_49, %c0_50, %c0_51] : memref<1x1x32xf32, #tpu.memory_space<vmem>>, vector<1x1x32xf32>
    %90 = vector.shape_cast %89 : vector<1x1x32xf32> to vector<1x32xf32>
    %c0_52 = arith.constant 0 : index
    %c0_53 = arith.constant 0 : index
    %c0_54 = arith.constant 0 : index
    %91 = vector.load %arg17[%c0_52, %c0_53, %c0_54] : memref<1x1x32xf32, #tpu.memory_space<vmem>>, vector<1x1x32xf32>
    %92 = vector.shape_cast %91 : vector<1x1x32xf32> to vector<1x32xf32>
    %cst_55 = arith.constant dense<0.000000e+00> : vector<9xf32>
    %93 = vector.multi_reduction <add>, %88, %cst_55 [1] : vector<9x32xf32> to vector<9xf32>
    %94 = vector.shape_cast %93 : vector<9xf32> to vector<9x1xf32>
    %cst_56 = arith.constant 3.200000e+01 : f32
    %95 = vector.broadcast %cst_56 : f32 to vector<9x1xf32>
    %96 = arith.divf %94, %95 : vector<9x1xf32>
    %97 = vector.broadcast %96 : vector<9x1xf32> to vector<9x32xf32>
    %98 = arith.subf %88, %97 : vector<9x32xf32>
    %99 = arith.mulf %98, %98 : vector<9x32xf32>
    %cst_57 = arith.constant dense<0.000000e+00> : vector<9xf32>
    %100 = vector.multi_reduction <add>, %99, %cst_57 [1] : vector<9x32xf32> to vector<9xf32>
    %101 = vector.shape_cast %100 : vector<9xf32> to vector<9x1xf32>
    %cst_58 = arith.constant 3.200000e+01 : f32
    %102 = vector.broadcast %cst_58 : f32 to vector<9x1xf32>
    %103 = arith.divf %101, %102 : vector<9x1xf32>
    %104 = vector.broadcast %96 : vector<9x1xf32> to vector<9x32xf32>
    %105 = arith.subf %88, %104 : vector<9x32xf32>
    %cst_59 = arith.constant 9.99999974E-6 : f32
    %106 = vector.broadcast %cst_59 : f32 to vector<9x1xf32>
    %107 = arith.addf %103, %106 : vector<9x1xf32>
    %108 = math.rsqrt %107 : vector<9x1xf32>
    %109 = vector.broadcast %108 : vector<9x1xf32> to vector<9x32xf32>
    %110 = arith.mulf %105, %109 : vector<9x32xf32>
    %111 = vector.broadcast %90 : vector<1x32xf32> to vector<9x32xf32>
    %112 = arith.mulf %110, %111 : vector<9x32xf32>
    %113 = vector.broadcast %92 : vector<1x32xf32> to vector<9x32xf32>
    %114 = arith.addf %112, %113 : vector<9x32xf32>
    %115 = arith.truncf %114 : vector<9x32xf32> to vector<9x32xbf16>
    %c0_60 = arith.constant 0 : index
    %c0_61 = arith.constant 0 : index
    %c0_62 = arith.constant 0 : index
    %116 = vector.load %arg18[%c0_60, %c0_61, %c0_62] : memref<1x32x64xbf16, #tpu.memory_space<vmem>>, vector<1x32x64xbf16>
    %117 = vector.shape_cast %116 : vector<1x32x64xbf16> to vector<32x64xbf16>
    %cst_63 = arith.constant dense<0.000000e+00> : vector<9x64xf32>
    %118 = tpu.matmul %115, %117, %cst_63 {dimension_numbers = #tpu.dot_dimension_numbers<[1], [0], [0], [1], [0, 0, 1, 1], [], []>} : vector<9x32xbf16>, vector<32x64xbf16>, vector<9x64xf32> -> vector<9x64xf32>
    %c0_64 = arith.constant 0 : index
    %c0_65 = arith.constant 0 : index
    %c0_66 = arith.constant 0 : index
    %119 = vector.load %arg19[%c0_64, %c0_65, %c0_66] : memref<1x1x64xf32, #tpu.memory_space<vmem>>, vector<1x1x64xf32>
    %120 = vector.shape_cast %119 : vector<1x1x64xf32> to vector<1x64xf32>
    %121 = vector.broadcast %120 : vector<1x64xf32> to vector<9x64xf32>
    %122 = arith.addf %118, %121 : vector<9x64xf32>
    %cst_67 = arith.constant 5.000000e-01 : f32
    %123 = vector.broadcast %cst_67 : f32 to vector<9x64xf32>
    %124 = arith.mulf %123, %122 : vector<9x64xf32>
    %cst_68 = arith.constant 1.41421354 : f32
    %125 = vector.broadcast %cst_68 : f32 to vector<9x64xf32>
    %126 = arith.divf %122, %125 : vector<9x64xf32>
    %127 = math.erf %126 : vector<9x64xf32>
    %cst_69 = arith.constant 1.000000e+00 : f32
    %128 = vector.broadcast %cst_69 : f32 to vector<9x64xf32>
    %129 = arith.addf %128, %127 : vector<9x64xf32>
    %130 = arith.mulf %124, %129 : vector<9x64xf32>
    %131 = arith.truncf %130 : vector<9x64xf32> to vector<9x64xbf16>
    %c0_70 = arith.constant 0 : index
    %c0_71 = arith.constant 0 : index
    %c0_72 = arith.constant 0 : index
    %132 = vector.load %arg20[%c0_70, %c0_71, %c0_72] : memref<1x64x32xbf16, #tpu.memory_space<vmem>>, vector<1x64x32xbf16>
    %133 = vector.shape_cast %132 : vector<1x64x32xbf16> to vector<64x32xbf16>
    %cst_73 = arith.constant dense<0.000000e+00> : vector<9x32xf32>
    %134 = tpu.matmul %131, %133, %cst_73 {dimension_numbers = #tpu.dot_dimension_numbers<[1], [0], [0], [1], [0, 0, 1, 1], [], []>} : vector<9x64xbf16>, vector<64x32xbf16>, vector<9x32xf32> -> vector<9x32xf32>
    %c0_74 = arith.constant 0 : index
    %c0_75 = arith.constant 0 : index
    %c0_76 = arith.constant 0 : index
    %135 = vector.load %arg21[%c0_74, %c0_75, %c0_76] : memref<1x1x32xf32, #tpu.memory_space<vmem>>, vector<1x1x32xf32>
    %136 = vector.shape_cast %135 : vector<1x1x32xf32> to vector<1x32xf32>
    %137 = vector.broadcast %136 : vector<1x32xf32> to vector<9x32xf32>
    %138 = arith.addf %134, %137 : vector<9x32xf32>
    %139 = arith.addf %88, %138 : vector<9x32xf32>
    %c0_77 = arith.constant 0 : index
    %c0_78 = arith.constant 0 : index
    %140 = vector.load %arg23[%c0_77, %c0_78] : memref<9x32xf32, #tpu.memory_space<vmem>>, vector<9x32xf32>
    tpu.vector_store %arg23[%c0_77, %c0_78], %139 {strides = array<i32>} : memref<9x32xf32, #tpu.memory_space<vmem>>, vector<9x32xf32>,
    %c0_79 = arith.constant 0 : index
    %c0_80 = arith.constant 0 : index
    %c0_81 = arith.constant 0 : index
    %141 = vector.load %arg22[%c0_79, %c0_80, %c0_81] : memref<1x9x32xf32, #tpu.memory_space<vmem>>, vector<1x9x32xf32>
    %142 = vector.shape_cast %141 : vector<1x9x32xf32> to vector<9x32xf32>
    %143 = vector.shape_cast %139 : vector<9x32xf32> to vector<1x9x32xf32>
    tpu.vector_store %arg22[%c0_79, %c0_80, %c0_81], %143 {strides = array<i32>} : memref<1x9x32xf32, #tpu.memory_space<vmem>>, vector<1x9x32xf32>,
    return
  }
  func.func @transform_0(%arg0: i32, %arg1: i32) -> (i32, i32, i32) {
    %c0_i32 = arith.constant 0 : i32
    %c0_i32_0 = arith.constant 0 : i32
    %c0_i32_1 = arith.constant 0 : i32
    return %arg0, %c0_i32, %c0_i32_0 : i32, i32, i32
  }
  func.func @transform_1(%arg0: i32, %arg1: i32) -> (i32, i32, i32, i32) {
    %c0_i32 = arith.constant 0 : i32
    %c0_i32_0 = arith.constant 0 : i32
    %c0_i32_1 = arith.constant 0 : i32
    %c0_i32_2 = arith.constant 0 : i32
    return %arg0, %c0_i32, %c0_i32_0, %c0_i32_1 : i32, i32, i32, i32
  }
  func.func @transform_2(%arg0: i32, %arg1: i32) -> (i32, i32) {
    %c0_i32 = arith.constant 0 : i32
    %c0_i32_0 = arith.constant 0 : i32
    %c0_i32_1 = arith.constant 0 : i32
    return %c0_i32, %c0_i32_0 : i32, i32
  }
  func.func @transform_3(%arg0: i32, %arg1: i32) -> (i32, i32) {
    %c0_i32 = arith.constant 0 : i32
    %c0_i32_0 = arith.constant 0 : i32
    %c0_i32_1 = arith.constant 0 : i32
    return %c0_i32, %c0_i32_0 : i32, i32
  }
  func.func @transform_4(%arg0: i32, %arg1: i32) -> (i32, i32, i32) {
    %c0_i32 = arith.constant 0 : i32
    %c0_i32_0 = arith.constant 0 : i32
    %c0_i32_1 = arith.constant 0 : i32
    return %arg1, %c0_i32, %c0_i32_0 : i32, i32, i32
  }
  func.func @transform_5(%arg0: i32, %arg1: i32) -> (i32, i32, i32) {
    %c0_i32 = arith.constant 0 : i32
    %c0_i32_0 = arith.constant 0 : i32
    %c0_i32_1 = arith.constant 0 : i32
    return %arg1, %c0_i32, %c0_i32_0 : i32, i32, i32
  }
  func.func @transform_6(%arg0: i32, %arg1: i32) -> (i32, i32, i32) {
    %c0_i32 = arith.constant 0 : i32
    %c0_i32_0 = arith.constant 0 : i32
    %c0_i32_1 = arith.constant 0 : i32
    return %arg1, %c0_i32, %c0_i32_0 : i32, i32, i32
  }
  func.func @transform_7(%arg0: i32, %arg1: i32) -> (i32, i32, i32) {
    %c0_i32 = arith.constant 0 : i32
    %c0_i32_0 = arith.constant 0 : i32
    %c0_i32_1 = arith.constant 0 : i32
    return %arg1, %c0_i32, %c0_i32_0 : i32, i32, i32
  }
  func.func @transform_8(%arg0: i32, %arg1: i32) -> (i32, i32, i32) {
    %c0_i32 = arith.constant 0 : i32
    %c0_i32_0 = arith.constant 0 : i32
    %c0_i32_1 = arith.constant 0 : i32
    return %arg1, %c0_i32, %c0_i32_0 : i32, i32, i32
  }
  func.func @transform_9(%arg0: i32, %arg1: i32) -> (i32, i32, i32) {
    %c0_i32 = arith.constant 0 : i32
    %c0_i32_0 = arith.constant 0 : i32
    %c0_i32_1 = arith.constant 0 : i32
    return %arg1, %c0_i32, %c0_i32_0 : i32, i32, i32
  }
  func.func @transform_10(%arg0: i32, %arg1: i32) -> (i32, i32, i32) {
    %c0_i32 = arith.constant 0 : i32
    %c0_i32_0 = arith.constant 0 : i32
    %c0_i32_1 = arith.constant 0 : i32
    return %arg1, %c0_i32, %c0_i32_0 : i32, i32, i32
  }
  func.func @transform_11(%arg0: i32, %arg1: i32) -> (i32, i32, i32) {
    %c0_i32 = arith.constant 0 : i32
    %c0_i32_0 = arith.constant 0 : i32
    %c0_i32_1 = arith.constant 0 : i32
    return %arg1, %c0_i32, %c0_i32_0 : i32, i32, i32
  }
  func.func @transform_12(%arg0: i32, %arg1: i32) -> (i32, i32, i32) {
    %c0_i32 = arith.constant 0 : i32
    %c0_i32_0 = arith.constant 0 : i32
    %c0_i32_1 = arith.constant 0 : i32
    return %arg1, %c0_i32, %c0_i32_0 : i32, i32, i32
  }
  func.func @transform_13(%arg0: i32, %arg1: i32) -> (i32, i32, i32) {
    %c0_i32 = arith.constant 0 : i32
    %c0_i32_0 = arith.constant 0 : i32
    %c0_i32_1 = arith.constant 0 : i32
    return %arg1, %c0_i32, %c0_i32_0 : i32, i32, i32
  }
  func.func @transform_14(%arg0: i32, %arg1: i32) -> (i32, i32, i32) {
    %c0_i32 = arith.constant 0 : i32
    %c0_i32_0 = arith.constant 0 : i32
    %c0_i32_1 = arith.constant 0 : i32
    return %arg1, %c0_i32, %c0_i32_0 : i32, i32, i32
  }
  func.func @transform_15(%arg0: i32, %arg1: i32) -> (i32, i32, i32) {
    %c0_i32 = arith.constant 0 : i32
    %c0_i32_0 = arith.constant 0 : i32
    %c0_i32_1 = arith.constant 0 : i32
    return %arg1, %c0_i32, %c0_i32_0 : i32, i32, i32
  }
  func.func @transform_16(%arg0: i32, %arg1: i32) -> (i32, i32, i32) {
    %c0_i32 = arith.constant 0 : i32
    %c0_i32_0 = arith.constant 0 : i32
    %c0_i32_1 = arith.constant 0 : i32
    return %arg1, %c0_i32, %c0_i32_0 : i32, i32, i32
  }
  func.func @transform_17(%arg0: i32, %arg1: i32) -> (i32, i32, i32) {
    %c0_i32 = arith.constant 0 : i32
    %c0_i32_0 = arith.constant 0 : i32
    %c0_i32_1 = arith.constant 0 : i32
    return %arg1, %c0_i32, %c0_i32_0 : i32, i32, i32
  }
  func.func @transform_18(%arg0: i32, %arg1: i32) -> (i32, i32, i32) {
    %c0_i32 = arith.constant 0 : i32
    %c0_i32_0 = arith.constant 0 : i32
    %c0_i32_1 = arith.constant 0 : i32
    return %arg1, %c0_i32, %c0_i32_0 : i32, i32, i32
  }
  func.func @transform_19(%arg0: i32, %arg1: i32) -> (i32, i32, i32) {
    %c0_i32 = arith.constant 0 : i32
    %c0_i32_0 = arith.constant 0 : i32
    %c0_i32_1 = arith.constant 0 : i32
    return %arg1, %c0_i32, %c0_i32_0 : i32, i32, i32
  }
  func.func @transform_20(%arg0: i32, %arg1: i32) -> (i32, i32, i32) {
    %c0_i32 = arith.constant 0 : i32
    %c0_i32_0 = arith.constant 0 : i32
    %c0_i32_1 = arith.constant 0 : i32
    return %arg0, %c0_i32, %c0_i32_0 : i32, i32, i32
  }
}

</mosaic_0001>

<llo_original>
// kernel: tpu_custom_call.1
$region0: #{tpu_custom_call.1}
  #allocation0 [shape = 'u32[]', space=smem, size = 0x4, offset = 0x4, fixed_abs, tag = 'smem constant byte address 0x4 - core index']
  #allocation1 [shape = 'u32[144,128]{1,0:T(1,128)}', space=vmem, size = 0x12000, scoped, tag = 'internal scratch']
  #allocation2 [shape = 'f32[9,32]{1,0:T(8,128)}', space=vmem, size = 0x2000, scoped, tag = 'scratch operand']
  %s0 = inlined_call_operand.hbm [shape: f32[2,9,32], index: 0, kind: input, shape index: {}]
  %s1 = inlined_call_operand.hbm [shape: bf16[2,4,9,9], index: 1, kind: input, shape index: {}]
  %s2 = inlined_call_operand.hbm [shape: f32[1,32], index: 2, kind: input, shape index: {}]
  %s3 = inlined_call_operand.hbm [shape: f32[1,32], index: 3, kind: input, shape index: {}]
  %s4 = inlined_call_operand.hbm [shape: f32[2,1,32], index: 4, kind: input, shape index: {}]
  %s5 = inlined_call_operand.hbm [shape: f32[2,1,32], index: 5, kind: input, shape index: {}]
  %s6 = inlined_call_operand.hbm [shape: bf16[2,32,32], index: 6, kind: input, shape index: {}]
  %s7 = inlined_call_operand.hbm [shape: f32[2,32,1], index: 7, kind: input, shape index: {}]
  %s8 = inlined_call_operand.hbm [shape: bf16[2,32,32], index: 8, kind: input, shape index: {}]
  %s9 = inlined_call_operand.hbm [shape: f32[2,32,1], index: 9, kind: input, shape index: {}]
  %s10 = inlined_call_operand.hbm [shape: bf16[2,32,32], index: 10, kind: input, shape index: {}]
  %s11 = inlined_call_operand.hbm [shape: f32[2,32,1], index: 11, kind: input, shape index: {}]
  %s12 = inlined_call_operand.hbm [shape: bf16[2,32,32], index: 12, kind: input, shape index: {}]
  %s13 = inlined_call_operand.hbm [shape: f32[2,1,32], index: 13, kind: input, shape index: {}]
  %s14 = inlined_call_operand.hbm [shape: f32[2,1,32], index: 14, kind: input, shape index: {}]
  %s15 = inlined_call_operand.hbm [shape: f32[2,1,32], index: 15, kind: input, shape index: {}]
  %s16 = inlined_call_operand.hbm [shape: bf16[2,32,64], index: 16, kind: input, shape index: {}]
  %s17 = inlined_call_operand.hbm [shape: f32[2,1,64], index: 17, kind: input, shape index: {}]
  %s18 = inlined_call_operand.hbm [shape: bf16[2,64,32], index: 18, kind: input, shape index: {}]
  %s19 = inlined_call_operand.hbm [shape: f32[2,1,32], index: 19, kind: input, shape index: {}]
  %s20 = inlined_call_operand.hbm [shape: f32[2,9,32], index: 20, kind: output, shape index: {}]
  %s21 = sld [smem:[#allocation0]]
  $region197: #{tpu_custom_call.1} parent=0
    _
  %s23 = ssub.s32 1, %s21
  %s24 = scalar_select 0, %s23, %s21
  $region1: #{tpu_custom_call.1} parent=0
    #allocation3 [shape = 'u8[16384]{0}', space=vmem, size = 0x4000, scoped, tag = 'input window, operand 0']
    #allocation4 [shape = 's32[2]{0}', space=sflag, size = 0x8, scoped, tag = 'scoped memory for tpu_custom_call.1']
    #allocation5 [shape = 's32[2]{0}', space=sflag, size = 0x8, scoped, tag = 'scoped memory for tpu_custom_call.1']
    #allocation6 [shape = 'u8[32768]{0}', space=vmem, size = 0x8000, scoped, tag = 'input window, operand 1']
    #allocation7 [shape = 's32[2]{0}', space=sflag, size = 0x8, scoped, tag = 'scoped memory for tpu_custom_call.1']
    #allocation8 [shape = 'u8[512]{0}', space=vmem, size = 0x400, scoped, tag = 'input window, operand 2, single buffered']
    #allocation9 [shape = 'u8[512]{0}', space=vmem, size = 0x400, scoped, tag = 'input window, operand 3, single buffered']
    #allocation10 [shape = 's32[1]{0}', space=sflag, size = 0x4, scoped, tag = 'scoped memory for tpu_custom_call.1']
    #allocation11 [shape = 'u8[1024]{0}', space=vmem, size = 0x400, scoped, tag = 'input window, operand 4']
    #allocation12 [shape = 'u8[1024]{0}', space=vmem, size = 0x400, scoped, tag = 'input window, operand 5']
    #allocation13 [shape = 'u8[16384]{0}', space=vmem, size = 0x4000, scoped, tag = 'input window, operand 6']
    #allocation14 [shape = 'u8[32768]{0}', space=vmem, size = 0x8000, scoped, tag = 'input window, operand 7']
    #allocation15 [shape = 'u8[16384]{0}', space=vmem, size = 0x4000, scoped, tag = 'input window, operand 8']
    #allocation16 [shape = 'u8[32768]{0}', space=vmem, size = 0x8000, scoped, tag = 'input window, operand 9']
    #allocation17 [shape = 'u8[16384]{0}', space=vmem, size = 0x4000, scoped, tag = 'input window, operand 10']
    #allocation18 [shape = 'u8[32768]{0}', space=vmem, size = 0x8000, scoped, tag = 'input window, operand 11']
    #allocation19 [shape = 'u8[16384]{0}', space=vmem, size = 0x4000, scoped, tag = 'input window, operand 12']
    #allocation20 [shape = 'u8[1024]{0}', space=vmem, size = 0x400, scoped, tag = 'input window, operand 13']
    #allocation21 [shape = 'u8[1024]{0}', space=vmem, size = 0x400, scoped, tag = 'input window, operand 14']
    #allocation22 [shape = 'u8[1024]{0}', space=vmem, size = 0x400, scoped, tag = 'input window, operand 15']
    #allocation23 [shape = 'u8[16384]{0}', space=vmem, size = 0x4000, scoped, tag = 'input window, operand 16']
    #allocation24 [shape = 'u8[1024]{0}', space=vmem, size = 0x400, scoped, tag = 'input window, operand 17']
    #allocation25 [shape = 'u8[32768]{0}', space=vmem, size = 0x8000, scoped, tag = 'input window, operand 18']
    #allocation26 [shape = 'u8[1024]{0}', space=vmem, size = 0x400, scoped, tag = 'input window, operand 19']
    #allocation27 [shape = 'u8[16384]{0}', space=vmem, size = 0x4000, scoped, tag = 'output window, operand 0']
    %25 = vsyncpa [#allocation4], 0
    %s26 = scalar_lea.sflag [#allocation4], 1
    %27 = vsyncpa %s26, 0
    %28 = vsyncpa [#allocation7], 0
    %s29 = scalar_lea.sflag [#allocation7], 1
    %30 = vsyncpa %s29, 0
    %31 = vsyncpa [#allocation10], 0
    %32 = vsyncpa [#allocation5], 0
    %s33 = scalar_lea.sflag [#allocation5], 1
    %34 = vsyncpa %s33, 0
    loop: start=0, step=1, limit=6
    $region2: #{tpu_custom_call.1} parent=1 // loop_pre_header
      _
    $region3: #{tpu_custom_call.1} parent=1 // loop_header
      %s36 = sphi 0, %s40
      %p37 = scmp.ge.s32.totalorder %s36, 6
      %s43 = sphi 0, %s55
      %s44 = sphi 0, %s51
      %s45 = sphi 0, %s43
      %s46 = sphi 0, %s44
      %s47 = sphi 0, %s45
      %s48 = sphi 0, %s46
      %s58 = sphi 0, %s60
      %s61 = sphi 0, %s58
      %s62 = sphi 0, %s61
      %s78 = sphi 0, %s62
      %s84 = sphi 0, %s86
      %s87 = sphi 0, %s84
      %s88 = sphi 0, %s87
      %s104 = sphi 0, %s88
      %s108 = sphi 0, %s108
      %s110 = sphi 0, %s108
      %s111 = sphi 0, %s110
      %s125 = sphi 0, %s111
      %s129 = sphi 0, %s129
      %s131 = sphi 0, %s129
      %s132 = sphi 0, %s131
      %s146 = sphi 0, %s132
      %s152 = sphi 0, %s154
      %s155 = sphi 0, %s152
      %s156 = sphi 0, %s155
      %s172 = sphi 0, %s156
      %s178 = sphi 0, %s180
      %s181 = sphi 0, %s178
      %s182 = sphi 0, %s181
      %s198 = sphi 0, %s182
      %s204 = sphi 0, %s206
      %s207 = sphi 0, %s204
      %s208 = sphi 0, %s207
      %s224 = sphi 0, %s208
      %s230 = sphi 0, %s232
      %s233 = sphi 0, %s230
      %s234 = sphi 0, %s233
      %s250 = sphi 0, %s234
      %s256 = sphi 0, %s258
      %s259 = sphi 0, %s256
      %s260 = sphi 0, %s259
      %s276 = sphi 0, %s260
      %s282 = sphi 0, %s284
      %s285 = sphi 0, %s282
      %s286 = sphi 0, %s285
      %s302 = sphi 0, %s286
      %s308 = sphi 0, %s310
      %s311 = sphi 0, %s308
      %s312 = sphi 0, %s311
      %s328 = sphi 0, %s312
      %s334 = sphi 0, %s336
      %s337 = sphi 0, %s334
      %s338 = sphi 0, %s337
      %s354 = sphi 0, %s338
      %s360 = sphi 0, %s362
      %s363 = sphi 0, %s360
      %s364 = sphi 0, %s363
      %s380 = sphi 0, %s364
      %s386 = sphi 0, %s388
      %s389 = sphi 0, %s386
      %s390 = sphi 0, %s389
      %s406 = sphi 0, %s390
      %s412 = sphi 0, %s414
      %s415 = sphi 0, %s412
      %s416 = sphi 0, %s415
      %s432 = sphi 0, %s416
      %s438 = sphi 0, %s440
      %s441 = sphi 0, %s438
      %s442 = sphi 0, %s441
      %s458 = sphi 0, %s442
      %s464 = sphi 0, %s466
      %s467 = sphi 0, %s464
      %s468 = sphi 0, %s467
      %s484 = sphi 0, %s468
      %s490 = sphi 0, %s492
      %s493 = sphi 0, %s490
      %s494 = sphi 0, %s493
      %s510 = sphi 0, %s494
      %s516 = sphi 0, %s518
      %s519 = sphi 0, %s516
      %s520 = sphi 0, %s519
      %s536 = sphi 0, %s520
      %s542 = sphi 0, %s544
      %s545 = sphi 0, %s542
      %s546 = sphi 0, %s545
      %s562 = sphi 0, %s546
      %s568 = sphi 0, %s570
      %s571 = sphi 0, %s568
      %s572 = sphi 0, %s571
      %s588 = sphi 0, %s572
    $region4: #{tpu_custom_call.1} parent=1 // loop_header_branch
      %39 = sbr.rel (%p37) target = $region8
    $region5: #{tpu_custom_call.1} parent=1 // loop_body
      %s41 = ssub.s32 %s36, 1
      %s42 = ssub.s32 %s36, 2
      %s49 = sadd.s32 1, %s44
      %p50 = scmp.ge.s32.totalorder %s49, 2
      %s51 = scalar_select %p50, 0, %s49
      %s52 = sadd.s32 1, %s43
      %s53 = scalar_select %p50, %s52, %s43
      %p54 = scmp.ge.s32.totalorder %s53, 2
      %s55 = scalar_select %p54, 0, %s53
      %s56 = ssub.s32 %s43, %s55
      %p57 = scmp.eq.s32.totalorder %s56, 0
      %s59 = sadd.s32 %s58, 1
      %s60 = scalar_select %p57, %s58, %s59
      %p63 = pneg %p57
      %p64 = scmp.eq.s32.totalorder %s36, 3
      %p65 = por %p63, %p64
      %p66 = scmp.ne.s32.totalorder %s58, %s61
      %p67 = scmp.eq.s32.totalorder %s36, 0
      %p68 = por %p66, %p67
      %p69 = scmp.ne.s32.totalorder %s58, %s61
      %p70 = scmp.eq.s32.totalorder %s41, 3
      %p71 = por %p69, %p70
      %p72 = scmp.ne.s32.totalorder %s61, %s62
      %p73 = scmp.eq.s32.totalorder %s41, 0
      %p74 = por %p72, %p73
      %p75 = scmp.ne.s32.totalorder %s61, %s62
      %p76 = scmp.eq.s32.totalorder %s42, 3
      %p77 = por %p75, %p76
      %p79 = scmp.ne.s32.totalorder %s62, %s78
      %p80 = scmp.eq.s32.totalorder %s42, 0
      %p81 = por %p79, %p80
      %s82 = ssub.s32 %s43, %s55
      %p83 = scmp.eq.s32.totalorder %s82, 0
      %s85 = sadd.s32 %s84, 1
      %s86 = scalar_select %p83, %s84, %s85
      %p89 = pneg %p83
      %p90 = scmp.eq.s32.totalorder %s36, 3
      %p91 = por %p89, %p90
      %p92 = scmp.ne.s32.totalorder %s84, %s87
      %p93 = scmp.eq.s32.totalorder %s36, 0
      %p94 = por %p92, %p93
      %p95 = scmp.ne.s32.totalorder %s84, %s87
      %p96 = scmp.eq.s32.totalorder %s41, 3
      %p97 = por %p95, %p96
      %p98 = scmp.ne.s32.totalorder %s87, %s88
      %p99 = scmp.eq.s32.totalorder %s41, 0
      %p100 = por %p98, %p99
      %p101 = scmp.ne.s32.totalorder %s87, %s88
      %p102 = scmp.eq.s32.totalorder %s42, 3
      %p103 = por %p101, %p102
      %p105 = scmp.ne.s32.totalorder %s88, %s104
      %p106 = scmp.eq.s32.totalorder %s42, 0
      %p107 = por %p105, %p106
      %s109 = sadd.s32 %s108, 1
      %p112 = scmp.eq.s32.totalorder %s36, 3
      %p113 = scmp.ne.s32.totalorder %s108, %s110
      %p114 = scmp.eq.s32.totalorder %s36, 0
      %p115 = por %p113, %p114
      %p116 = scmp.ne.s32.totalorder %s108, %s110
      %p117 = scmp.eq.s32.totalorder %s41, 3
      %p118 = por %p116, %p117
      %p119 = scmp.ne.s32.totalorder %s110, %s111
      %p120 = scmp.eq.s32.totalorder %s41, 0
      %p121 = por %p119, %p120
      %p122 = scmp.ne.s32.totalorder %s110, %s111
      %p123 = scmp.eq.s32.totalorder %s42, 3
      %p124 = por %p122, %p123
      %p126 = scmp.ne.s32.totalorder %s111, %s125
      %p127 = scmp.eq.s32.totalorder %s42, 0
      %p128 = por %p126, %p127
      %s130 = sadd.s32 %s129, 1
      %p133 = scmp.eq.s32.totalorder %s36, 3
      %p134 = scmp.ne.s32.totalorder %s129, %s131
      %p135 = scmp.eq.s32.totalorder %s36, 0
      %p136 = por %p134, %p135
      %p137 = scmp.ne.s32.totalorder %s129, %s131
      %p138 = scmp.eq.s32.totalorder %s41, 3
      %p139 = por %p137, %p138
      %p140 = scmp.ne.s32.totalorder %s131, %s132
      %p141 = scmp.eq.s32.totalorder %s41, 0
      %p142 = por %p140, %p141
      %p143 = scmp.ne.s32.totalorder %s131, %s132
      %p144 = scmp.eq.s32.totalorder %s42, 3
      %p145 = por %p143, %p144
      %p147 = scmp.ne.s32.totalorder %s132, %s146
      %p148 = scmp.eq.s32.totalorder %s42, 0
      %p149 = por %p147, %p148
      %s150 = ssub.s32 %s44, %s51
      %p151 = scmp.eq.s32.totalorder %s150, 0
      %s153 = sadd.s32 %s152, 1
      %s154 = scalar_select %p151, %s152, %s153
      %p157 = pneg %p151
      %p158 = scmp.eq.s32.totalorder %s36, 3
      %p159 = por %p157, %p158
      %p160 = scmp.ne.s32.totalorder %s152, %s155
      %p161 = scmp.eq.s32.totalorder %s36, 0
      %p162 = por %p160, %p161
      %p163 = scmp.ne.s32.totalorder %s152, %s155
      %p164 = scmp.eq.s32.totalorder %s41, 3
      %p165 = por %p163, %p164
      %p166 = scmp.ne.s32.totalorder %s155, %s156
      %p167 = scmp.eq.s32.totalorder %s41, 0
      %p168 = por %p166, %p167
      %p169 = scmp.ne.s32.totalorder %s155, %s156
      %p170 = scmp.eq.s32.totalorder %s42, 3
      %p171 = por %p169, %p170
      %p173 = scmp.ne.s32.totalorder %s156, %s172
      %p174 = scmp.eq.s32.totalorder %s42, 0
      %p175 = por %p173, %p174
      %s176 = ssub.s32 %s44, %s51
      %p177 = scmp.eq.s32.totalorder %s176, 0
      %s179 = sadd.s32 %s178, 1
      %s180 = scalar_select %p177, %s178, %s179
      %p183 = pneg %p177
      %p184 = scmp.eq.s32.totalorder %s36, 3
      %p185 = por %p183, %p184
      %p186 = scmp.ne.s32.totalorder %s178, %s181
      %p187 = scmp.eq.s32.totalorder %s36, 0
      %p188 = por %p186, %p187
      %p189 = scmp.ne.s32.totalorder %s178, %s181
      %p190 = scmp.eq.s32.totalorder %s41, 3
      %p191 = por %p189, %p190
      %p192 = scmp.ne.s32.totalorder %s181, %s182
      %p193 = scmp.eq.s32.totalorder %s41, 0
      %p194 = por %p192, %p193
      %p195 = scmp.ne.s32.totalorder %s181, %s182
      %p196 = scmp.eq.s32.totalorder %s42, 3
      %p197 = por %p195, %p196
      %p199 = scmp.ne.s32.totalorder %s182, %s198
      %p200 = scmp.eq.s32.totalorder %s42, 0
      %p201 = por %p199, %p200
      %s202 = ssub.s32 %s44, %s51
      %p203 = scmp.eq.s32.totalorder %s202, 0
      %s205 = sadd.s32 %s204, 1
      %s206 = scalar_select %p203, %s204, %s205
      %p209 = pneg %p203
      %p210 = scmp.eq.s32.totalorder %s36, 3
      %p211 = por %p209, %p210
      %p212 = scmp.ne.s32.totalorder %s204, %s207
      %p213 = scmp.eq.s32.totalorder %s36, 0
      %p214 = por %p212, %p213
      %p215 = scmp.ne.s32.totalorder %s204, %s207
      %p216 = scmp.eq.s32.totalorder %s41, 3
      %p217 = por %p215, %p216
      %p218 = scmp.ne.s32.totalorder %s207, %s208
      %p219 = scmp.eq.s32.totalorder %s41, 0
      %p220 = por %p218, %p219
      %p221 = scmp.ne.s32.totalorder %s207, %s208
      %p222 = scmp.eq.s32.totalorder %s42, 3
      %p223 = por %p221, %p222
      %p225 = scmp.ne.s32.totalorder %s208, %s224
      %p226 = scmp.eq.s32.totalorder %s42, 0
      %p227 = por %p225, %p226
      %s228 = ssub.s32 %s44, %s51
      %p229 = scmp.eq.s32.totalorder %s228, 0
      %s231 = sadd.s32 %s230, 1
      %s232 = scalar_select %p229, %s230, %s231
      %p235 = pneg %p229
      %p236 = scmp.eq.s32.totalorder %s36, 3
      %p237 = por %p235, %p236
      %p238 = scmp.ne.s32.totalorder %s230, %s233
      %p239 = scmp.eq.s32.totalorder %s36, 0
      %p240 = por %p238, %p239
      %p241 = scmp.ne.s32.totalorder %s230, %s233
      %p242 = scmp.eq.s32.totalorder %s41, 3
      %p243 = por %p241, %p242
      %p244 = scmp.ne.s32.totalorder %s233, %s234
      %p245 = scmp.eq.s32.totalorder %s41, 0
      %p246 = por %p244, %p245
      %p247 = scmp.ne.s32.totalorder %s233, %s234
      %p248 = scmp.eq.s32.totalorder %s42, 3
      %p249 = por %p247, %p248
      %p251 = scmp.ne.s32.totalorder %s234, %s250
      %p252 = scmp.eq.s32.totalorder %s42, 0
      %p253 = por %p251, %p252
      %s254 = ssub.s32 %s44, %s51
      %p255 = scmp.eq.s32.totalorder %s254, 0
      %s257 = sadd.s32 %s256, 1
      %s258 = scalar_select %p255, %s256, %s257
      %p261 = pneg %p255
      %p262 = scmp.eq.s32.totalorder %s36, 3
      %p263 = por %p261, %p262
      %p264 = scmp.ne.s32.totalorder %s256, %s259
      %p265 = scmp.eq.s32.totalorder %s36, 0
      %p266 = por %p264, %p265
      %p267 = scmp.ne.s32.totalorder %s256, %s259
      %p268 = scmp.eq.s32.totalorder %s41, 3
      %p269 = por %p267, %p268
      %p270 = scmp.ne.s32.totalorder %s259, %s260
      %p271 = scmp.eq.s32.totalorder %s41, 0
      %p272 = por %p270, %p271
      %p273 = scmp.ne.s32.totalorder %s259, %s260
      %p274 = scmp.eq.s32.totalorder %s42, 3
      %p275 = por %p273, %p274
      %p277 = scmp.ne.s32.totalorder %s260, %s276
      %p278 = scmp.eq.s32.totalorder %s42, 0
      %p279 = por %p277, %p278
      %s280 = ssub.s32 %s44, %s51
      %p281 = scmp.eq.s32.totalorder %s280, 0
      %s283 = sadd.s32 %s282, 1
      %s284 = scalar_select %p281, %s282, %s283
      %p287 = pneg %p281
      %p288 = scmp.eq.s32.totalorder %s36, 3
      %p289 = por %p287, %p288
      %p290 = scmp.ne.s32.totalorder %s282, %s285
      %p291 = scmp.eq.s32.totalorder %s36, 0
      %p292 = por %p290, %p291
      %p293 = scmp.ne.s32.totalorder %s282, %s285
      %p294 = scmp.eq.s32.totalorder %s41, 3
      %p295 = por %p293, %p294
      %p296 = scmp.ne.s32.totalorder %s285, %s286
      %p297 = scmp.eq.s32.totalorder %s41, 0
      %p298 = por %p296, %p297
      %p299 = scmp.ne.s32.totalorder %s285, %s286
      %p300 = scmp.eq.s32.totalorder %s42, 3
      %p301 = por %p299, %p300
      %p303 = scmp.ne.s32.totalorder %s286, %s302
      %p304 = scmp.eq.s32.totalorder %s42, 0
      %p305 = por %p303, %p304
      %s306 = ssub.s32 %s44, %s51
      %p307 = scmp.eq.s32.totalorder %s306, 0
      %s309 = sadd.s32 %s308, 1
      %s310 = scalar_select %p307, %s308, %s309
      %p313 = pneg %p307
      %p314 = scmp.eq.s32.totalorder %s36, 3
      %p315 = por %p313, %p314
      %p316 = scmp.ne.s32.totalorder %s308, %s311
      %p317 = scmp.eq.s32.totalorder %s36, 0
      %p318 = por %p316, %p317
      %p319 = scmp.ne.s32.totalorder %s308, %s311
      %p320 = scmp.eq.s32.totalorder %s41, 3
      %p321 = por %p319, %p320
      %p322 = scmp.ne.s32.totalorder %s311, %s312
      %p323 = scmp.eq.s32.totalorder %s41, 0
      %p324 = por %p322, %p323
      %p325 = scmp.ne.s32.totalorder %s311, %s312
      %p326 = scmp.eq.s32.totalorder %s42, 3
      %p327 = por %p325, %p326
      %p329 = scmp.ne.s32.totalorder %s312, %s328
      %p330 = scmp.eq.s32.totalorder %s42, 0
      %p331 = por %p329, %p330
      %s332 = ssub.s32 %s44, %s51
      %p333 = scmp.eq.s32.totalorder %s332, 0
      %s335 = sadd.s32 %s334, 1
      %s336 = scalar_select %p333, %s334, %s335
      %p339 = pneg %p333
      %p340 = scmp.eq.s32.totalorder %s36, 3
      %p341 = por %p339, %p340
      %p342 = scmp.ne.s32.totalorder %s334, %s337
      %p343 = scmp.eq.s32.totalorder %s36, 0
      %p344 = por %p342, %p343
      %p345 = scmp.ne.s32.totalorder %s334, %s337
      %p346 = scmp.eq.s32.totalorder %s41, 3
      %p347 = por %p345, %p346
      %p348 = scmp.ne.s32.totalorder %s337, %s338
      %p349 = scmp.eq.s32.totalorder %s41, 0
      %p350 = por %p348, %p349
      %p351 = scmp.ne.s32.totalorder %s337, %s338
      %p352 = scmp.eq.s32.totalorder %s42, 3
      %p353 = por %p351, %p352
      %p355 = scmp.ne.s32.totalorder %s338, %s354
      %p356 = scmp.eq.s32.totalorder %s42, 0
      %p357 = por %p355, %p356
      %s358 = ssub.s32 %s44, %s51
      %p359 = scmp.eq.s32.totalorder %s358, 0
      %s361 = sadd.s32 %s360, 1
      %s362 = scalar_select %p359, %s360, %s361
      %p365 = pneg %p359
      %p366 = scmp.eq.s32.totalorder %s36, 3
      %p367 = por %p365, %p366
      %p368 = scmp.ne.s32.totalorder %s360, %s363
      %p369 = scmp.eq.s32.totalorder %s36, 0
      %p370 = por %p368, %p369
      %p371 = scmp.ne.s32.totalorder %s360, %s363
      %p372 = scmp.eq.s32.totalorder %s41, 3
      %p373 = por %p371, %p372
      %p374 = scmp.ne.s32.totalorder %s363, %s364
      %p375 = scmp.eq.s32.totalorder %s41, 0
      %p376 = por %p374, %p375
      %p377 = scmp.ne.s32.totalorder %s363, %s364
      %p378 = scmp.eq.s32.totalorder %s42, 3
      %p379 = por %p377, %p378
      %p381 = scmp.ne.s32.totalorder %s364, %s380
      %p382 = scmp.eq.s32.totalorder %s42, 0
      %p383 = por %p381, %p382
      %s384 = ssub.s32 %s44, %s51
      %p385 = scmp.eq.s32.totalorder %s384, 0
      %s387 = sadd.s32 %s386, 1
      %s388 = scalar_select %p385, %s386, %s387
      %p391 = pneg %p385
      %p392 = scmp.eq.s32.totalorder %s36, 3
      %p393 = por %p391, %p392
      %p394 = scmp.ne.s32.totalorder %s386, %s389
      %p395 = scmp.eq.s32.totalorder %s36, 0
      %p396 = por %p394, %p395
      %p397 = scmp.ne.s32.totalorder %s386, %s389
      %p398 = scmp.eq.s32.totalorder %s41, 3
      %p399 = por %p397, %p398
      %p400 = scmp.ne.s32.totalorder %s389, %s390
      %p401 = scmp.eq.s32.totalorder %s41, 0
      %p402 = por %p400, %p401
      %p403 = scmp.ne.s32.totalorder %s389, %s390
      %p404 = scmp.eq.s32.totalorder %s42, 3
      %p405 = por %p403, %p404
      %p407 = scmp.ne.s32.totalorder %s390, %s406
      %p408 = scmp.eq.s32.totalorder %s42, 0
      %p409 = por %p407, %p408
      %s410 = ssub.s32 %s44, %s51
      %p411 = scmp.eq.s32.totalorder %s410, 0
      %s413 = sadd.s32 %s412, 1
      %s414 = scalar_select %p411, %s412, %s413
      %p417 = pneg %p411
      %p418 = scmp.eq.s32.totalorder %s36, 3
      %p419 = por %p417, %p418
      %p420 = scmp.ne.s32.totalorder %s412, %s415
      %p421 = scmp.eq.s32.totalorder %s36, 0
      %p422 = por %p420, %p421
      %p423 = scmp.ne.s32.totalorder %s412, %s415
      %p424 = scmp.eq.s32.totalorder %s41, 3
      %p425 = por %p423, %p424
      %p426 = scmp.ne.s32.totalorder %s415, %s416
      %p427 = scmp.eq.s32.totalorder %s41, 0
      %p428 = por %p426, %p427
      %p429 = scmp.ne.s32.totalorder %s415, %s416
      %p430 = scmp.eq.s32.totalorder %s42, 3
      %p431 = por %p429, %p430
      %p433 = scmp.ne.s32.totalorder %s416, %s432
      %p434 = scmp.eq.s32.totalorder %s42, 0
      %p435 = por %p433, %p434
      %s436 = ssub.s32 %s44, %s51
      %p437 = scmp.eq.s32.totalorder %s436, 0
      %s439 = sadd.s32 %s438, 1
      %s440 = scalar_select %p437, %s438, %s439
      %p443 = pneg %p437
      %p444 = scmp.eq.s32.totalorder %s36, 3
      %p445 = por %p443, %p444
      %p446 = scmp.ne.s32.totalorder %s438, %s441
      %p447 = scmp.eq.s32.totalorder %s36, 0
      %p448 = por %p446, %p447
      %p449 = scmp.ne.s32.totalorder %s438, %s441
      %p450 = scmp.eq.s32.totalorder %s41, 3
      %p451 = por %p449, %p450
      %p452 = scmp.ne.s32.totalorder %s441, %s442
      %p453 = scmp.eq.s32.totalorder %s41, 0
      %p454 = por %p452, %p453
      %p455 = scmp.ne.s32.totalorder %s441, %s442
      %p456 = scmp.eq.s32.totalorder %s42, 3
      %p457 = por %p455, %p456
      %p459 = scmp.ne.s32.totalorder %s442, %s458
      %p460 = scmp.eq.s32.totalorder %s42, 0
      %p461 = por %p459, %p460
      %s462 = ssub.s32 %s44, %s51
      %p463 = scmp.eq.s32.totalorder %s462, 0
      %s465 = sadd.s32 %s464, 1
      %s466 = scalar_select %p463, %s464, %s465
      %p469 = pneg %p463
      %p470 = scmp.eq.s32.totalorder %s36, 3
      %p471 = por %p469, %p470
      %p472 = scmp.ne.s32.totalorder %s464, %s467
      %p473 = scmp.eq.s32.totalorder %s36, 0
      %p474 = por %p472, %p473
      %p475 = scmp.ne.s32.totalorder %s464, %s467
      %p476 = scmp.eq.s32.totalorder %s41, 3
      %p477 = por %p475, %p476
      %p478 = scmp.ne.s32.totalorder %s467, %s468
      %p479 = scmp.eq.s32.totalorder %s41, 0
      %p480 = por %p478, %p479
      %p481 = scmp.ne.s32.totalorder %s467, %s468
      %p482 = scmp.eq.s32.totalorder %s42, 3
      %p483 = por %p481, %p482
      %p485 = scmp.ne.s32.totalorder %s468, %s484
      %p486 = scmp.eq.s32.totalorder %s42, 0
      %p487 = por %p485, %p486
      %s488 = ssub.s32 %s44, %s51
      %p489 = scmp.eq.s32.totalorder %s488, 0
      %s491 = sadd.s32 %s490, 1
      %s492 = scalar_select %p489, %s490, %s491
      %p495 = pneg %p489
      %p496 = scmp.eq.s32.totalorder %s36, 3
      %p497 = por %p495, %p496
      %p498 = scmp.ne.s32.totalorder %s490, %s493
      %p499 = scmp.eq.s32.totalorder %s36, 0
      %p500 = por %p498, %p499
      %p501 = scmp.ne.s32.totalorder %s490, %s493
      %p502 = scmp.eq.s32.totalorder %s41, 3
      %p503 = por %p501, %p502
      %p504 = scmp.ne.s32.totalorder %s493, %s494
      %p505 = scmp.eq.s32.totalorder %s41, 0
      %p506 = por %p504, %p505
      %p507 = scmp.ne.s32.totalorder %s493, %s494
      %p508 = scmp.eq.s32.totalorder %s42, 3
      %p509 = por %p507, %p508
      %p511 = scmp.ne.s32.totalorder %s494, %s510
      %p512 = scmp.eq.s32.totalorder %s42, 0
      %p513 = por %p511, %p512
      %s514 = ssub.s32 %s44, %s51
      %p515 = scmp.eq.s32.totalorder %s514, 0
      %s517 = sadd.s32 %s516, 1
      %s518 = scalar_select %p515, %s516, %s517
      %p521 = pneg %p515
      %p522 = scmp.eq.s32.totalorder %s36, 3
      %p523 = por %p521, %p522
      %p524 = scmp.ne.s32.totalorder %s516, %s519
      %p525 = scmp.eq.s32.totalorder %s36, 0
      %p526 = por %p524, %p525
      %p527 = scmp.ne.s32.totalorder %s516, %s519
      %p528 = scmp.eq.s32.totalorder %s41, 3
      %p529 = por %p527, %p528
      %p530 = scmp.ne.s32.totalorder %s519, %s520
      %p531 = scmp.eq.s32.totalorder %s41, 0
      %p532 = por %p530, %p531
      %p533 = scmp.ne.s32.totalorder %s519, %s520
      %p534 = scmp.eq.s32.totalorder %s42, 3
      %p535 = por %p533, %p534
      %p537 = scmp.ne.s32.totalorder %s520, %s536
      %p538 = scmp.eq.s32.totalorder %s42, 0
      %p539 = por %p537, %p538
      %s540 = ssub.s32 %s44, %s51
      %p541 = scmp.eq.s32.totalorder %s540, 0
      %s543 = sadd.s32 %s542, 1
      %s544 = scalar_select %p541, %s542, %s543
      %p547 = pneg %p541
      %p548 = scmp.eq.s32.totalorder %s36, 3
      %p549 = por %p547, %p548
      %p550 = scmp.ne.s32.totalorder %s542, %s545
      %p551 = scmp.eq.s32.totalorder %s36, 0
      %p552 = por %p550, %p551
      %p553 = scmp.ne.s32.totalorder %s542, %s545
      %p554 = scmp.eq.s32.totalorder %s41, 3
      %p555 = por %p553, %p554
      %p556 = scmp.ne.s32.totalorder %s545, %s546
      %p557 = scmp.eq.s32.totalorder %s41, 0
      %p558 = por %p556, %p557
      %p559 = scmp.ne.s32.totalorder %s545, %s546
      %p560 = scmp.eq.s32.totalorder %s42, 3
      %p561 = por %p559, %p560
      %p563 = scmp.ne.s32.totalorder %s546, %s562
      %p564 = scmp.eq.s32.totalorder %s42, 0
      %p565 = por %p563, %p564
      %s566 = ssub.s32 %s43, %s55
      %p567 = scmp.eq.s32.totalorder %s566, 0
      %s569 = sadd.s32 %s568, 1
      %s570 = scalar_select %p567, %s568, %s569
      %p573 = pneg %p567
      %p574 = scmp.eq.s32.totalorder %s36, 3
      %p575 = por %p573, %p574
      %p576 = scmp.ne.s32.totalorder %s568, %s571
      %p577 = scmp.eq.s32.totalorder %s36, 0
      %p578 = por %p576, %p577
      %p579 = scmp.ne.s32.totalorder %s568, %s571
      %p580 = scmp.eq.s32.totalorder %s41, 3
      %p581 = por %p579, %p580
      %p582 = scmp.ne.s32.totalorder %s571, %s572
      %p583 = scmp.eq.s32.totalorder %s41, 0
      %p584 = por %p582, %p583
      %p585 = scmp.ne.s32.totalorder %s571, %s572
      %p586 = scmp.eq.s32.totalorder %s42, 3
      %p587 = por %p585, %p586
      %p589 = scmp.ne.s32.totalorder %s572, %s588
      %p590 = scmp.eq.s32.totalorder %s42, 0
      %p591 = por %p589, %p590
      %p592 = scmp.le.s32.totalorder 1, %s36
      %p593 = scmp.lt.s32.totalorder %s36, 5
      %p594 = pnand %p592, %p593
      %p595 = pneg %p594
      // Predicated region
      $region9: #{tpu_custom_call.1} parent=5 // pred_check
        _
      $region10: #{tpu_custom_call.1} parent=5 // pred_check_branch
        %597 = sbr.rel (%p594) target = $region12
      $region11: #{tpu_custom_call.1} parent=5 // pred_region
        %s598 = ssub.s32 %s36, 1
        // Predicated region
        $region13: #{tpu_custom_call.1} parent=11 // pred_check
          %p599 = pneg %p121
        $region14: #{tpu_custom_call.1} parent=11 // pred_check_branch
          %601 = sbr.rel (%p599) target = $region16
        $region15: #{tpu_custom_call.1} parent=11 // pred_region
          %s603 = ssub.s32 16, 16
          %604 = vsyncadd [#allocation7], %s603
          %s606 = sshll.u32 [#allocation8], 4
          %s607 = int_to_ptr.vmem [resolvable:$true] %s606
          %609 = dma.hbm_to_vmem [thread:$0]  %s2, 16, %s607, [#allocation7]
        $region16: #{tpu_custom_call.1} parent=11 // pred_fallthru
          _
        // Predicated region
        $region17: #{tpu_custom_call.1} parent=11 // pred_check
          %p610 = pneg %p142
        $region18: #{tpu_custom_call.1} parent=11 // pred_check_branch
          %612 = sbr.rel (%p610) target = $region20
        $region19: #{tpu_custom_call.1} parent=11 // pred_region
          %s614 = ssub.s32 16, 16
          %615 = vsyncadd [#allocation10], %s614
          %s617 = sshll.u32 [#allocation9], 4
          %s618 = int_to_ptr.vmem [resolvable:$true] %s617
          %620 = dma.hbm_to_vmem [thread:$0]  %s3, 16, %s618, [#allocation10]
        $region20: #{tpu_custom_call.1} parent=11 // pred_fallthru
          _
      $region12: #{tpu_custom_call.1} parent=5 // pred_fallthru
        _
      %p621 = scmp.lt.s32.totalorder %s36, 4
      // Predicated region
      $region21: #{tpu_custom_call.1} parent=5 // pred_check
        %p622 = pneg %p621
      $region22: #{tpu_custom_call.1} parent=5 // pred_check_branch
        %624 = sbr.rel (%p622) target = $region24
      $region23: #{tpu_custom_call.1} parent=5 // pred_region
        // Predicated region
        $region25: #{tpu_custom_call.1} parent=23 // pred_check
          %p625 = pneg %p68
        $region26: #{tpu_custom_call.1} parent=23 // pred_check_branch
          %627 = sbr.rel (%p625) target = $region28
        $region27: #{tpu_custom_call.1} parent=23 // pred_region
          %s628 = sand.u32 %s36, 1
          %s629 = scalar_lea.sflag [#allocation4], %s628
          %s630 = sand.u32 %s58, 1
          %s631 = smul.addr %s630, 16
          %s632 = scalar_lea.vmem [#allocation3], %s631
          %s634 = ssub.s32 256, 256
          %635 = vsyncadd %s629, %s634
          %s636 = smul.addr %s43, 2
          %s637 = smul.addr %s636, 128
          %s638 = scalar_lea.hbm %s0, %s637
          %s639 = sshll.u32 %s632, 4
          %s640 = int_to_ptr.vmem [resolvable:$true] %s639
          %645 = dma.hbm_to_vmem [thread:$0]  %s638, 256, %s640, %s629, 128, 128, 8
        $region28: #{tpu_custom_call.1} parent=23 // pred_fallthru
          _
        // Predicated region
        $region29: #{tpu_custom_call.1} parent=23 // pred_check
          %p646 = pneg %p94
        $region30: #{tpu_custom_call.1} parent=23 // pred_check_branch
          %648 = sbr.rel (%p646) target = $region32
        $region31: #{tpu_custom_call.1} parent=23 // pred_region
          %s649 = sand.u32 %s36, 1
          %s650 = scalar_lea.sflag [#allocation7], %s649
          %s651 = sand.u32 %s84, 1
          %s652 = smul.addr %s651, 32
          %s653 = scalar_lea.vmem [#allocation6], %s652
          %s655 = ssub.s32 512, 512
          %656 = vsyncadd %s650, %s655
          %s657 = smul.addr %s43, 8
          %s658 = smul.addr %s657, 64
          %s659 = scalar_lea.hbm %s1, %s658
          %s660 = sshll.u32 %s653, 4
          %s661 = int_to_ptr.vmem [resolvable:$true] %s660
          %666 = dma.hbm_to_vmem [thread:$0]  %s659, 512, %s661, %s650, 64, 64, 4
        $region32: #{tpu_custom_call.1} parent=23 // pred_fallthru
          _
        // Predicated region
        $region33: #{tpu_custom_call.1} parent=23 // pred_check
          %p667 = pneg %p162
        $region34: #{tpu_custom_call.1} parent=23 // pred_check_branch
          %669 = sbr.rel (%p667) target = $region36
        $region35: #{tpu_custom_call.1} parent=23 // pred_region
          %s670 = sand.u32 %s36, 1
          %s671 = scalar_lea.sflag [#allocation4], %s670
          %s672 = sand.u32 %s152, 1
          %s673 = scalar_lea.vmem [#allocation11], %s672
          %s675 = ssub.s32 16, 16
          %676 = vsyncadd %s671, %s675
          %s677 = smul.addr %s44, 16
          %s678 = scalar_lea.hbm %s4, %s677
          %s680 = sshll.u32 %s673, 4
          %s681 = int_to_ptr.vmem [resolvable:$true] %s680
          %683 = dma.hbm_to_vmem [thread:$0]  %s678, 16, %s681, %s671
        $region36: #{tpu_custom_call.1} parent=23 // pred_fallthru
          _
        // Predicated region
        $region37: #{tpu_custom_call.1} parent=23 // pred_check
          %p684 = pneg %p188
        $region38: #{tpu_custom_call.1} parent=23 // pred_check_branch
          %686 = sbr.rel (%p684) target = $region40
        $region39: #{tpu_custom_call.1} parent=23 // pred_region
          %s687 = sand.u32 %s36, 1
          %s688 = scalar_lea.sflag [#allocation7], %s687
          %s689 = sand.u32 %s178, 1
          %s690 = scalar_lea.vmem [#allocation12], %s689
          %s692 = ssub.s32 16, 16
          %693 = vsyncadd %s688, %s692
          %s694 = smul.addr %s44, 16
          %s695 = scalar_lea.hbm %s5, %s694
          %s697 = sshll.u32 %s690, 4
          %s698 = int_to_ptr.vmem [resolvable:$true] %s697
          %700 = dma.hbm_to_vmem [thread:$0]  %s695, 16, %s698, %s688
        $region40: #{tpu_custom_call.1} parent=23 // pred_fallthru
          _
        // Predicated region
        $region41: #{tpu_custom_call.1} parent=23 // pred_check
          %p701 = pneg %p214
        $region42: #{tpu_custom_call.1} parent=23 // pred_check_branch
          %703 = sbr.rel (%p701) target = $region44
        $region43: #{tpu_custom_call.1} parent=23 // pred_region
          %s704 = sand.u32 %s36, 1
          %s705 = scalar_lea.sflag [#allocation4], %s704
          %s706 = sand.u32 %s204, 1
          %s707 = smul.addr %s706, 16
          %s708 = scalar_lea.vmem [#allocation13], %s707
          %s710 = ssub.s32 256, 256
          %711 = vsyncadd %s705, %s710
          %s712 = smul.addr %s44, 4
          %s713 = smul.addr %s712, 64
          %s714 = scalar_lea.hbm %s6, %s713
          %s715 = sshll.u32 %s708, 4
          %s716 = int_to_ptr.vmem [resolvable:$true] %s715
          %721 = dma.hbm_to_vmem [thread:$0]  %s714, 256, %s716, %s705, 64, 64, 4
        $region44: #{tpu_custom_call.1} parent=23 // pred_fallthru
          _
        // Predicated region
        $region45: #{tpu_custom_call.1} parent=23 // pred_check
          %p722 = pneg %p240
        $region46: #{tpu_custom_call.1} parent=23 // pred_check_branch
          %724 = sbr.rel (%p722) target = $region48
        $region47: #{tpu_custom_call.1} parent=23 // pred_region
          %s725 = sand.u32 %s36, 1
          %s726 = scalar_lea.sflag [#allocation7], %s725
          %s727 = sand.u32 %s230, 1
          %s728 = smul.addr %s727, 32
          %s729 = scalar_lea.vmem [#allocation14], %s728
          %s731 = ssub.s32 512, 512
          %732 = vsyncadd %s726, %s731
          %s733 = smul.addr %s44, 4
          %s734 = smul.addr %s733, 128
          %s735 = scalar_lea.hbm %s7, %s734
          %s736 = sshll.u32 %s729, 4
          %s737 = int_to_ptr.vmem [resolvable:$true] %s736
          %742 = dma.hbm_to_vmem [thread:$0]  %s735, 512, %s737, %s726, 128, 128, 8
        $region48: #{tpu_custom_call.1} parent=23 // pred_fallthru
          _
        // Predicated region
        $region49: #{tpu_custom_call.1} parent=23 // pred_check
          %p743 = pneg %p266
        $region50: #{tpu_custom_call.1} parent=23 // pred_check_branch
          %745 = sbr.rel (%p743) target = $region52
        $region51: #{tpu_custom_call.1} parent=23 // pred_region
          %s746 = sand.u32 %s36, 1
          %s747 = scalar_lea.sflag [#allocation4], %s746
          %s748 = sand.u32 %s256, 1
          %s749 = smul.addr %s748, 16
          %s750 = scalar_lea.vmem [#allocation15], %s749
          %s752 = ssub.s32 256, 256
          %753 = vsyncadd %s747, %s752
          %s754 = smul.addr %s44, 4
          %s755 = smul.addr %s754, 64
          %s756 = scalar_lea.hbm %s8, %s755
          %s757 = sshll.u32 %s750, 4
          %s758 = int_to_ptr.vmem [resolvable:$true] %s757
          %763 = dma.hbm_to_vmem [thread:$0]  %s756, 256, %s758, %s747, 64, 64, 4
        $region52: #{tpu_custom_call.1} parent=23 // pred_fallthru
          _
        // Predicated region
        $region53: #{tpu_custom_call.1} parent=23 // pred_check
          %p764 = pneg %p292
        $region54: #{tpu_custom_call.1} parent=23 // pred_check_branch
          %766 = sbr.rel (%p764) target = $region56
        $region55: #{tpu_custom_call.1} parent=23 // pred_region
          %s767 = sand.u32 %s36, 1
          %s768 = scalar_lea.sflag [#allocation7], %s767
          %s769 = sand.u32 %s282, 1
          %s770 = smul.addr %s769, 32
          %s771 = scalar_lea.vmem [#allocation16], %s770
          %s773 = ssub.s32 512, 512
          %774 = vsyncadd %s768, %s773
          %s775 = smul.addr %s44, 4
          %s776 = smul.addr %s775, 128
          %s777 = scalar_lea.hbm %s9, %s776
          %s778 = sshll.u32 %s771, 4
          %s779 = int_to_ptr.vmem [resolvable:$true] %s778
          %784 = dma.hbm_to_vmem [thread:$0]  %s777, 512, %s779, %s768, 128, 128, 8
        $region56: #{tpu_custom_call.1} parent=23 // pred_fallthru
          _
        // Predicated region
        $region57: #{tpu_custom_call.1} parent=23 // pred_check
          %p785 = pneg %p318
        $region58: #{tpu_custom_call.1} parent=23 // pred_check_branch
          %787 = sbr.rel (%p785) target = $region60
        $region59: #{tpu_custom_call.1} parent=23 // pred_region
          %s788 = sand.u32 %s36, 1
          %s789 = scalar_lea.sflag [#allocation4], %s788
          %s790 = sand.u32 %s308, 1
          %s791 = smul.addr %s790, 16
          %s792 = scalar_lea.vmem [#allocation17], %s791
          %s794 = ssub.s32 256, 256
          %795 = vsyncadd %s789, %s794
          %s796 = smul.addr %s44, 4
          %s797 = smul.addr %s796, 64
          %s798 = scalar_lea.hbm %s10, %s797
          %s799 = sshll.u32 %s792, 4
          %s800 = int_to_ptr.vmem [resolvable:$true] %s799
          %805 = dma.hbm_to_vmem [thread:$0]  %s798, 256, %s800, %s789, 64, 64, 4
        $region60: #{tpu_custom_call.1} parent=23 // pred_fallthru
          _
        // Predicated region
        $region61: #{tpu_custom_call.1} parent=23 // pred_check
          %p806 = pneg %p344
        $region62: #{tpu_custom_call.1} parent=23 // pred_check_branch
          %808 = sbr.rel (%p806) target = $region64
        $region63: #{tpu_custom_call.1} parent=23 // pred_region
          %s809 = sand.u32 %s36, 1
          %s810 = scalar_lea.sflag [#allocation7], %s809
          %s811 = sand.u32 %s334, 1
          %s812 = smul.addr %s811, 32
          %s813 = scalar_lea.vmem [#allocation18], %s812
          %s815 = ssub.s32 512, 512
          %816 = vsyncadd %s810, %s815
          %s817 = smul.addr %s44, 4
          %s818 = smul.addr %s817, 128
          %s819 = scalar_lea.hbm %s11, %s818
          %s820 = sshll.u32 %s813, 4
          %s821 = int_to_ptr.vmem [resolvable:$true] %s820
          %826 = dma.hbm_to_vmem [thread:$0]  %s819, 512, %s821, %s810, 128, 128, 8
        $region64: #{tpu_custom_call.1} parent=23 // pred_fallthru
          _
        // Predicated region
        $region65: #{tpu_custom_call.1} parent=23 // pred_check
          %p827 = pneg %p370
        $region66: #{tpu_custom_call.1} parent=23 // pred_check_branch
          %829 = sbr.rel (%p827) target = $region68
        $region67: #{tpu_custom_call.1} parent=23 // pred_region
          %s830 = sand.u32 %s36, 1
          %s831 = scalar_lea.sflag [#allocation4], %s830
          %s832 = sand.u32 %s360, 1
          %s833 = smul.addr %s832, 16
          %s834 = scalar_lea.vmem [#allocation19], %s833
          %s836 = ssub.s32 256, 256
          %837 = vsyncadd %s831, %s836
          %s838 = smul.addr %s44, 4
          %s839 = smul.addr %s838, 64
          %s840 = scalar_lea.hbm %s12, %s839
          %s841 = sshll.u32 %s834, 4
          %s842 = int_to_ptr.vmem [resolvable:$true] %s841
          %847 = dma.hbm_to_vmem [thread:$0]  %s840, 256, %s842, %s831, 64, 64, 4
        $region68: #{tpu_custom_call.1} parent=23 // pred_fallthru
          _
        // Predicated region
        $region69: #{tpu_custom_call.1} parent=23 // pred_check
          %p848 = pneg %p396
        $region70: #{tpu_custom_call.1} parent=23 // pred_check_branch
          %850 = sbr.rel (%p848) target = $region72
        $region71: #{tpu_custom_call.1} parent=23 // pred_region
          %s851 = sand.u32 %s36, 1
          %s852 = scalar_lea.sflag [#allocation7], %s851
          %s853 = sand.u32 %s386, 1
          %s854 = scalar_lea.vmem [#allocation20], %s853
          %s856 = ssub.s32 16, 16
          %857 = vsyncadd %s852, %s856
          %s858 = smul.addr %s44, 16
          %s859 = scalar_lea.hbm %s13, %s858
          %s861 = sshll.u32 %s854, 4
          %s862 = int_to_ptr.vmem [resolvable:$true] %s861
          %864 = dma.hbm_to_vmem [thread:$0]  %s859, 16, %s862, %s852
        $region72: #{tpu_custom_call.1} parent=23 // pred_fallthru
          _
        // Predicated region
        $region73: #{tpu_custom_call.1} parent=23 // pred_check
          %p865 = pneg %p422
        $region74: #{tpu_custom_call.1} parent=23 // pred_check_branch
          %867 = sbr.rel (%p865) target = $region76
        $region75: #{tpu_custom_call.1} parent=23 // pred_region
          %s868 = sand.u32 %s36, 1
          %s869 = scalar_lea.sflag [#allocation4], %s868
          %s870 = sand.u32 %s412, 1
          %s871 = scalar_lea.vmem [#allocation21], %s870
          %s873 = ssub.s32 16, 16
          %874 = vsyncadd %s869, %s873
          %s875 = smul.addr %s44, 16
          %s876 = scalar_lea.hbm %s14, %s875
          %s878 = sshll.u32 %s871, 4
          %s879 = int_to_ptr.vmem [resolvable:$true] %s878
          %881 = dma.hbm_to_vmem [thread:$0]  %s876, 16, %s879, %s869
        $region76: #{tpu_custom_call.1} parent=23 // pred_fallthru
          _
        // Predicated region
        $region77: #{tpu_custom_call.1} parent=23 // pred_check
          %p882 = pneg %p448
        $region78: #{tpu_custom_call.1} parent=23 // pred_check_branch
          %884 = sbr.rel (%p882) target = $region80
        $region79: #{tpu_custom_call.1} parent=23 // pred_region
          %s885 = sand.u32 %s36, 1
          %s886 = scalar_lea.sflag [#allocation7], %s885
          %s887 = sand.u32 %s438, 1
          %s888 = scalar_lea.vmem [#allocation22], %s887
          %s890 = ssub.s32 16, 16
          %891 = vsyncadd %s886, %s890
          %s892 = smul.addr %s44, 16
          %s893 = scalar_lea.hbm %s15, %s892
          %s895 = sshll.u32 %s888, 4
          %s896 = int_to_ptr.vmem [resolvable:$true] %s895
          %898 = dma.hbm_to_vmem [thread:$0]  %s893, 16, %s896, %s886
        $region80: #{tpu_custom_call.1} parent=23 // pred_fallthru
          _
        // Predicated region
        $region81: #{tpu_custom_call.1} parent=23 // pred_check
          %p899 = pneg %p474
        $region82: #{tpu_custom_call.1} parent=23 // pred_check_branch
          %901 = sbr.rel (%p899) target = $region84
        $region83: #{tpu_custom_call.1} parent=23 // pred_region
          %s902 = sand.u32 %s36, 1
          %s903 = scalar_lea.sflag [#allocation4], %s902
          %s904 = sand.u32 %s464, 1
          %s905 = smul.addr %s904, 16
          %s906 = scalar_lea.vmem [#allocation23], %s905
          %s908 = ssub.s32 256, 256
          %909 = vsyncadd %s903, %s908
          %s910 = smul.addr %s44, 4
          %s911 = smul.addr %s910, 64
          %s912 = scalar_lea.hbm %s16, %s911
          %s913 = sshll.u32 %s906, 4
          %s914 = int_to_ptr.vmem [resolvable:$true] %s913
          %919 = dma.hbm_to_vmem [thread:$0]  %s912, 256, %s914, %s903, 64, 64, 4
        $region84: #{tpu_custom_call.1} parent=23 // pred_fallthru
          _
        // Predicated region
        $region85: #{tpu_custom_call.1} parent=23 // pred_check
          %p920 = pneg %p500
        $region86: #{tpu_custom_call.1} parent=23 // pred_check_branch
          %922 = sbr.rel (%p920) target = $region88
        $region87: #{tpu_custom_call.1} parent=23 // pred_region
          %s923 = sand.u32 %s36, 1
          %s924 = scalar_lea.sflag [#allocation7], %s923
          %s925 = sand.u32 %s490, 1
          %s926 = scalar_lea.vmem [#allocation24], %s925
          %s928 = ssub.s32 16, 16
          %929 = vsyncadd %s924, %s928
          %s930 = smul.addr %s44, 16
          %s931 = scalar_lea.hbm %s17, %s930
          %s933 = sshll.u32 %s926, 4
          %s934 = int_to_ptr.vmem [resolvable:$true] %s933
          %936 = dma.hbm_to_vmem [thread:$0]  %s931, 16, %s934, %s924
        $region88: #{tpu_custom_call.1} parent=23 // pred_fallthru
          _
        // Predicated region
        $region89: #{tpu_custom_call.1} parent=23 // pred_check
          %p937 = pneg %p526
        $region90: #{tpu_custom_call.1} parent=23 // pred_check_branch
          %939 = sbr.rel (%p937) target = $region92
        $region91: #{tpu_custom_call.1} parent=23 // pred_region
          %s940 = sand.u32 %s36, 1
          %s941 = scalar_lea.sflag [#allocation4], %s940
          %s942 = sand.u32 %s516, 1
          %s943 = smul.addr %s942, 32
          %s944 = scalar_lea.vmem [#allocation25], %s943
          %s946 = ssub.s32 512, 512
          %947 = vsyncadd %s941, %s946
          %s948 = smul.addr %s44, 8
          %s949 = smul.addr %s948, 64
          %s950 = scalar_lea.hbm %s18, %s949
          %s951 = sshll.u32 %s944, 4
          %s952 = int_to_ptr.vmem [resolvable:$true] %s951
          %957 = dma.hbm_to_vmem [thread:$0]  %s950, 512, %s952, %s941, 64, 64, 4
        $region92: #{tpu_custom_call.1} parent=23 // pred_fallthru
          _
        // Predicated region
        $region93: #{tpu_custom_call.1} parent=23 // pred_check
          %p958 = pneg %p552
        $region94: #{tpu_custom_call.1} parent=23 // pred_check_branch
          %960 = sbr.rel (%p958) target = $region96
        $region95: #{tpu_custom_call.1} parent=23 // pred_region
          %s961 = sand.u32 %s36, 1
          %s962 = scalar_lea.sflag [#allocation7], %s961
          %s963 = sand.u32 %s542, 1
          %s964 = scalar_lea.vmem [#allocation26], %s963
          %s966 = ssub.s32 16, 16
          %967 = vsyncadd %s962, %s966
          %s968 = smul.addr %s44, 16
          %s969 = scalar_lea.hbm %s19, %s968
          %s971 = sshll.u32 %s964, 4
          %s972 = int_to_ptr.vmem [resolvable:$true] %s971
          %974 = dma.hbm_to_vmem [thread:$0]  %s969, 16, %s972, %s962
        $region96: #{tpu_custom_call.1} parent=23 // pred_fallthru
          _
      $region24: #{tpu_custom_call.1} parent=5 // pred_fallthru
        _
      %p975 = scmp.le.s32.totalorder 1, %s36
      %p976 = scmp.lt.s32.totalorder %s36, 5
      %p977 = pnand %p975, %p976
      %p978 = pneg %p977
      // Predicated region
      $region97: #{tpu_custom_call.1} parent=5 // pred_check
        _
      $region98: #{tpu_custom_call.1} parent=5 // pred_check_branch
        %980 = sbr.rel (%p977) target = $region100
      $region99: #{tpu_custom_call.1} parent=5 // pred_region
        %s981 = ssub.s32 %s36, 1
        %s982 = sand.u32 %s41, 1
        %s983 = scalar_lea.sflag [#allocation4], %s982
        %s984 = sand.u32 %s61, 1
        %s985 = smul.addr %s984, 16
        %s986 = scalar_lea.vmem [#allocation3], %s985
        // Predicated region
        $region101: #{tpu_custom_call.1} parent=99 // pred_check
          %p987 = pneg %p74
        $region102: #{tpu_custom_call.1} parent=99 // pred_check_branch
          %989 = sbr.rel (%p987) target = $region104
        $region103: #{tpu_custom_call.1} parent=99 // pred_region
          %990 = dma.done %s983, 256
        $region104: #{tpu_custom_call.1} parent=99 // pred_fallthru
          _
        %s991 = sand.u32 %s41, 1
        %s992 = scalar_lea.sflag [#allocation7], %s991
        %s993 = sand.u32 %s87, 1
        %s994 = smul.addr %s993, 32
        %s995 = scalar_lea.vmem [#allocation6], %s994
        // Predicated region
        $region105: #{tpu_custom_call.1} parent=99 // pred_check
          %p996 = pneg %p100
        $region106: #{tpu_custom_call.1} parent=99 // pred_check_branch
          %998 = sbr.rel (%p996) target = $region108
        $region107: #{tpu_custom_call.1} parent=99 // pred_region
          %999 = dma.done %s992, 512
        $region108: #{tpu_custom_call.1} parent=99 // pred_fallthru
          _
        // Predicated region
        $region109: #{tpu_custom_call.1} parent=99 // pred_check
          %p1000 = pneg %p121
        $region110: #{tpu_custom_call.1} parent=99 // pred_check_branch
          %1002 = sbr.rel (%p1000) target = $region112
        $region111: #{tpu_custom_call.1} parent=99 // pred_region
          %1003 = dma.done [#allocation7], 16
        $region112: #{tpu_custom_call.1} parent=99 // pred_fallthru
          _
        // Predicated region
        $region113: #{tpu_custom_call.1} parent=99 // pred_check
          %p1004 = pneg %p142
        $region114: #{tpu_custom_call.1} parent=99 // pred_check_branch
          %1006 = sbr.rel (%p1004) target = $region116
        $region115: #{tpu_custom_call.1} parent=99 // pred_region
          %1007 = dma.done [#allocation10], 16
        $region116: #{tpu_custom_call.1} parent=99 // pred_fallthru
          _
        %s1008 = sand.u32 %s41, 1
        %s1009 = scalar_lea.sflag [#allocation4], %s1008
        %s1010 = sand.u32 %s155, 1
        %s1011 = scalar_lea.vmem [#allocation11], %s1010
        // Predicated region
        $region117: #{tpu_custom_call.1} parent=99 // pred_check
          %p1012 = pneg %p168
        $region118: #{tpu_custom_call.1} parent=99 // pred_check_branch
          %1014 = sbr.rel (%p1012) target = $region120
        $region119: #{tpu_custom_call.1} parent=99 // pred_region
          %1015 = dma.done %s1009, 16
        $region120: #{tpu_custom_call.1} parent=99 // pred_fallthru
          _
        %s1016 = sand.u32 %s41, 1
        %s1017 = scalar_lea.sflag [#allocation7], %s1016
        %s1018 = sand.u32 %s181, 1
        %s1019 = scalar_lea.vmem [#allocation12], %s1018
        // Predicated region
        $region121: #{tpu_custom_call.1} parent=99 // pred_check
          %p1020 = pneg %p194
        $region122: #{tpu_custom_call.1} parent=99 // pred_check_branch
          %1022 = sbr.rel (%p1020) target = $region124
        $region123: #{tpu_custom_call.1} parent=99 // pred_region
          %1023 = dma.done %s1017, 16
        $region124: #{tpu_custom_call.1} parent=99 // pred_fallthru
          _
        %s1024 = sand.u32 %s41, 1
        %s1025 = scalar_lea.sflag [#allocation4], %s1024
        %s1026 = sand.u32 %s207, 1
        %s1027 = smul.addr %s1026, 16
        %s1028 = scalar_lea.vmem [#allocation13], %s1027
        // Predicated region
        $region125: #{tpu_custom_call.1} parent=99 // pred_check
          %p1029 = pneg %p220
        $region126: #{tpu_custom_call.1} parent=99 // pred_check_branch
          %1031 = sbr.rel (%p1029) target = $region128
        $region127: #{tpu_custom_call.1} parent=99 // pred_region
          %1032 = dma.done %s1025, 256
        $region128: #{tpu_custom_call.1} parent=99 // pred_fallthru
          _
        %s1033 = sand.u32 %s41, 1
        %s1034 = scalar_lea.sflag [#allocation7], %s1033
        %s1035 = sand.u32 %s233, 1
        %s1036 = smul.addr %s1035, 32
        %s1037 = scalar_lea.vmem [#allocation14], %s1036
        // Predicated region
        $region129: #{tpu_custom_call.1} parent=99 // pred_check
          %p1038 = pneg %p246
        $region130: #{tpu_custom_call.1} parent=99 // pred_check_branch
          %1040 = sbr.rel (%p1038) target = $region132
        $region131: #{tpu_custom_call.1} parent=99 // pred_region
          %1041 = dma.done %s1034, 512
        $region132: #{tpu_custom_call.1} parent=99 // pred_fallthru
          _
        %s1042 = sand.u32 %s41, 1
        %s1043 = scalar_lea.sflag [#allocation4], %s1042
        %s1044 = sand.u32 %s259, 1
        %s1045 = smul.addr %s1044, 16
        %s1046 = scalar_lea.vmem [#allocation15], %s1045
        // Predicated region
        $region133: #{tpu_custom_call.1} parent=99 // pred_check
          %p1047 = pneg %p272
        $region134: #{tpu_custom_call.1} parent=99 // pred_check_branch
          %1049 = sbr.rel (%p1047) target = $region136
        $region135: #{tpu_custom_call.1} parent=99 // pred_region
          %1050 = dma.done %s1043, 256
        $region136: #{tpu_custom_call.1} parent=99 // pred_fallthru
          _
        %s1051 = sand.u32 %s41, 1
        %s1052 = scalar_lea.sflag [#allocation7], %s1051
        %s1053 = sand.u32 %s285, 1
        %s1054 = smul.addr %s1053, 32
        %s1055 = scalar_lea.vmem [#allocation16], %s1054
        // Predicated region
        $region137: #{tpu_custom_call.1} parent=99 // pred_check
          %p1056 = pneg %p298
        $region138: #{tpu_custom_call.1} parent=99 // pred_check_branch
          %1058 = sbr.rel (%p1056) target = $region140
        $region139: #{tpu_custom_call.1} parent=99 // pred_region
          %1059 = dma.done %s1052, 512
        $region140: #{tpu_custom_call.1} parent=99 // pred_fallthru
          _
        %s1060 = sand.u32 %s41, 1
        %s1061 = scalar_lea.sflag [#allocation4], %s1060
        %s1062 = sand.u32 %s311, 1
        %s1063 = smul.addr %s1062, 16
        %s1064 = scalar_lea.vmem [#allocation17], %s1063
        // Predicated region
        $region141: #{tpu_custom_call.1} parent=99 // pred_check
          %p1065 = pneg %p324
        $region142: #{tpu_custom_call.1} parent=99 // pred_check_branch
          %1067 = sbr.rel (%p1065) target = $region144
        $region143: #{tpu_custom_call.1} parent=99 // pred_region
          %1068 = dma.done %s1061, 256
        $region144: #{tpu_custom_call.1} parent=99 // pred_fallthru
          _
        %s1069 = sand.u32 %s41, 1
        %s1070 = scalar_lea.sflag [#allocation7], %s1069
        %s1071 = sand.u32 %s337, 1
        %s1072 = smul.addr %s1071, 32
        %s1073 = scalar_lea.vmem [#allocation18], %s1072
        // Predicated region
        $region145: #{tpu_custom_call.1} parent=99 // pred_check
          %p1074 = pneg %p350
        $region146: #{tpu_custom_call.1} parent=99 // pred_check_branch
          %1076 = sbr.rel (%p1074) target = $region148
        $region147: #{tpu_custom_call.1} parent=99 // pred_region
          %1077 = dma.done %s1070, 512
        $region148: #{tpu_custom_call.1} parent=99 // pred_fallthru
          _
        %s1078 = sand.u32 %s41, 1
        %s1079 = scalar_lea.sflag [#allocation4], %s1078
        %s1080 = sand.u32 %s363, 1
        %s1081 = smul.addr %s1080, 16
        %s1082 = scalar_lea.vmem [#allocation19], %s1081
        // Predicated region
        $region149: #{tpu_custom_call.1} parent=99 // pred_check
          %p1083 = pneg %p376
        $region150: #{tpu_custom_call.1} parent=99 // pred_check_branch
          %1085 = sbr.rel (%p1083) target = $region152
        $region151: #{tpu_custom_call.1} parent=99 // pred_region
          %1086 = dma.done %s1079, 256
        $region152: #{tpu_custom_call.1} parent=99 // pred_fallthru
          _
        %s1087 = sand.u32 %s41, 1
        %s1088 = scalar_lea.sflag [#allocation7], %s1087
        %s1089 = sand.u32 %s389, 1
        %s1090 = scalar_lea.vmem [#allocation20], %s1089
        // Predicated region
        $region153: #{tpu_custom_call.1} parent=99 // pred_check
          %p1091 = pneg %p402
        $region154: #{tpu_custom_call.1} parent=99 // pred_check_branch
          %1093 = sbr.rel (%p1091) target = $region156
        $region155: #{tpu_custom_call.1} parent=99 // pred_region
          %1094 = dma.done %s1088, 16
        $region156: #{tpu_custom_call.1} parent=99 // pred_fallthru
          _
        %s1095 = sand.u32 %s41, 1
        %s1096 = scalar_lea.sflag [#allocation4], %s1095
        %s1097 = sand.u32 %s415, 1
        %s1098 = scalar_lea.vmem [#allocation21], %s1097
        // Predicated region
        $region157: #{tpu_custom_call.1} parent=99 // pred_check
          %p1099 = pneg %p428
        $region158: #{tpu_custom_call.1} parent=99 // pred_check_branch
          %1101 = sbr.rel (%p1099) target = $region160
        $region159: #{tpu_custom_call.1} parent=99 // pred_region
          %1102 = dma.done %s1096, 16
        $region160: #{tpu_custom_call.1} parent=99 // pred_fallthru
          _
        %s1103 = sand.u32 %s41, 1
        %s1104 = scalar_lea.sflag [#allocation7], %s1103
        %s1105 = sand.u32 %s441, 1
        %s1106 = scalar_lea.vmem [#allocation22], %s1105
        // Predicated region
        $region161: #{tpu_custom_call.1} parent=99 // pred_check
          %p1107 = pneg %p454
        $region162: #{tpu_custom_call.1} parent=99 // pred_check_branch
          %1109 = sbr.rel (%p1107) target = $region164
        $region163: #{tpu_custom_call.1} parent=99 // pred_region
          %1110 = dma.done %s1104, 16
        $region164: #{tpu_custom_call.1} parent=99 // pred_fallthru
          _
        %s1111 = sand.u32 %s41, 1
        %s1112 = scalar_lea.sflag [#allocation4], %s1111
        %s1113 = sand.u32 %s467, 1
        %s1114 = smul.addr %s1113, 16
        %s1115 = scalar_lea.vmem [#allocation23], %s1114
        // Predicated region
        $region165: #{tpu_custom_call.1} parent=99 // pred_check
          %p1116 = pneg %p480
        $region166: #{tpu_custom_call.1} parent=99 // pred_check_branch
          %1118 = sbr.rel (%p1116) target = $region168
        $region167: #{tpu_custom_call.1} parent=99 // pred_region
          %1119 = dma.done %s1112, 256
        $region168: #{tpu_custom_call.1} parent=99 // pred_fallthru
          _
        %s1120 = sand.u32 %s41, 1
        %s1121 = scalar_lea.sflag [#allocation7], %s1120
        %s1122 = sand.u32 %s493, 1
        %s1123 = scalar_lea.vmem [#allocation24], %s1122
        // Predicated region
        $region169: #{tpu_custom_call.1} parent=99 // pred_check
          %p1124 = pneg %p506
        $region170: #{tpu_custom_call.1} parent=99 // pred_check_branch
          %1126 = sbr.rel (%p1124) target = $region172
        $region171: #{tpu_custom_call.1} parent=99 // pred_region
          %1127 = dma.done %s1121, 16
        $region172: #{tpu_custom_call.1} parent=99 // pred_fallthru
          _
        %s1128 = sand.u32 %s41, 1
        %s1129 = scalar_lea.sflag [#allocation4], %s1128
        %s1130 = sand.u32 %s519, 1
        %s1131 = smul.addr %s1130, 32
        %s1132 = scalar_lea.vmem [#allocation25], %s1131
        // Predicated region
        $region173: #{tpu_custom_call.1} parent=99 // pred_check
          %p1133 = pneg %p532
        $region174: #{tpu_custom_call.1} parent=99 // pred_check_branch
          %1135 = sbr.rel (%p1133) target = $region176
        $region175: #{tpu_custom_call.1} parent=99 // pred_region
          %1136 = dma.done %s1129, 512
        $region176: #{tpu_custom_call.1} parent=99 // pred_fallthru
          _
        %s1137 = sand.u32 %s41, 1
        %s1138 = scalar_lea.sflag [#allocation7], %s1137
        %s1139 = sand.u32 %s545, 1
        %s1140 = scalar_lea.vmem [#allocation26], %s1139
        // Predicated region
        $region177: #{tpu_custom_call.1} parent=99 // pred_check
          %p1141 = pneg %p558
        $region178: #{tpu_custom_call.1} parent=99 // pred_check_branch
          %1143 = sbr.rel (%p1141) target = $region180
        $region179: #{tpu_custom_call.1} parent=99 // pred_region
          %1144 = dma.done %s1138, 16
        $region180: #{tpu_custom_call.1} parent=99 // pred_fallthru
          _
        %s1145 = sand.u32 %s41, 1
        %s1146 = scalar_lea.sflag [#allocation4], %s1145
        %s1147 = sand.u32 %s61, 1
        %s1148 = smul.addr %s1147, 16
        %s1149 = scalar_lea.vmem [#allocation3], %s1148
        %p1150 = pneg %p74
        %p1151 = pneg %p71
        %s1152 = sand.u32 %s41, 1
        %s1153 = scalar_lea.sflag [#allocation7], %s1152
        %s1154 = sand.u32 %s87, 1
        %s1155 = smul.addr %s1154, 32
        %s1156 = scalar_lea.vmem [#allocation6], %s1155
        %p1157 = pneg %p100
        %p1158 = pneg %p97
        %p1159 = pneg %p121
        %p1160 = pneg %p118
        %p1161 = pneg %p142
        %p1162 = pneg %p139
        %s1163 = sand.u32 %s41, 1
        %s1164 = scalar_lea.sflag [#allocation4], %s1163
        %s1165 = sand.u32 %s155, 1
        %s1166 = scalar_lea.vmem [#allocation11], %s1165
        %p1167 = pneg %p168
        %p1168 = pneg %p165
        %s1169 = sand.u32 %s41, 1
        %s1170 = scalar_lea.sflag [#allocation7], %s1169
        %s1171 = sand.u32 %s181, 1
        %s1172 = scalar_lea.vmem [#allocation12], %s1171
        %p1173 = pneg %p194
        %p1174 = pneg %p191
        %s1175 = sand.u32 %s41, 1
        %s1176 = scalar_lea.sflag [#allocation4], %s1175
        %s1177 = sand.u32 %s207, 1
        %s1178 = smul.addr %s1177, 16
        %s1179 = scalar_lea.vmem [#allocation13], %s1178
        %p1180 = pneg %p220
        %p1181 = pneg %p217
        %s1182 = sand.u32 %s41, 1
        %s1183 = scalar_lea.sflag [#allocation7], %s1182
        %s1184 = sand.u32 %s233, 1
        %s1185 = smul.addr %s1184, 32
        %s1186 = scalar_lea.vmem [#allocation14], %s1185
        %p1187 = pneg %p246
        %p1188 = pneg %p243
        %s1189 = sand.u32 %s41, 1
        %s1190 = scalar_lea.sflag [#allocation4], %s1189
        %s1191 = sand.u32 %s259, 1
        %s1192 = smul.addr %s1191, 16
        %s1193 = scalar_lea.vmem [#allocation15], %s1192
        %p1194 = pneg %p272
        %p1195 = pneg %p269
        %s1196 = sand.u32 %s41, 1
        %s1197 = scalar_lea.sflag [#allocation7], %s1196
        %s1198 = sand.u32 %s285, 1
        %s1199 = smul.addr %s1198, 32
        %s1200 = scalar_lea.vmem [#allocation16], %s1199
        %p1201 = pneg %p298
        %p1202 = pneg %p295
        %s1203 = sand.u32 %s41, 1
        %s1204 = scalar_lea.sflag [#allocation4], %s1203
        %s1205 = sand.u32 %s311, 1
        %s1206 = smul.addr %s1205, 16
        %s1207 = scalar_lea.vmem [#allocation17], %s1206
        %p1208 = pneg %p324
        %p1209 = pneg %p321
        %s1210 = sand.u32 %s41, 1
        %s1211 = scalar_lea.sflag [#allocation7], %s1210
        %s1212 = sand.u32 %s337, 1
        %s1213 = smul.addr %s1212, 32
        %s1214 = scalar_lea.vmem [#allocation18], %s1213
        %p1215 = pneg %p350
        %p1216 = pneg %p347
        %s1217 = sand.u32 %s41, 1
        %s1218 = scalar_lea.sflag [#allocation4], %s1217
        %s1219 = sand.u32 %s363, 1
        %s1220 = smul.addr %s1219, 16
        %s1221 = scalar_lea.vmem [#allocation19], %s1220
        %p1222 = pneg %p376
        %p1223 = pneg %p373
        %s1224 = sand.u32 %s41, 1
        %s1225 = scalar_lea.sflag [#allocation7], %s1224
        %s1226 = sand.u32 %s389, 1
        %s1227 = scalar_lea.vmem [#allocation20], %s1226
        %p1228 = pneg %p402
        %p1229 = pneg %p399
        %s1230 = sand.u32 %s41, 1
        %s1231 = scalar_lea.sflag [#allocation4], %s1230
        %s1232 = sand.u32 %s415, 1
        %s1233 = scalar_lea.vmem [#allocation21], %s1232
        %p1234 = pneg %p428
        %p1235 = pneg %p425
        %s1236 = sand.u32 %s41, 1
        %s1237 = scalar_lea.sflag [#allocation7], %s1236
        %s1238 = sand.u32 %s441, 1
        %s1239 = scalar_lea.vmem [#allocation22], %s1238
        %p1240 = pneg %p454
        %p1241 = pneg %p451
        %s1242 = sand.u32 %s41, 1
        %s1243 = scalar_lea.sflag [#allocation4], %s1242
        %s1244 = sand.u32 %s467, 1
        %s1245 = smul.addr %s1244, 16
        %s1246 = scalar_lea.vmem [#allocation23], %s1245
        %p1247 = pneg %p480
        %p1248 = pneg %p477
        %s1249 = sand.u32 %s41, 1
        %s1250 = scalar_lea.sflag [#allocation7], %s1249
        %s1251 = sand.u32 %s493, 1
        %s1252 = scalar_lea.vmem [#allocation24], %s1251
        %p1253 = pneg %p506
        %p1254 = pneg %p503
        %s1255 = sand.u32 %s41, 1
        %s1256 = scalar_lea.sflag [#allocation4], %s1255
        %s1257 = sand.u32 %s519, 1
        %s1258 = smul.addr %s1257, 32
        %s1259 = scalar_lea.vmem [#allocation25], %s1258
        %p1260 = pneg %p532
        %p1261 = pneg %p529
        %s1262 = sand.u32 %s41, 1
        %s1263 = scalar_lea.sflag [#allocation7], %s1262
        %s1264 = sand.u32 %s545, 1
        %s1265 = scalar_lea.vmem [#allocation26], %s1264
        %p1266 = pneg %p558
        %p1267 = pneg %p555
        %p1268 = pneg %p584
        %p1269 = pneg %p581
        %s1270 = sand.u32 %s571, 1
        %s1271 = scalar_lea.sflag [#allocation5], %s1270
        %s1272 = sand.u32 %s571, 1
        %s1273 = smul.addr %s1272, 16
        %s1274 = scalar_lea.vmem [#allocation27], %s1273
        %p1276 = scmp.eq.s32.totalorder %s46, 0
        // Predicated region
        $region181: #{tpu_custom_call.1} parent=99 // pred_check
          %p1277 = pneg %p1276
        $region182: #{tpu_custom_call.1} parent=99 // pred_check_branch
          %1279 = sbr.rel (%p1277) target = $region184
        $region183: #{tpu_custom_call.1} parent=99 // pred_region
          %v1280 = vld [vmem:[%s986] sm:$0xff]
          %v1281 = vld [vmem:[%s986 + $0x8] sm:$0x1]
          %v1282 = vld [vmem:[#allocation8] sm:$0x1]
          %v1283 = vld [vmem:[#allocation9] sm:$0x1]
          %vm1284 = vcmask 261120
          %v1285 = vsel %vm1284, %v1280, 0.0
          %1286 = vadd.xlane.f32.xlu0 %v1285
          %v1287 = vpop.xlane.xlu0 %1286
          %vm1288 = vcmask 253952
          %v1289 = vsel %vm1288, %v1281, 0.0
          %1290 = vadd.xlane.f32.xlu0 %v1289
          %v1291 = vpop.xlane.xlu0 %1290
          %v1292 = vrcp.pop 32.0
          %v1293 = vmul.f32 %v1287, %v1292
          %v1294 = vmul.f32 %v1291, %v1292
          %v1295 = vsub.f32 %v1280, %v1293
          %v1296 = vsub.f32 %v1281, %v1294
          %v1297 = vmul.f32 %v1295, %v1295
          %v1298 = vmul.f32 %v1296, %v1296
          %v1299 = vsel %vm1284, %v1297, 0.0
          %1300 = vadd.xlane.f32.xlu0 %v1299
          %v1301 = vpop.xlane.xlu0 %1300
          %v1302 = vsel %vm1288, %v1298, 0.0
          %1303 = vadd.xlane.f32.xlu0 %v1302
          %v1304 = vpop.xlane.xlu0 %1303
          %v1305 = vmul.f32 %v1301, %v1292
          %v1306 = vmul.f32 %v1304, %v1292
          %v1307 = vadd.f32 %v1305, 1e-05
          %v1308 = vadd.f32 %v1306, 1e-05
          %v1309 = vrsqrt.pop %v1307
          %v1310 = vrsqrt.pop %v1308
          %v1311 = vmul.f32 %v1295, %v1309
          %v1312 = vmul.f32 %v1296, %v1310
          %v1314 = vlaneseq
          %v1315 = vshrl.u32 %v1314, 7
          %v1316 = vsub.s32 0, %v1315
          %v1317 = vrot.slane %v1282, %v1316
          %v1319 = vmul.f32 %v1311, %v1317
          %v1320 = vmul.f32 %v1312, %v1317
          %v1322 = vlaneseq
          %v1323 = vshrl.u32 %v1322, 7
          %v1324 = vsub.s32 0, %v1323
          %v1325 = vrot.slane %v1283, %v1324
          %v1327 = vadd.f32 %v1319, %v1325
          %v1328 = vadd.f32 %v1320, %v1325
          %1329 = vst.msk [vmem:[#allocation2] sm:$0xff] %vm1284, %v1327
          %1330 = vst.msk [vmem:[#allocation2 + $0x8] sm:$0x1] %vm1288, %v1328
        $region184: #{tpu_custom_call.1} parent=99 // pred_fallthru
          _
        %v1331 = vld [vmem:[#allocation2] sm:$0xff]
        %v1332 = vld [vmem:[#allocation2 + $0x8] sm:$0x1]
        %v1333 = vld [vmem:[%s1011] sm:$0x1]
        %v1334 = vld [vmem:[%s1019] sm:$0x1]
        %vm1335 = vcmask 261120
        %v1336 = vsel %vm1335, %v1331, 0.0
        %1337 = vadd.xlane.f32.xlu0 %v1336
        %v1338 = vpop.xlane.xlu0 %1337
        %vm1339 = vcmask 253952
        %v1340 = vsel %vm1339, %v1332, 0.0
        %1341 = vadd.xlane.f32.xlu0 %v1340
        %v1342 = vpop.xlane.xlu0 %1341
        %v1343 = vrcp.pop 32.0
        %v1344 = vmul.f32 %v1338, %v1343
        %v1345 = vmul.f32 %v1342, %v1343
        %v1346 = vsub.f32 %v1331, %v1344
        %v1347 = vsub.f32 %v1332, %v1345
        %v1348 = vmul.f32 %v1346, %v1346
        %v1349 = vmul.f32 %v1347, %v1347
        %v1350 = vsel %vm1335, %v1348, 0.0
        %1351 = vadd.xlane.f32.xlu0 %v1350
        %v1352 = vpop.xlane.xlu0 %1351
        %v1353 = vsel %vm1339, %v1349, 0.0
        %1354 = vadd.xlane.f32.xlu0 %v1353
        %v1355 = vpop.xlane.xlu0 %1354
        %v1356 = vmul.f32 %v1352, %v1343
        %v1357 = vmul.f32 %v1355, %v1343
        %v1358 = vadd.f32 %v1356, 1e-05
        %v1359 = vadd.f32 %v1357, 1e-05
        %v1360 = vrsqrt.pop %v1358
        %v1361 = vrsqrt.pop %v1359
        %v1362 = vmul.f32 %v1346, %v1360
        %v1363 = vmul.f32 %v1347, %v1361
        %v1365 = vlaneseq
        %v1366 = vshrl.u32 %v1365, 7
        %v1367 = vsub.s32 0, %v1366
        %v1368 = vrot.slane %v1333, %v1367
        %v1370 = vmul.f32 %v1362, %v1368
        %v1371 = vmul.f32 %v1363, %v1368
        %v1373 = vlaneseq
        %v1374 = vshrl.u32 %v1373, 7
        %v1375 = vsub.s32 0, %v1374
        %v1376 = vrot.slane %v1334, %v1375
        %v1378 = vadd.f32 %v1370, %v1376
        %v1379 = vadd.f32 %v1371, %v1376
        %v1380 = vpack.c.bf16 %v1379, %v1378
        %v1381 = vld [vmem:[%s1028] sm:$0xf]
        %v1382 = vld [vmem:[%s1028 + $0x4] sm:$0xf]
        %v1383 = vld [vmem:[%s1028 + $0x8] sm:$0xf]
        %v1384 = vld [vmem:[%s1028 + $0xc] sm:$0xf]
        %v1385 = vld [vmem:[%s1037] sm:$0xff]
        %v1386 = vld [vmem:[%s1037 + $0x8] sm:$0xff]
        %v1387 = vld [vmem:[%s1037 + $0x10] sm:$0xff]
        %v1388 = vld [vmem:[%s1037 + $0x18] sm:$0xff]
        %1390 = vset.pattern.permute.xlu0 0
        %1391 = vperm.xlu0 %1390, %v1385
        %v1392 = vpop.permute.xlu0 %1391
        %1395 = vset.pattern.permute.xlu0 0
        %1396 = vperm.xlu0 %1395, %v1386
        %v1397 = vpop.permute.xlu0 %1396
        %1400 = vset.pattern.permute.xlu0 0
        %1401 = vperm.xlu0 %1400, %v1387
        %v1402 = vpop.permute.xlu0 %1401
        %1405 = vset.pattern.permute.xlu0 0
        %1406 = vperm.xlu0 %1405, %v1388
        %v1407 = vpop.permute.xlu0 %1406
        %v1413 = vunpack.c.l.b16 %v1381
        %v1414 = vunpack.c.l.b16 %v1382
        %v1415 = vunpack.c.l.b16 %v1383
        %v1416 = vunpack.c.l.b16 %v1384
        %v1417 = vpack.c.b16 %v1414, %v1413
        %v1418 = vpack.c.b16 %v1416, %v1415
        %v1420 = vsel %vm1335, %v1417, 0
        %v1423 = vsel %vm1335, %v1418, 0
        %v1426 = vsel %vm1335, %v1380, 0
        %1428 = vmatprep.subr.bf16.mxu0 0
        %1429 = vmatpush1.bf16.xpose.msra.mxu0 %v1426
        %1430 = vmatprep.subr.bf16.mxu0 0
        %1431 = vmatpush1.bf16.xpose.msra.mxu0 0
        %1432 = vmatprep.subr.bf16.mxu0 0
        %1433 = vmatpush1.bf16.xpose.msra.mxu0 0
        %1434 = vmatprep.subr.bf16.mxu0 0
        %1435 = vmatpush1.bf16.xpose.msra.mxu0 0
        %1436 = vmatprep.subr.bf16.mxu0 0
        %1437 = vmatpush1.bf16.xpose.msra.mxu0 0
        %1438 = vmatprep.subr.bf16.mxu0 0
        %1439 = vmatpush1.bf16.xpose.msra.mxu0 0
        %1440 = vmatprep.subr.bf16.mxu0 0
        %1441 = vmatpush1.bf16.xpose.msra.mxu0 0
        %1442 = vmatprep.subr.bf16.mxu0 0
        %1443 = vmatpush1.bf16.xpose.msra.mxu0 0
        %1444 = vmatprep.subr.bf16.mxu0 0
        %1445 = vmatpush1.bf16.xpose.msra.mxu0 0
        %1446 = vmatprep.subr.bf16.mxu0 0
        %1447 = vmatpush1.bf16.xpose.msra.mxu0 0
        %1448 = vmatprep.subr.bf16.mxu0 0
        %1449 = vmatpush1.bf16.xpose.msra.mxu0 0
        %1450 = vmatprep.subr.bf16.mxu0 0
        %1451 = vmatpush1.bf16.xpose.msra.mxu0 0
        %1452 = vmatprep.subr.bf16.mxu0 0
        %1453 = vmatpush1.bf16.xpose.msra.mxu0 0
        %1454 = vmatprep.subr.bf16.mxu0 0
        %1455 = vmatpush1.bf16.xpose.msra.mxu0 0
        %1456 = vmatprep.subr.bf16.mxu0 0
        %1457 = vmatpush1.bf16.xpose.msra.mxu0 0
        %1458 = vmatprep.subr.bf16.mxu0 0
        %1459 = vmatpush1.bf16.xpose.msra.mxu0 0
        %1460 = vmatprep.mubr.bf16.mxu0 0
        %1461 = vmatmul.mubr.bf16.gmra.mrb[0].mxu0 %v1420
        %v1462 = vpop.f32.mrb[0].mxu0
        %v1463 = vadd.f32 %v1392, %v1462
        %v1464 = vpop.f32.mrb[0].mxu0
        %v1465 = vpop.f32.mrb[0].mxu0
        %v1466 = vadd.f32 %v1397, %v1465
        %v1467 = vpop.f32.mrb[0].mxu0
        %1468 = vmatprep.mubr.bf16.mxu0 0
        %1469 = vmatmul.mubr.bf16.gmra.mrb[0].mxu0 %v1423
        %v1470 = vpop.f32.mrb[0].mxu0
        %v1471 = vadd.f32 %v1402, %v1470
        %v1472 = vpop.f32.mrb[0].mxu0
        %v1473 = vpop.f32.mrb[0].mxu0
        %v1474 = vadd.f32 %v1407, %v1473
        %v1475 = vpop.f32.mrb[0].mxu0
        %1476 = vdwg.mxu0
        %v1477 = vld [vmem:[%s1046] sm:$0xf]
        %v1478 = vld [vmem:[%s1046 + $0x4] sm:$0xf]
        %v1479 = vld [vmem:[%s1046 + $0x8] sm:$0xf]
        %v1480 = vld [vmem:[%s1046 + $0xc] sm:$0xf]
        %v1481 = vld [vmem:[%s1055] sm:$0xff]
        %v1482 = vld [vmem:[%s1055 + $0x8] sm:$0xff]
        %v1483 = vld [vmem:[%s1055 + $0x10] sm:$0xff]
        %v1484 = vld [vmem:[%s1055 + $0x18] sm:$0xff]
        %1486 = vset.pattern.permute.xlu0 0
        %1487 = vperm.xlu0 %1486, %v1481
        %v1488 = vpop.permute.xlu0 %1487
        %1491 = vset.pattern.permute.xlu0 0
        %1492 = vperm.xlu0 %1491, %v1482
        %v1493 = vpop.permute.xlu0 %1492
        %1496 = vset.pattern.permute.xlu0 0
        %1497 = vperm.xlu0 %1496, %v1483
        %v1498 = vpop.permute.xlu0 %1497
        %1501 = vset.pattern.permute.xlu0 0
        %1502 = vperm.xlu0 %1501, %v1484
        %v1503 = vpop.permute.xlu0 %1502
        %v1509 = vunpack.c.l.b16 %v1477
        %v1510 = vunpack.c.l.b16 %v1478
        %v1511 = vunpack.c.l.b16 %v1479
        %v1512 = vunpack.c.l.b16 %v1480
        %v1513 = vpack.c.b16 %v1510, %v1509
        %v1514 = vpack.c.b16 %v1512, %v1511
        %v1516 = vsel %vm1335, %v1513, 0
        %v1519 = vsel %vm1335, %v1514, 0
        %1521 = vmatprep.subr.bf16.mxu0 0
        %1522 = vmatpush1.bf16.xpose.msra.mxu0 %v1426
        %1523 = vmatprep.subr.bf16.mxu0 0
        %1524 = vmatpush1.bf16.xpose.msra.mxu0 0
        %1525 = vmatprep.subr.bf16.mxu0 0
        %1526 = vmatpush1.bf16.xpose.msra.mxu0 0
        %1527 = vmatprep.subr.bf16.mxu0 0
        %1528 = vmatpush1.bf16.xpose.msra.mxu0 0
        %1529 = vmatprep.subr.bf16.mxu0 0
        %1530 = vmatpush1.bf16.xpose.msra.mxu0 0
        %1531 = vmatprep.subr.bf16.mxu0 0
        %1532 = vmatpush1.bf16.xpose.msra.mxu0 0
        %1533 = vmatprep.subr.bf16.mxu0 0
        %1534 = vmatpush1.bf16.xpose.msra.mxu0 0
        %1535 = vmatprep.subr.bf16.mxu0 0
        %1536 = vmatpush1.bf16.xpose.msra.mxu0 0
        %1537 = vmatprep.subr.bf16.mxu0 0
        %1538 = vmatpush1.bf16.xpose.msra.mxu0 0
        %1539 = vmatprep.subr.bf16.mxu0 0
        %1540 = vmatpush1.bf16.xpose.msra.mxu0 0
        %1541 = vmatprep.subr.bf16.mxu0 0
        %1542 = vmatpush1.bf16.xpose.msra.mxu0 0
        %1543 = vmatprep.subr.bf16.mxu0 0
        %1544 = vmatpush1.bf16.xpose.msra.mxu0 0
        %1545 = vmatprep.subr.bf16.mxu0 0
        %1546 = vmatpush1.bf16.xpose.msra.mxu0 0
        %1547 = vmatprep.subr.bf16.mxu0 0
        %1548 = vmatpush1.bf16.xpose.msra.mxu0 0
        %1549 = vmatprep.subr.bf16.mxu0 0
        %1550 = vmatpush1.bf16.xpose.msra.mxu0 0
        %1551 = vmatprep.subr.bf16.mxu0 0
        %1552 = vmatpush1.bf16.xpose.msra.mxu0 0
        %1553 = vmatprep.mubr.bf16.mxu0 0
        %1554 = vmatmul.mubr.bf16.gmra.mrb[0].mxu0 %v1516
        %v1555 = vpop.f32.mrb[0].mxu0
        %v1556 = vadd.f32 %v1488, %v1555
        %v1557 = vpop.f32.mrb[0].mxu0
        %v1558 = vpop.f32.mrb[0].mxu0
        %v1559 = vadd.f32 %v1493, %v1558
        %v1560 = vpop.f32.mrb[0].mxu0
        %1561 = vmatprep.mubr.bf16.mxu0 0
        %1562 = vmatmul.mubr.bf16.gmra.mrb[0].mxu0 %v1519
        %v1563 = vpop.f32.mrb[0].mxu0
        %v1564 = vadd.f32 %v1498, %v1563
        %v1565 = vpop.f32.mrb[0].mxu0
        %v1566 = vpop.f32.mrb[0].mxu0
        %v1567 = vadd.f32 %v1503, %v1566
        %v1568 = vpop.f32.mrb[0].mxu0
        %1569 = vdwg.mxu0
        %v1570 = vld [vmem:[%s1064] sm:$0xf]
        %v1571 = vld [vmem:[%s1064 + $0x4] sm:$0xf]
        %v1572 = vld [vmem:[%s1064 + $0x8] sm:$0xf]
        %v1573 = vld [vmem:[%s1064 + $0xc] sm:$0xf]
        %v1574 = vld [vmem:[%s1073] sm:$0xff]
        %v1575 = vld [vmem:[%s1073 + $0x8] sm:$0xff]
        %v1576 = vld [vmem:[%s1073 + $0x10] sm:$0xff]
        %v1577 = vld [vmem:[%s1073 + $0x18] sm:$0xff]
        %1579 = vset.pattern.permute.xlu0 0
        %1580 = vperm.xlu0 %1579, %v1574
        %v1581 = vpop.permute.xlu0 %1580
        %1584 = vset.pattern.permute.xlu0 0
        %1585 = vperm.xlu0 %1584, %v1575
        %v1586 = vpop.permute.xlu0 %1585
        %1589 = vset.pattern.permute.xlu0 0
        %1590 = vperm.xlu0 %1589, %v1576
        %v1591 = vpop.permute.xlu0 %1590
        %1594 = vset.pattern.permute.xlu0 0
        %1595 = vperm.xlu0 %1594, %v1577
        %v1596 = vpop.permute.xlu0 %1595
        %v1602 = vunpack.c.l.b16 %v1570
        %v1603 = vunpack.c.l.b16 %v1571
        %v1604 = vunpack.c.l.b16 %v1572
        %v1605 = vunpack.c.l.b16 %v1573
        %v1606 = vpack.c.b16 %v1603, %v1602
        %v1607 = vpack.c.b16 %v1605, %v1604
        %v1609 = vsel %vm1335, %v1606, 0
        %v1612 = vsel %vm1335, %v1607, 0
        %1614 = vmatprep.subr.bf16.mxu0 0
        %1615 = vmatpush1.bf16.xpose.msra.mxu0 %v1426
        %1616 = vmatprep.subr.bf16.mxu0 0
        %1617 = vmatpush1.bf16.xpose.msra.mxu0 0
        %1618 = vmatprep.subr.bf16.mxu0 0
        %1619 = vmatpush1.bf16.xpose.msra.mxu0 0
        %1620 = vmatprep.subr.bf16.mxu0 0
        %1621 = vmatpush1.bf16.xpose.msra.mxu0 0
        %1622 = vmatprep.subr.bf16.mxu0 0
        %1623 = vmatpush1.bf16.xpose.msra.mxu0 0
        %1624 = vmatprep.subr.bf16.mxu0 0
        %1625 = vmatpush1.bf16.xpose.msra.mxu0 0
        %1626 = vmatprep.subr.bf16.mxu0 0
        %1627 = vmatpush1.bf16.xpose.msra.mxu0 0
        %1628 = vmatprep.subr.bf16.mxu0 0
        %1629 = vmatpush1.bf16.xpose.msra.mxu0 0
        %1630 = vmatprep.subr.bf16.mxu0 0
        %1631 = vmatpush1.bf16.xpose.msra.mxu0 0
        %1632 = vmatprep.subr.bf16.mxu0 0
        %1633 = vmatpush1.bf16.xpose.msra.mxu0 0
        %1634 = vmatprep.subr.bf16.mxu0 0
        %1635 = vmatpush1.bf16.xpose.msra.mxu0 0
        %1636 = vmatprep.subr.bf16.mxu0 0
        %1637 = vmatpush1.bf16.xpose.msra.mxu0 0
        %1638 = vmatprep.subr.bf16.mxu0 0
        %1639 = vmatpush1.bf16.xpose.msra.mxu0 0
        %1640 = vmatprep.subr.bf16.mxu0 0
        %1641 = vmatpush1.bf16.xpose.msra.mxu0 0
        %1642 = vmatprep.subr.bf16.mxu0 0
        %1643 = vmatpush1.bf16.xpose.msra.mxu0 0
        %1644 = vmatprep.subr.bf16.mxu0 0
        %1645 = vmatpush1.bf16.xpose.msra.mxu0 0
        %1646 = vmatprep.mubr.bf16.mxu0 0
        %1647 = vmatmul.mubr.bf16.gmra.mrb[0].mxu0 %v1609
        %v1648 = vpop.f32.mrb[0].mxu0
        %v1649 = vadd.f32 %v1581, %v1648
        %v1650 = vpop.f32.mrb[0].mxu0
        %v1651 = vpop.f32.mrb[0].mxu0
        %v1652 = vadd.f32 %v1586, %v1651
        %v1653 = vpop.f32.mrb[0].mxu0
        %1654 = vmatprep.mubr.bf16.mxu0 0
        %1655 = vmatmul.mubr.bf16.gmra.mrb[0].mxu0 %v1612
        %v1656 = vpop.f32.mrb[0].mxu0
        %v1657 = vadd.f32 %v1591, %v1656
        %v1658 = vpop.f32.mrb[0].mxu0
        %v1659 = vpop.f32.mrb[0].mxu0
        %v1660 = vadd.f32 %v1596, %v1659
        %v1661 = vpop.f32.mrb[0].mxu0
        %1662 = vdwg.mxu0
        %v1663 = vmul.f32 %v1463, 0.35355338
        %v1664 = vmul.f32 %v1466, 0.35355338
        %v1665 = vmul.f32 %v1471, 0.35355338
        %v1666 = vmul.f32 %v1474, 0.35355338
        %1667 = vxpose.xlu0.b32.start [1/16] %v1663, 128
        %1668 = vxpose.xlu0.b32.cont [2/16] 0.0, 128
        %1669 = vxpose.xlu0.b32.cont [3/16] 0.0, 128
        %1670 = vxpose.xlu0.b32.cont [4/16] 0.0, 128
        %1671 = vxpose.xlu0.b32.cont [5/16] 0.0, 128
        %1672 = vxpose.xlu0.b32.cont [6/16] 0.0, 128
        %1673 = vxpose.xlu0.b32.cont [7/16] 0.0, 128
        %1674 = vxpose.xlu0.b32.cont [8/16] 0.0, 128
        %1675 = vxpose.xlu0.b32.cont [9/16] 0.0, 128
        %1676 = vxpose.xlu0.b32.cont [10/16] 0.0, 128
        %1677 = vxpose.xlu0.b32.cont [11/16] 0.0, 128
        %1678 = vxpose.xlu0.b32.cont [12/16] 0.0, 128
        %1679 = vxpose.xlu0.b32.cont [13/16] 0.0, 128
        %1680 = vxpose.xlu0.b32.cont [14/16] 0.0, 128
        %1681 = vxpose.xlu0.b32.cont [15/16] 0.0, 128
        %1682 = vxpose.xlu0.b32.end [16/16] 0.0, 128
        %v1683 = vpop.trf.xlu0
        %v1684 = vpop.trf.xlu0
        %v1685 = vpop.trf.xlu0
        %v1686 = vpop.trf.xlu0
        %v1687 = vpop.trf.xlu0
        %v1688 = vpop.trf.xlu0
        %v1689 = vpop.trf.xlu0
        %v1690 = vpop.trf.xlu0
        %v1691 = vpop.trf.xlu0
        %v1692 = vpop.trf.xlu0
        %v1693 = vpop.trf.xlu0
        %v1694 = vpop.trf.xlu0
        %v1695 = vpop.trf.xlu0
        %v1696 = vpop.trf.xlu0
        %v1697 = vpop.trf.xlu0
        %v1698 = vpop.trf.xlu0
        %1699 = vxpose.xlu0.b32.start [1/16] %v1664, 128
        %1700 = vxpose.xlu0.b32.cont [2/16] 0.0, 128
        %1701 = vxpose.xlu0.b32.cont [3/16] 0.0, 128
        %1702 = vxpose.xlu0.b32.cont [4/16] 0.0, 128
        %1703 = vxpose.xlu0.b32.cont [5/16] 0.0, 128
        %1704 = vxpose.xlu0.b32.cont [6/16] 0.0, 128
        %1705 = vxpose.xlu0.b32.cont [7/16] 0.0, 128
        %1706 = vxpose.xlu0.b32.cont [8/16] 0.0, 128
        %1707 = vxpose.xlu0.b32.cont [9/16] 0.0, 128
        %1708 = vxpose.xlu0.b32.cont [10/16] 0.0, 128
        %1709 = vxpose.xlu0.b32.cont [11/16] 0.0, 128
        %1710 = vxpose.xlu0.b32.cont [12/16] 0.0, 128
        %1711 = vxpose.xlu0.b32.cont [13/16] 0.0, 128
        %1712 = vxpose.xlu0.b32.cont [14/16] 0.0, 128
        %1713 = vxpose.xlu0.b32.cont [15/16] 0.0, 128
        %1714 = vxpose.xlu0.b32.end [16/16] 0.0, 128
        %v1715 = vpop.trf.xlu0
        %v1716 = vpop.trf.xlu0
        %v1717 = vpop.trf.xlu0
        %v1718 = vpop.trf.xlu0
        %v1719 = vpop.trf.xlu0
        %v1720 = vpop.trf.xlu0
        %v1721 = vpop.trf.xlu0
        %v1722 = vpop.trf.xlu0
        %v1723 = vpop.trf.xlu0
        %v1724 = vpop.trf.xlu0
        %v1725 = vpop.trf.xlu0
        %v1726 = vpop.trf.xlu0
        %v1727 = vpop.trf.xlu0
        %v1728 = vpop.trf.xlu0
        %v1729 = vpop.trf.xlu0
        %v1730 = vpop.trf.xlu0
        %1731 = vxpose.xlu0.b32.start [1/16] %v1665, 128
        %1732 = vxpose.xlu0.b32.cont [2/16] 0.0, 128
        %1733 = vxpose.xlu0.b32.cont [3/16] 0.0, 128
        %1734 = vxpose.xlu0.b32.cont [4/16] 0.0, 128
        %1735 = vxpose.xlu0.b32.cont [5/16] 0.0, 128
        %1736 = vxpose.xlu0.b32.cont [6/16] 0.0, 128
        %1737 = vxpose.xlu0.b32.cont [7/16] 0.0, 128
        %1738 = vxpose.xlu0.b32.cont [8/16] 0.0, 128
        %1739 = vxpose.xlu0.b32.cont [9/16] 0.0, 128
        %1740 = vxpose.xlu0.b32.cont [10/16] 0.0, 128
        %1741 = vxpose.xlu0.b32.cont [11/16] 0.0, 128
        %1742 = vxpose.xlu0.b32.cont [12/16] 0.0, 128
        %1743 = vxpose.xlu0.b32.cont [13/16] 0.0, 128
        %1744 = vxpose.xlu0.b32.cont [14/16] 0.0, 128
        %1745 = vxpose.xlu0.b32.cont [15/16] 0.0, 128
        %1746 = vxpose.xlu0.b32.end [16/16] 0.0, 128
        %v1747 = vpop.trf.xlu0
        %v1748 = vpop.trf.xlu0
        %v1749 = vpop.trf.xlu0
        %v1750 = vpop.trf.xlu0
        %v1751 = vpop.trf.xlu0
        %v1752 = vpop.trf.xlu0
        %v1753 = vpop.trf.xlu0
        %v1754 = vpop.trf.xlu0
        %v1755 = vpop.trf.xlu0
        %v1756 = vpop.trf.xlu0
        %v1757 = vpop.trf.xlu0
        %v1758 = vpop.trf.xlu0
        %v1759 = vpop.trf.xlu0
        %v1760 = vpop.trf.xlu0
        %v1761 = vpop.trf.xlu0
        %v1762 = vpop.trf.xlu0
        %1763 = vxpose.xlu0.b32.start [1/16] %v1666, 128
        %1764 = vxpose.xlu0.b32.cont [2/16] 0.0, 128
        %1765 = vxpose.xlu0.b32.cont [3/16] 0.0, 128
        %1766 = vxpose.xlu0.b32.cont [4/16] 0.0, 128
        %1767 = vxpose.xlu0.b32.cont [5/16] 0.0, 128
        %1768 = vxpose.xlu0.b32.cont [6/16] 0.0, 128
        %1769 = vxpose.xlu0.b32.cont [7/16] 0.0, 128
        %1770 = vxpose.xlu0.b32.cont [8/16] 0.0, 128
        %1771 = vxpose.xlu0.b32.cont [9/16] 0.0, 128
        %1772 = vxpose.xlu0.b32.cont [10/16] 0.0, 128
        %1773 = vxpose.xlu0.b32.cont [11/16] 0.0, 128
        %1774 = vxpose.xlu0.b32.cont [12/16] 0.0, 128
        %1775 = vxpose.xlu0.b32.cont [13/16] 0.0, 128
        %1776 = vxpose.xlu0.b32.cont [14/16] 0.0, 128
        %1777 = vxpose.xlu0.b32.cont [15/16] 0.0, 128
        %1778 = vxpose.xlu0.b32.end [16/16] 0.0, 128
        %v1779 = vpop.trf.xlu0
        %v1780 = vpop.trf.xlu0
        %v1781 = vpop.trf.xlu0
        %v1782 = vpop.trf.xlu0
        %v1783 = vpop.trf.xlu0
        %v1784 = vpop.trf.xlu0
        %v1785 = vpop.trf.xlu0
        %v1786 = vpop.trf.xlu0
        %v1787 = vpop.trf.xlu0
        %v1788 = vpop.trf.xlu0
        %v1789 = vpop.trf.xlu0
        %v1790 = vpop.trf.xlu0
        %v1791 = vpop.trf.xlu0
        %v1792 = vpop.trf.xlu0
        %v1793 = vpop.trf.xlu0
        %v1794 = vpop.trf.xlu0
        %v1795 = vpack.c.bf16 %v1684, %v1683
        %v1796 = vpack.c.bf16 %v1716, %v1715
        %v1797 = vpack.c.bf16 %v1748, %v1747
        %v1798 = vpack.c.bf16 %v1780, %v1779
        %v1799 = vpack.c.bf16 %v1556, %v1556
        %v1800 = vpack.c.bf16 %v1559, %v1559
        %v1801 = vpack.c.bf16 %v1564, %v1564
        %v1802 = vpack.c.bf16 %v1567, %v1567
        %v1803 = vpack.c.bf16 %v1649, %v1649
        %v1804 = vpack.c.bf16 %v1652, %v1652
        %v1805 = vpack.c.bf16 %v1657, %v1657
        %v1806 = vpack.c.bf16 %v1660, %v1660
        %v1807 = vld [vmem:[%s995] sm:$0xf]
        %v1808 = vld [vmem:[%s995 + $0x4] sm:$0x1]
        %v1809 = vld [vmem:[%s995 + $0x8] sm:$0xf]
        %v1810 = vld [vmem:[%s995 + $0xc] sm:$0x1]
        %v1811 = vld [vmem:[%s995 + $0x10] sm:$0xf]
        %v1812 = vld [vmem:[%s995 + $0x14] sm:$0x1]
        %v1813 = vld [vmem:[%s995 + $0x18] sm:$0xf]
        %v1814 = vld [vmem:[%s995 + $0x1c] sm:$0x1]
        %v1815 = vunpack.c.l.bf16 %v1807
        %v1816 = vunpack.c.l.bf16 %v1808
        %v1817 = vunpack.c.l.bf16 %v1809
        %v1818 = vunpack.c.l.bf16 %v1810
        %v1819 = vunpack.c.l.bf16 %v1811
        %v1820 = vunpack.c.l.bf16 %v1812
        %v1821 = vunpack.c.l.bf16 %v1813
        %v1822 = vunpack.c.l.bf16 %v1814
        %vm1823 = vcmask 64512
        %v1825 = vsel %vm1823, %v1795, 0
        %vm1827 = vcmask 1043456
        %v1829 = vsel %vm1827, %v1799, 0
        %1831 = vmatprep.subr.bf16.mxu0 0
        %1832 = vmatpush1.bf16.msra.mxu0 %v1829
        %1833 = vmatprep.subr.bf16.mxu0 0
        %1834 = vmatpush1.bf16.msra.mxu0 0
        %1835 = vmatprep.subr.bf16.mxu0 0
        %1836 = vmatpush1.bf16.msra.mxu0 0
        %1837 = vmatprep.subr.bf16.mxu0 0
        %1838 = vmatpush1.bf16.msra.mxu0 0
        %1839 = vmatprep.subr.bf16.mxu0 0
        %1840 = vmatpush1.bf16.msra.mxu0 0
        %1841 = vmatprep.subr.bf16.mxu0 0
        %1842 = vmatpush1.bf16.msra.mxu0 0
        %1843 = vmatprep.subr.bf16.mxu0 0
        %1844 = vmatpush1.bf16.msra.mxu0 0
        %1845 = vmatprep.subr.bf16.mxu0 0
        %1846 = vmatpush1.bf16.msra.mxu0 0
        %1847 = vmatprep.subr.bf16.mxu0 0
        %1848 = vmatpush1.bf16.msra.mxu0 0
        %1849 = vmatprep.subr.bf16.mxu0 0
        %1850 = vmatpush1.bf16.msra.mxu0 0
        %1851 = vmatprep.subr.bf16.mxu0 0
        %1852 = vmatpush1.bf16.msra.mxu0 0
        %1853 = vmatprep.subr.bf16.mxu0 0
        %1854 = vmatpush1.bf16.msra.mxu0 0
        %1855 = vmatprep.subr.bf16.mxu0 0
        %1856 = vmatpush1.bf16.msra.mxu0 0
        %1857 = vmatprep.subr.bf16.mxu0 0
        %1858 = vmatpush1.bf16.msra.mxu0 0
        %1859 = vmatprep.subr.bf16.mxu0 0
        %1860 = vmatpush1.bf16.msra.mxu0 0
        %1861 = vmatprep.subr.bf16.mxu0 0
        %1862 = vmatpush1.bf16.msra.mxu0 0
        %1863 = vmatprep.mubr.bf16.mxu0 0
        %1864 = vmatmul.mubr.bf16.gmra.mrb[0].mxu0 %v1825
        %v1865 = vpop.f32.mrb[0].mxu0
        %v1866 = vadd.f32 %v1815, %v1865
        %v1867 = vpop.f32.mrb[0].mxu0
        %v1868 = vpop.f32.mrb[0].mxu0
        %v1869 = vadd.f32 %v1816, %v1868
        %v1870 = vpop.f32.mrb[0].mxu0
        %1871 = vdwg.mxu0
        %v1873 = vsel %vm1823, %v1796, 0
        %v1876 = vsel %vm1827, %v1800, 0
        %1878 = vmatprep.subr.bf16.mxu0 0
        %1879 = vmatpush1.bf16.msra.mxu0 %v1876
        %1880 = vmatprep.subr.bf16.mxu0 0
        %1881 = vmatpush1.bf16.msra.mxu0 0
        %1882 = vmatprep.subr.bf16.mxu0 0
        %1883 = vmatpush1.bf16.msra.mxu0 0
        %1884 = vmatprep.subr.bf16.mxu0 0
        %1885 = vmatpush1.bf16.msra.mxu0 0
        %1886 = vmatprep.subr.bf16.mxu0 0
        %1887 = vmatpush1.bf16.msra.mxu0 0
        %1888 = vmatprep.subr.bf16.mxu0 0
        %1889 = vmatpush1.bf16.msra.mxu0 0
        %1890 = vmatprep.subr.bf16.mxu0 0
        %1891 = vmatpush1.bf16.msra.mxu0 0
        %1892 = vmatprep.subr.bf16.mxu0 0
        %1893 = vmatpush1.bf16.msra.mxu0 0
        %1894 = vmatprep.subr.bf16.mxu0 0
        %1895 = vmatpush1.bf16.msra.mxu0 0
        %1896 = vmatprep.subr.bf16.mxu0 0
        %1897 = vmatpush1.bf16.msra.mxu0 0
        %1898 = vmatprep.subr.bf16.mxu0 0
        %1899 = vmatpush1.bf16.msra.mxu0 0
        %1900 = vmatprep.subr.bf16.mxu0 0
        %1901 = vmatpush1.bf16.msra.mxu0 0
        %1902 = vmatprep.subr.bf16.mxu0 0
        %1903 = vmatpush1.bf16.msra.mxu0 0
        %1904 = vmatprep.subr.bf16.mxu0 0
        %1905 = vmatpush1.bf16.msra.mxu0 0
        %1906 = vmatprep.subr.bf16.mxu0 0
        %1907 = vmatpush1.bf16.msra.mxu0 0
        %1908 = vmatprep.subr.bf16.mxu0 0
        %1909 = vmatpush1.bf16.msra.mxu0 0
        %1910 = vmatprep.mubr.bf16.mxu0 0
        %1911 = vmatmul.mubr.bf16.gmra.mrb[0].mxu0 %v1873
        %v1912 = vpop.f32.mrb[0].mxu0
        %v1913 = vadd.f32 %v1817, %v1912
        %v1914 = vpop.f32.mrb[0].mxu0
        %v1915 = vpop.f32.mrb[0].mxu0
        %v1916 = vadd.f32 %v1818, %v1915
        %v1917 = vpop.f32.mrb[0].mxu0
        %1918 = vdwg.mxu0
        %v1920 = vsel %vm1823, %v1797, 0
        %v1923 = vsel %vm1827, %v1801, 0
        %1925 = vmatprep.subr.bf16.mxu0 0
        %1926 = vmatpush1.bf16.msra.mxu0 %v1923
        %1927 = vmatprep.subr.bf16.mxu0 0
        %1928 = vmatpush1.bf16.msra.mxu0 0
        %1929 = vmatprep.subr.bf16.mxu0 0
        %1930 = vmatpush1.bf16.msra.mxu0 0
        %1931 = vmatprep.subr.bf16.mxu0 0
        %1932 = vmatpush1.bf16.msra.mxu0 0
        %1933 = vmatprep.subr.bf16.mxu0 0
        %1934 = vmatpush1.bf16.msra.mxu0 0
        %1935 = vmatprep.subr.bf16.mxu0 0
        %1936 = vmatpush1.bf16.msra.mxu0 0
        %1937 = vmatprep.subr.bf16.mxu0 0
        %1938 = vmatpush1.bf16.msra.mxu0 0
        %1939 = vmatprep.subr.bf16.mxu0 0
        %1940 = vmatpush1.bf16.msra.mxu0 0
        %1941 = vmatprep.subr.bf16.mxu0 0
        %1942 = vmatpush1.bf16.msra.mxu0 0
        %1943 = vmatprep.subr.bf16.mxu0 0
        %1944 = vmatpush1.bf16.msra.mxu0 0
        %1945 = vmatprep.subr.bf16.mxu0 0
        %1946 = vmatpush1.bf16.msra.mxu0 0
        %1947 = vmatprep.subr.bf16.mxu0 0
        %1948 = vmatpush1.bf16.msra.mxu0 0
        %1949 = vmatprep.subr.bf16.mxu0 0
        %1950 = vmatpush1.bf16.msra.mxu0 0
        %1951 = vmatprep.subr.bf16.mxu0 0
        %1952 = vmatpush1.bf16.msra.mxu0 0
        %1953 = vmatprep.subr.bf16.mxu0 0
        %1954 = vmatpush1.bf16.msra.mxu0 0
        %1955 = vmatprep.subr.bf16.mxu0 0
        %1956 = vmatpush1.bf16.msra.mxu0 0
        %1957 = vmatprep.mubr.bf16.mxu0 0
        %1958 = vmatmul.mubr.bf16.gmra.mrb[0].mxu0 %v1920
        %v1959 = vpop.f32.mrb[0].mxu0
        %v1960 = vadd.f32 %v1819, %v1959
        %v1961 = vpop.f32.mrb[0].mxu0
        %v1962 = vpop.f32.mrb[0].mxu0
        %v1963 = vadd.f32 %v1820, %v1962
        %v1964 = vpop.f32.mrb[0].mxu0
        %1965 = vdwg.mxu0
        %v1967 = vsel %vm1823, %v1798, 0
        %v1970 = vsel %vm1827, %v1802, 0
        %1972 = vmatprep.subr.bf16.mxu0 0
        %1973 = vmatpush1.bf16.msra.mxu0 %v1970
        %1974 = vmatprep.subr.bf16.mxu0 0
        %1975 = vmatpush1.bf16.msra.mxu0 0
        %1976 = vmatprep.subr.bf16.mxu0 0
        %1977 = vmatpush1.bf16.msra.mxu0 0
        %1978 = vmatprep.subr.bf16.mxu0 0
        %1979 = vmatpush1.bf16.msra.mxu0 0
        %1980 = vmatprep.subr.bf16.mxu0 0
        %1981 = vmatpush1.bf16.msra.mxu0 0
        %1982 = vmatprep.subr.bf16.mxu0 0
        %1983 = vmatpush1.bf16.msra.mxu0 0
        %1984 = vmatprep.subr.bf16.mxu0 0
        %1985 = vmatpush1.bf16.msra.mxu0 0
        %1986 = vmatprep.subr.bf16.mxu0 0
        %1987 = vmatpush1.bf16.msra.mxu0 0
        %1988 = vmatprep.subr.bf16.mxu0 0
        %1989 = vmatpush1.bf16.msra.mxu0 0
        %1990 = vmatprep.subr.bf16.mxu0 0
        %1991 = vmatpush1.bf16.msra.mxu0 0
        %1992 = vmatprep.subr.bf16.mxu0 0
        %1993 = vmatpush1.bf16.msra.mxu0 0
        %1994 = vmatprep.subr.bf16.mxu0 0
        %1995 = vmatpush1.bf16.msra.mxu0 0
        %1996 = vmatprep.subr.bf16.mxu0 0
        %1997 = vmatpush1.bf16.msra.mxu0 0
        %1998 = vmatprep.subr.bf16.mxu0 0
        %1999 = vmatpush1.bf16.msra.mxu0 0
        %2000 = vmatprep.subr.bf16.mxu0 0
        %2001 = vmatpush1.bf16.msra.mxu0 0
        %2002 = vmatprep.subr.bf16.mxu0 0
        %2003 = vmatpush1.bf16.msra.mxu0 0
        %2004 = vmatprep.mubr.bf16.mxu0 0
        %2005 = vmatmul.mubr.bf16.gmra.mrb[0].mxu0 %v1967
        %v2006 = vpop.f32.mrb[0].mxu0
        %v2007 = vadd.f32 %v1821, %v2006
        %v2008 = vpop.f32.mrb[0].mxu0
        %v2009 = vpop.f32.mrb[0].mxu0
        %v2010 = vadd.f32 %v1822, %v2009
        %v2011 = vpop.f32.mrb[0].mxu0
        %2012 = vdwg.mxu0
        %vm2013 = vcmask 72704
        %v2014 = vsel %vm2013, %v1866, -inf
        %2015 = vmax.xlane.f32.xlu0 %v2014
        %v2016 = vpop.xlane.xlu0 %2015
        %vm2017 = vcmask 65536
        %v2018 = vsel %vm2017, %v1869, -inf
        %2019 = vmax.xlane.f32.xlu0 %v2018
        %v2020 = vpop.xlane.xlu0 %2019
        %v2021 = vsel %vm2013, %v1913, -inf
        %2022 = vmax.xlane.f32.xlu0 %v2021
        %v2023 = vpop.xlane.xlu0 %2022
        %v2024 = vsel %vm2017, %v1916, -inf
        %2025 = vmax.xlane.f32.xlu0 %v2024
        %v2026 = vpop.xlane.xlu0 %2025
        %v2027 = vsel %vm2013, %v1960, -inf
        %2028 = vmax.xlane.f32.xlu0 %v2027
        %v2029 = vpop.xlane.xlu0 %2028
        %v2030 = vsel %vm2017, %v1963, -inf
        %2031 = vmax.xlane.f32.xlu0 %v2030
        %v2032 = vpop.xlane.xlu0 %2031
        %v2033 = vsel %vm2013, %v2007, -inf
        %2034 = vmax.xlane.f32.xlu0 %v2033
        %v2035 = vpop.xlane.xlu0 %2034
        %v2036 = vsel %vm2017, %v2010, -inf
        %2037 = vmax.xlane.f32.xlu0 %v2036
        %v2038 = vpop.xlane.xlu0 %2037
        %v2039 = vsub.f32 %v1866, %v2016
        %v2040 = vsub.f32 %v1869, %v2020
        %v2041 = vsub.f32 %v1913, %v2023
        %v2042 = vsub.f32 %v1916, %v2026
        %v2043 = vsub.f32 %v1960, %v2029
        %v2044 = vsub.f32 %v1963, %v2032
        %v2045 = vsub.f32 %v2007, %v2035
        %v2046 = vsub.f32 %v2010, %v2038
        %v2047 = vmul.f32 %v2039, 1.442695
        %v2048 = vpow.pop %v2047
        %v2049 = vmul.f32 %v2040, 1.442695
        %v2050 = vpow.pop %v2049
        %v2051 = vmul.f32 %v2041, 1.442695
        %v2052 = vpow.pop %v2051
        %v2053 = vmul.f32 %v2042, 1.442695
        %v2054 = vpow.pop %v2053
        %v2055 = vmul.f32 %v2043, 1.442695
        %v2056 = vpow.pop %v2055
        %v2057 = vmul.f32 %v2044, 1.442695
        %v2058 = vpow.pop %v2057
        %v2059 = vmul.f32 %v2045, 1.442695
        %v2060 = vpow.pop %v2059
        %v2061 = vmul.f32 %v2046, 1.442695
        %v2062 = vpow.pop %v2061
        %v2063 = vsel %vm2013, %v2048, 0.0
        %2064 = vadd.xlane.f32.xlu0 %v2063
        %v2065 = vpop.xlane.xlu0 %2064
        %v2066 = vsel %vm2017, %v2050, 0.0
        %2067 = vadd.xlane.f32.xlu0 %v2066
        %v2068 = vpop.xlane.xlu0 %2067
        %v2069 = vsel %vm2013, %v2052, 0.0
        %2070 = vadd.xlane.f32.xlu0 %v2069
        %v2071 = vpop.xlane.xlu0 %2070
        %v2072 = vsel %vm2017, %v2054, 0.0
        %2073 = vadd.xlane.f32.xlu0 %v2072
        %v2074 = vpop.xlane.xlu0 %2073
        %v2075 = vsel %vm2013, %v2056, 0.0
        %2076 = vadd.xlane.f32.xlu0 %v2075
        %v2077 = vpop.xlane.xlu0 %2076
        %v2078 = vsel %vm2017, %v2058, 0.0
        %2079 = vadd.xlane.f32.xlu0 %v2078
        %v2080 = vpop.xlane.xlu0 %2079
        %v2081 = vsel %vm2013, %v2060, 0.0
        %2082 = vadd.xlane.f32.xlu0 %v2081
        %v2083 = vpop.xlane.xlu0 %2082
        %v2084 = vsel %vm2017, %v2062, 0.0
        %2085 = vadd.xlane.f32.xlu0 %v2084
        %v2086 = vpop.xlane.xlu0 %2085
        %v2087 = vrcp.pop %v2065
        %v2088 = vrcp.pop %v2068
        %v2089 = vrcp.pop %v2071
        %v2090 = vrcp.pop %v2074
        %v2091 = vrcp.pop %v2077
        %v2092 = vrcp.pop %v2080
        %v2093 = vrcp.pop %v2083
        %v2094 = vrcp.pop %v2086
        %v2095 = vmul.f32 %v2048, %v2087
        %v2096 = vmul.f32 %v2050, %v2088
        %v2097 = vmul.f32 %v2052, %v2089
        %v2098 = vmul.f32 %v2054, %v2090
        %v2099 = vmul.f32 %v2056, %v2091
        %v2100 = vmul.f32 %v2058, %v2092
        %v2101 = vmul.f32 %v2060, %v2093
        %v2102 = vmul.f32 %v2062, %v2094
        %v2103 = vpack.c.bf16 %v2096, %v2095
        %v2104 = vpack.c.bf16 %v2098, %v2097
        %v2105 = vpack.c.bf16 %v2100, %v2099
        %v2106 = vpack.c.bf16 %v2102, %v2101
        %v2108 = vsel %vm2013, %v1803, 0
        %v2111 = vsel %vm2013, %v2103, 0
        %2113 = vmatprep.subr.bf16.mxu0 0
        %2114 = vmatpush1.bf16.xpose.msra.mxu0 %v2111
        %2115 = vmatprep.subr.bf16.mxu0 0
        %2116 = vmatpush1.bf16.xpose.msra.mxu0 0
        %2117 = vmatprep.subr.bf16.mxu0 0
        %2118 = vmatpush1.bf16.xpose.msra.mxu0 0
        %2119 = vmatprep.subr.bf16.mxu0 0
        %2120 = vmatpush1.bf16.xpose.msra.mxu0 0
        %2121 = vmatprep.subr.bf16.mxu0 0
        %2122 = vmatpush1.bf16.xpose.msra.mxu0 0
        %2123 = vmatprep.subr.bf16.mxu0 0
        %2124 = vmatpush1.bf16.xpose.msra.mxu0 0
        %2125 = vmatprep.subr.bf16.mxu0 0
        %2126 = vmatpush1.bf16.xpose.msra.mxu0 0
        %2127 = vmatprep.subr.bf16.mxu0 0
        %2128 = vmatpush1.bf16.xpose.msra.mxu0 0
        %2129 = vmatprep.subr.bf16.mxu0 0
        %2130 = vmatpush1.bf16.xpose.msra.mxu0 0
        %2131 = vmatprep.subr.bf16.mxu0 0
        %2132 = vmatpush1.bf16.xpose.msra.mxu0 0
        %2133 = vmatprep.subr.bf16.mxu0 0
        %2134 = vmatpush1.bf16.xpose.msra.mxu0 0
        %2135 = vmatprep.subr.bf16.mxu0 0
        %2136 = vmatpush1.bf16.xpose.msra.mxu0 0
        %2137 = vmatprep.subr.bf16.mxu0 0
        %2138 = vmatpush1.bf16.xpose.msra.mxu0 0
        %2139 = vmatprep.subr.bf16.mxu0 0
        %2140 = vmatpush1.bf16.xpose.msra.mxu0 0
        %2141 = vmatprep.subr.bf16.mxu0 0
        %2142 = vmatpush1.bf16.xpose.msra.mxu0 0
        %2143 = vmatprep.subr.bf16.mxu0 0
        %2144 = vmatpush1.bf16.xpose.msra.mxu0 0
        %2145 = vmatprep.mubr.bf16.mxu0 0
        %2146 = vmatmul.mubr.bf16.gmra.mrb[0].mxu0 %v2108
        %v2147 = vpop.f32.mrb[0].mxu0
        %v2148 = vadd.f32 0.0, %v2147
        %v2149 = vpop.f32.mrb[0].mxu0
        %v2150 = vpop.f32.mrb[0].mxu0
        %v2151 = vpop.f32.mrb[0].mxu0
        %2152 = vdwg.mxu0
        %v2154 = vsel %vm2013, %v1804, 0
        %v2157 = vsel %vm2013, %v2104, 0
        %2159 = vmatprep.subr.bf16.mxu0 0
        %2160 = vmatpush1.bf16.xpose.msra.mxu0 %v2157
        %2161 = vmatprep.subr.bf16.mxu0 0
        %2162 = vmatpush1.bf16.xpose.msra.mxu0 0
        %2163 = vmatprep.subr.bf16.mxu0 0
        %2164 = vmatpush1.bf16.xpose.msra.mxu0 0
        %2165 = vmatprep.subr.bf16.mxu0 0
        %2166 = vmatpush1.bf16.xpose.msra.mxu0 0
        %2167 = vmatprep.subr.bf16.mxu0 0
        %2168 = vmatpush1.bf16.xpose.msra.mxu0 0
        %2169 = vmatprep.subr.bf16.mxu0 0
        %2170 = vmatpush1.bf16.xpose.msra.mxu0 0
        %2171 = vmatprep.subr.bf16.mxu0 0
        %2172 = vmatpush1.bf16.xpose.msra.mxu0 0
        %2173 = vmatprep.subr.bf16.mxu0 0
        %2174 = vmatpush1.bf16.xpose.msra.mxu0 0
        %2175 = vmatprep.subr.bf16.mxu0 0
        %2176 = vmatpush1.bf16.xpose.msra.mxu0 0
        %2177 = vmatprep.subr.bf16.mxu0 0
        %2178 = vmatpush1.bf16.xpose.msra.mxu0 0
        %2179 = vmatprep.subr.bf16.mxu0 0
        %2180 = vmatpush1.bf16.xpose.msra.mxu0 0
        %2181 = vmatprep.subr.bf16.mxu0 0
        %2182 = vmatpush1.bf16.xpose.msra.mxu0 0
        %2183 = vmatprep.subr.bf16.mxu0 0
        %2184 = vmatpush1.bf16.xpose.msra.mxu0 0
        %2185 = vmatprep.subr.bf16.mxu0 0
        %2186 = vmatpush1.bf16.xpose.msra.mxu0 0
        %2187 = vmatprep.subr.bf16.mxu0 0
        %2188 = vmatpush1.bf16.xpose.msra.mxu0 0
        %2189 = vmatprep.subr.bf16.mxu0 0
        %2190 = vmatpush1.bf16.xpose.msra.mxu0 0
        %2191 = vmatprep.mubr.bf16.mxu0 0
        %2192 = vmatmul.mubr.bf16.gmra.mrb[0].mxu0 %v2154
        %v2193 = vpop.f32.mrb[0].mxu0
        %v2194 = vadd.f32 0.0, %v2193
        %v2195 = vpop.f32.mrb[0].mxu0
        %v2196 = vpop.f32.mrb[0].mxu0
        %v2197 = vpop.f32.mrb[0].mxu0
        %2198 = vdwg.mxu0
        %v2200 = vsel %vm2013, %v1805, 0
        %v2203 = vsel %vm2013, %v2105, 0
        %2205 = vmatprep.subr.bf16.mxu0 0
        %2206 = vmatpush1.bf16.xpose.msra.mxu0 %v2203
        %2207 = vmatprep.subr.bf16.mxu0 0
        %2208 = vmatpush1.bf16.xpose.msra.mxu0 0
        %2209 = vmatprep.subr.bf16.mxu0 0
        %2210 = vmatpush1.bf16.xpose.msra.mxu0 0
        %2211 = vmatprep.subr.bf16.mxu0 0
        %2212 = vmatpush1.bf16.xpose.msra.mxu0 0
        %2213 = vmatprep.subr.bf16.mxu0 0
        %2214 = vmatpush1.bf16.xpose.msra.mxu0 0
        %2215 = vmatprep.subr.bf16.mxu0 0
        %2216 = vmatpush1.bf16.xpose.msra.mxu0 0
        %2217 = vmatprep.subr.bf16.mxu0 0
        %2218 = vmatpush1.bf16.xpose.msra.mxu0 0
        %2219 = vmatprep.subr.bf16.mxu0 0
        %2220 = vmatpush1.bf16.xpose.msra.mxu0 0
        %2221 = vmatprep.subr.bf16.mxu0 0
        %2222 = vmatpush1.bf16.xpose.msra.mxu0 0
        %2223 = vmatprep.subr.bf16.mxu0 0
        %2224 = vmatpush1.bf16.xpose.msra.mxu0 0
        %2225 = vmatprep.subr.bf16.mxu0 0
        %2226 = vmatpush1.bf16.xpose.msra.mxu0 0
        %2227 = vmatprep.subr.bf16.mxu0 0
        %2228 = vmatpush1.bf16.xpose.msra.mxu0 0
        %2229 = vmatprep.subr.bf16.mxu0 0
        %2230 = vmatpush1.bf16.xpose.msra.mxu0 0
        %2231 = vmatprep.subr.bf16.mxu0 0
        %2232 = vmatpush1.bf16.xpose.msra.mxu0 0
        %2233 = vmatprep.subr.bf16.mxu0 0
        %2234 = vmatpush1.bf16.xpose.msra.mxu0 0
        %2235 = vmatprep.subr.bf16.mxu0 0
        %2236 = vmatpush1.bf16.xpose.msra.mxu0 0
        %2237 = vmatprep.mubr.bf16.mxu0 0
        %2238 = vmatmul.mubr.bf16.gmra.mrb[0].mxu0 %v2200
        %v2239 = vpop.f32.mrb[0].mxu0
        %v2240 = vadd.f32 0.0, %v2239
        %v2241 = vpop.f32.mrb[0].mxu0
        %v2242 = vpop.f32.mrb[0].mxu0
        %v2243 = vpop.f32.mrb[0].mxu0
        %2244 = vdwg.mxu0
        %v2246 = vsel %vm2013, %v1806, 0
        %v2249 = vsel %vm2013, %v2106, 0
        %2251 = vmatprep.subr.bf16.mxu0 0
        %2252 = vmatpush1.bf16.xpose.msra.mxu0 %v2249
        %2253 = vmatprep.subr.bf16.mxu0 0
        %2254 = vmatpush1.bf16.xpose.msra.mxu0 0
        %2255 = vmatprep.subr.bf16.mxu0 0
        %2256 = vmatpush1.bf16.xpose.msra.mxu0 0
        %2257 = vmatprep.subr.bf16.mxu0 0
        %2258 = vmatpush1.bf16.xpose.msra.mxu0 0
        %2259 = vmatprep.subr.bf16.mxu0 0
        %2260 = vmatpush1.bf16.xpose.msra.mxu0 0
        %2261 = vmatprep.subr.bf16.mxu0 0
        %2262 = vmatpush1.bf16.xpose.msra.mxu0 0
        %2263 = vmatprep.subr.bf16.mxu0 0
        %2264 = vmatpush1.bf16.xpose.msra.mxu0 0
        %2265 = vmatprep.subr.bf16.mxu0 0
        %2266 = vmatpush1.bf16.xpose.msra.mxu0 0
        %2267 = vmatprep.subr.bf16.mxu0 0
        %2268 = vmatpush1.bf16.xpose.msra.mxu0 0
        %2269 = vmatprep.subr.bf16.mxu0 0
        %2270 = vmatpush1.bf16.xpose.msra.mxu0 0
        %2271 = vmatprep.subr.bf16.mxu0 0
        %2272 = vmatpush1.bf16.xpose.msra.mxu0 0
        %2273 = vmatprep.subr.bf16.mxu0 0
        %2274 = vmatpush1.bf16.xpose.msra.mxu0 0
        %2275 = vmatprep.subr.bf16.mxu0 0
        %2276 = vmatpush1.bf16.xpose.msra.mxu0 0
        %2277 = vmatprep.subr.bf16.mxu0 0
        %2278 = vmatpush1.bf16.xpose.msra.mxu0 0
        %2279 = vmatprep.subr.bf16.mxu0 0
        %2280 = vmatpush1.bf16.xpose.msra.mxu0 0
        %2281 = vmatprep.subr.bf16.mxu0 0
        %2282 = vmatpush1.bf16.xpose.msra.mxu0 0
        %2283 = vmatprep.mubr.bf16.mxu0 0
        %2284 = vmatmul.mubr.bf16.gmra.mrb[0].mxu0 %v2246
        %v2285 = vpop.f32.mrb[0].mxu0
        %v2286 = vadd.f32 0.0, %v2285
        %v2287 = vpop.f32.mrb[0].mxu0
        %v2288 = vpop.f32.mrb[0].mxu0
        %v2289 = vpop.f32.mrb[0].mxu0
        %2290 = vdwg.mxu0
        %2291 = vxpose.xlu0.b32.start [1/16] %v2148, 128
        %2292 = vxpose.xlu0.b32.cont [2/16] %v2194, 128
        %2293 = vxpose.xlu0.b32.cont [3/16] %v2240, 128
        %2294 = vxpose.xlu0.b32.cont [4/16] %v2286, 128
        %2295 = vxpose.xlu0.b32.cont [5/16] 0.0, 128
        %2296 = vxpose.xlu0.b32.cont [6/16] 0.0, 128
        %2297 = vxpose.xlu0.b32.cont [7/16] 0.0, 128
        %2298 = vxpose.xlu0.b32.cont [8/16] 0.0, 128
        %2299 = vxpose.xlu0.b32.cont [9/16] 0.0, 128
        %2300 = vxpose.xlu0.b32.cont [10/16] 0.0, 128
        %2301 = vxpose.xlu0.b32.cont [11/16] 0.0, 128
        %2302 = vxpose.xlu0.b32.cont [12/16] 0.0, 128
        %2303 = vxpose.xlu0.b32.cont [13/16] 0.0, 128
        %2304 = vxpose.xlu0.b32.cont [14/16] 0.0, 128
        %2305 = vxpose.xlu0.b32.cont [15/16] 0.0, 128
        %2306 = vxpose.xlu0.b32.end [16/16] 0.0, 128
        %v2307 = vpop.trf.xlu0
        %v2308 = vpop.trf.xlu0
        %v2309 = vpop.trf.xlu0
        %v2310 = vpop.trf.xlu0
        %v2311 = vpop.trf.xlu0
        %v2312 = vpop.trf.xlu0
        %v2313 = vpop.trf.xlu0
        %v2314 = vpop.trf.xlu0
        %v2315 = vpop.trf.xlu0
        %v2316 = vpop.trf.xlu0
        %v2317 = vpop.trf.xlu0
        %v2318 = vpop.trf.xlu0
        %v2319 = vpop.trf.xlu0
        %v2320 = vpop.trf.xlu0
        %v2321 = vpop.trf.xlu0
        %v2322 = vpop.trf.xlu0
        %v2323 = vpack.c.bf16 %v2308, %v2307
        %v2324 = vld [vmem:[%s1082] sm:$0xf]
        %v2325 = vld [vmem:[%s1082 + $0x4] sm:$0xf]
        %v2326 = vld [vmem:[%s1082 + $0x8] sm:$0xf]
        %v2327 = vld [vmem:[%s1082 + $0xc] sm:$0xf]
        %v2328 = vld [vmem:[%s1090] sm:$0x1]
        %v2330 = vlaneseq
        %v2331 = vshrl.u32 %v2330, 7
        %v2332 = vsub.s32 0, %v2331
        %v2333 = vrot.slane %v2328, %v2332
        %v2339 = vunpack.c.l.b16 %v2324
        %v2340 = vunpack.c.l.b16 %v2325
        %v2341 = vunpack.c.l.b16 %v2326
        %v2342 = vunpack.c.l.b16 %v2327
        %v2343 = vpack.c.b16 %v2340, %v2339
        %v2344 = vpack.c.b16 %v2342, %v2341
        %v2348 = vsel %vm1335, %v2323, 0
        %2350 = vmatprep.subr.bf16.mxu0 0
        %2351 = vmatpush1.bf16.msra.mxu0 %v2343
        %2352 = vmatprep.subr.bf16.mxu0 0
        %2353 = vmatpush1.bf16.msra.mxu0 %v2344
        %2354 = vmatprep.subr.bf16.mxu0 0
        %2355 = vmatpush1.bf16.msra.mxu0 0
        %2356 = vmatprep.subr.bf16.mxu0 0
        %2357 = vmatpush1.bf16.msra.mxu0 0
        %2358 = vmatprep.subr.bf16.mxu0 0
        %2359 = vmatpush1.bf16.msra.mxu0 0
        %2360 = vmatprep.subr.bf16.mxu0 0
        %2361 = vmatpush1.bf16.msra.mxu0 0
        %2362 = vmatprep.subr.bf16.mxu0 0
        %2363 = vmatpush1.bf16.msra.mxu0 0
        %2364 = vmatprep.subr.bf16.mxu0 0
        %2365 = vmatpush1.bf16.msra.mxu0 0
        %2366 = vmatprep.subr.bf16.mxu0 0
        %2367 = vmatpush1.bf16.msra.mxu0 0
        %2368 = vmatprep.subr.bf16.mxu0 0
        %2369 = vmatpush1.bf16.msra.mxu0 0
        %2370 = vmatprep.subr.bf16.mxu0 0
        %2371 = vmatpush1.bf16.msra.mxu0 0
        %2372 = vmatprep.subr.bf16.mxu0 0
        %2373 = vmatpush1.bf16.msra.mxu0 0
        %2374 = vmatprep.subr.bf16.mxu0 0
        %2375 = vmatpush1.bf16.msra.mxu0 0
        %2376 = vmatprep.subr.bf16.mxu0 0
        %2377 = vmatpush1.bf16.msra.mxu0 0
        %2378 = vmatprep.subr.bf16.mxu0 0
        %2379 = vmatpush1.bf16.msra.mxu0 0
        %2380 = vmatprep.subr.bf16.mxu0 0
        %2381 = vmatpush1.bf16.msra.mxu0 0
        %2382 = vmatprep.mubr.bf16.mxu0 0
        %2383 = vmatmul.mubr.bf16.gmra.mrb[0].mxu0 %v2348
        %v2384 = vpop.f32.mrb[0].mxu0
        %v2385 = vadd.f32 %v2333, %v2384
        %v2386 = vpop.f32.mrb[0].mxu0
        %v2387 = vpop.f32.mrb[0].mxu0
        %v2388 = vadd.f32 %v2333, %v2387
        %v2389 = vpop.f32.mrb[0].mxu0
        %2390 = vdwg.mxu0
        %v2391 = vadd.f32 %v1331, %v2385
        %v2392 = vadd.f32 %v1332, %v2388
        %v2393 = vld [vmem:[%s1098] sm:$0x1]
        %v2394 = vld [vmem:[%s1106] sm:$0x1]
        %v2395 = vsel %vm1335, %v2391, 0.0
        %2396 = vadd.xlane.f32.xlu0 %v2395
        %v2397 = vpop.xlane.xlu0 %2396
        %v2398 = vsel %vm1339, %v2392, 0.0
        %2399 = vadd.xlane.f32.xlu0 %v2398
        %v2400 = vpop.xlane.xlu0 %2399
        %v2401 = vmul.f32 %v2397, %v1343
        %v2402 = vmul.f32 %v2400, %v1343
        %v2403 = vsub.f32 %v2391, %v2401
        %v2404 = vsub.f32 %v2392, %v2402
        %v2405 = vmul.f32 %v2403, %v2403
        %v2406 = vmul.f32 %v2404, %v2404
        %v2407 = vsel %vm1335, %v2405, 0.0
        %2408 = vadd.xlane.f32.xlu0 %v2407
        %v2409 = vpop.xlane.xlu0 %2408
        %v2410 = vsel %vm1339, %v2406, 0.0
        %2411 = vadd.xlane.f32.xlu0 %v2410
        %v2412 = vpop.xlane.xlu0 %2411
        %v2413 = vmul.f32 %v2409, %v1343
        %v2414 = vmul.f32 %v2412, %v1343
        %v2415 = vadd.f32 %v2413, 1e-05
        %v2416 = vadd.f32 %v2414, 1e-05
        %v2417 = vrsqrt.pop %v2415
        %v2418 = vrsqrt.pop %v2416
        %v2419 = vmul.f32 %v2403, %v2417
        %v2420 = vmul.f32 %v2404, %v2418
        %v2422 = vlaneseq
        %v2423 = vshrl.u32 %v2422, 7
        %v2424 = vsub.s32 0, %v2423
        %v2425 = vrot.slane %v2393, %v2424
        %v2427 = vmul.f32 %v2419, %v2425
        %v2428 = vmul.f32 %v2420, %v2425
        %v2430 = vlaneseq
        %v2431 = vshrl.u32 %v2430, 7
        %v2432 = vsub.s32 0, %v2431
        %v2433 = vrot.slane %v2394, %v2432
        %v2435 = vadd.f32 %v2427, %v2433
        %v2436 = vadd.f32 %v2428, %v2433
        %v2437 = vpack.c.bf16 %v2436, %v2435
        %v2438 = vld [vmem:[%s1115] sm:$0xf]
        %v2439 = vld [vmem:[%s1115 + $0x4] sm:$0xf]
        %v2440 = vld [vmem:[%s1115 + $0x8] sm:$0xf]
        %v2441 = vld [vmem:[%s1115 + $0xc] sm:$0xf]
        %v2442 = vld [vmem:[%s1123] sm:$0x1]
        %v2444 = vlaneseq
        %v2445 = vshrl.u32 %v2444, 7
        %v2446 = vsub.s32 0, %v2445
        %v2447 = vrot.slane %v2442, %v2446
        %v2453 = vunpack.c.l.b16 %v2438
        %v2454 = vunpack.c.l.b16 %v2439
        %v2455 = vunpack.c.l.b16 %v2440
        %v2456 = vunpack.c.l.b16 %v2441
        %v2457 = vpack.c.b16 %v2454, %v2453
        %v2458 = vpack.c.b16 %v2456, %v2455
        %v2462 = vsel %vm1335, %v2437, 0
        %2464 = vmatprep.subr.bf16.mxu0 0
        %2465 = vmatpush1.bf16.msra.mxu0 %v2457
        %2466 = vmatprep.subr.bf16.mxu0 0
        %2467 = vmatpush1.bf16.msra.mxu0 %v2458
        %2468 = vmatprep.subr.bf16.mxu0 0
        %2469 = vmatpush1.bf16.msra.mxu0 0
        %2470 = vmatprep.subr.bf16.mxu0 0
        %2471 = vmatpush1.bf16.msra.mxu0 0
        %2472 = vmatprep.subr.bf16.mxu0 0
        %2473 = vmatpush1.bf16.msra.mxu0 0
        %2474 = vmatprep.subr.bf16.mxu0 0
        %2475 = vmatpush1.bf16.msra.mxu0 0
        %2476 = vmatprep.subr.bf16.mxu0 0
        %2477 = vmatpush1.bf16.msra.mxu0 0
        %2478 = vmatprep.subr.bf16.mxu0 0
        %2479 = vmatpush1.bf16.msra.mxu0 0
        %2480 = vmatprep.subr.bf16.mxu0 0
        %2481 = vmatpush1.bf16.msra.mxu0 0
        %2482 = vmatprep.subr.bf16.mxu0 0
        %2483 = vmatpush1.bf16.msra.mxu0 0
        %2484 = vmatprep.subr.bf16.mxu0 0
        %2485 = vmatpush1.bf16.msra.mxu0 0
        %2486 = vmatprep.subr.bf16.mxu0 0
        %2487 = vmatpush1.bf16.msra.mxu0 0
        %2488 = vmatprep.subr.bf16.mxu0 0
        %2489 = vmatpush1.bf16.msra.mxu0 0
        %2490 = vmatprep.subr.bf16.mxu0 0
        %2491 = vmatpush1.bf16.msra.mxu0 0
        %2492 = vmatprep.subr.bf16.mxu0 0
        %2493 = vmatpush1.bf16.msra.mxu0 0
        %2494 = vmatprep.subr.bf16.mxu0 0
        %2495 = vmatpush1.bf16.msra.mxu0 0
        %2496 = vmatprep.mubr.bf16.mxu0 0
        %2497 = vmatmul.mubr.bf16.gmra.mrb[0].mxu0 %v2462
        %v2498 = vpop.f32.mrb[0].mxu0
        %v2499 = vadd.f32 %v2447, %v2498
        %v2500 = vpop.f32.mrb[0].mxu0
        %v2501 = vpop.f32.mrb[0].mxu0
        %v2502 = vadd.f32 %v2447, %v2501
        %v2503 = vpop.f32.mrb[0].mxu0
        %2504 = vdwg.mxu0
        %v2505 = vmul.f32 %v2499, 0.5
        %v2506 = vmul.f32 %v2502, 0.5
        %v2507 = vrcp.pop 1.4142135
        %v2508 = vmul.f32 %v2499, %v2507
        %v2509 = vmul.f32 %v2502, %v2507
        %v2510 = verf.f32.pop %v2508
        %v2511 = verf.f32.pop %v2509
        %v2512 = vadd.f32 %v2510, 1.0
        %v2513 = vadd.f32 %v2511, 1.0
        %v2514 = vmul.f32 %v2505, %v2512
        %v2515 = vmul.f32 %v2506, %v2513
        %v2516 = vpack.c.bf16 %v2515, %v2514
        %v2517 = vld [vmem:[%s1132] sm:$0xf]
        %v2518 = vld [vmem:[%s1132 + $0x4] sm:$0xf]
        %v2519 = vld [vmem:[%s1132 + $0x8] sm:$0xf]
        %v2520 = vld [vmem:[%s1132 + $0xc] sm:$0xf]
        %v2521 = vld [vmem:[%s1132 + $0x10] sm:$0xf]
        %v2522 = vld [vmem:[%s1132 + $0x14] sm:$0xf]
        %v2523 = vld [vmem:[%s1132 + $0x18] sm:$0xf]
        %v2524 = vld [vmem:[%s1132 + $0x1c] sm:$0xf]
        %v2525 = vld [vmem:[%s1140] sm:$0x1]
        %v2527 = vlaneseq
        %v2528 = vshrl.u32 %v2527, 7
        %v2529 = vsub.s32 0, %v2528
        %v2530 = vrot.slane %v2525, %v2529
        %v2540 = vunpack.c.l.b16 %v2517
        %v2541 = vunpack.c.l.b16 %v2518
        %v2542 = vunpack.c.l.b16 %v2519
        %v2543 = vunpack.c.l.b16 %v2520
        %v2544 = vunpack.c.l.b16 %v2521
        %v2545 = vunpack.c.l.b16 %v2522
        %v2546 = vunpack.c.l.b16 %v2523
        %v2547 = vunpack.c.l.b16 %v2524
        %v2548 = vpack.c.b16 %v2541, %v2540
        %v2549 = vpack.c.b16 %v2543, %v2542
        %v2550 = vpack.c.b16 %v2545, %v2544
        %v2551 = vpack.c.b16 %v2547, %v2546
        %vm2556 = vcmask 523264
        %v2558 = vsel %vm2556, %v2516, 0
        %2560 = vmatprep.subr.bf16.mxu0 0
        %2561 = vmatpush1.bf16.msra.mxu0 %v2548
        %2562 = vmatprep.subr.bf16.mxu0 0
        %2563 = vmatpush1.bf16.msra.mxu0 %v2549
        %2564 = vmatprep.subr.bf16.mxu0 0
        %2565 = vmatpush1.bf16.msra.mxu0 %v2550
        %2566 = vmatprep.subr.bf16.mxu0 0
        %2567 = vmatpush1.bf16.msra.mxu0 %v2551
        %2568 = vmatprep.subr.bf16.mxu0 0
        %2569 = vmatpush1.bf16.msra.mxu0 0
        %2570 = vmatprep.subr.bf16.mxu0 0
        %2571 = vmatpush1.bf16.msra.mxu0 0
        %2572 = vmatprep.subr.bf16.mxu0 0
        %2573 = vmatpush1.bf16.msra.mxu0 0
        %2574 = vmatprep.subr.bf16.mxu0 0
        %2575 = vmatpush1.bf16.msra.mxu0 0
        %2576 = vmatprep.subr.bf16.mxu0 0
        %2577 = vmatpush1.bf16.msra.mxu0 0
        %2578 = vmatprep.subr.bf16.mxu0 0
        %2579 = vmatpush1.bf16.msra.mxu0 0
        %2580 = vmatprep.subr.bf16.mxu0 0
        %2581 = vmatpush1.bf16.msra.mxu0 0
        %2582 = vmatprep.subr.bf16.mxu0 0
        %2583 = vmatpush1.bf16.msra.mxu0 0
        %2584 = vmatprep.subr.bf16.mxu0 0
        %2585 = vmatpush1.bf16.msra.mxu0 0
        %2586 = vmatprep.subr.bf16.mxu0 0
        %2587 = vmatpush1.bf16.msra.mxu0 0
        %2588 = vmatprep.subr.bf16.mxu0 0
        %2589 = vmatpush1.bf16.msra.mxu0 0
        %2590 = vmatprep.subr.bf16.mxu0 0
        %2591 = vmatpush1.bf16.msra.mxu0 0
        %2592 = vmatprep.mubr.bf16.mxu0 0
        %2593 = vmatmul.mubr.bf16.gmra.mrb[0].mxu0 %v2558
        %v2594 = vpop.f32.mrb[0].mxu0
        %v2595 = vadd.f32 %v2530, %v2594
        %v2596 = vpop.f32.mrb[0].mxu0
        %v2597 = vpop.f32.mrb[0].mxu0
        %v2598 = vadd.f32 %v2530, %v2597
        %v2599 = vpop.f32.mrb[0].mxu0
        %2600 = vdwg.mxu0
        %v2601 = vadd.f32 %v2391, %v2595
        %v2602 = vadd.f32 %v2392, %v2598
        %2603 = vst.msk [vmem:[#allocation2] sm:$0xff] %vm1335, %v2601
        %2604 = vst.msk [vmem:[#allocation2 + $0x8] sm:$0x1] %vm1339, %v2602
        %2605 = vst.msk [vmem:[%s1274] sm:$0xff] %vm1335, %v2601
        %2606 = vst.msk [vmem:[%s1274 + $0x8] sm:$0x1] %vm1339, %v2602
        %s2607 = sand.u32 %s571, 1
        %s2608 = scalar_lea.sflag [#allocation5], %s2607
        %s2609 = sand.u32 %s571, 1
        %s2610 = smul.addr %s2609, 16
        %s2611 = scalar_lea.vmem [#allocation27], %s2610
        // Predicated region
        $region185: #{tpu_custom_call.1} parent=99 // pred_check
          %p2612 = pneg %p581
        $region186: #{tpu_custom_call.1} parent=99 // pred_check_branch
          %2614 = sbr.rel (%p2612) target = $region188
        $region187: #{tpu_custom_call.1} parent=99 // pred_region
          %s2616 = ssub.s32 256, 256
          %2617 = vsyncadd %s2608, %s2616
          %s2618 = smul.addr %s45, 2
          %s2619 = smul.addr %s2618, 128
          %s2620 = scalar_lea.hbm %s20, %s2619
          %s2621 = sshll.u32 %s2611, 4
          %s2622 = int_to_ptr.vmem [resolvable:$true] %s2621
          %2627 = dma.vmem_to_hbm [thread:$0]  %s2622, 256, %s2620, %s2608, 128, 128, 8
        $region188: #{tpu_custom_call.1} parent=99 // pred_fallthru
          _
      $region100: #{tpu_custom_call.1} parent=5 // pred_fallthru
        _
      %p2628 = scmp.le.s32.totalorder 2, %s36
      // Predicated region
      $region189: #{tpu_custom_call.1} parent=5 // pred_check
        %p2629 = pneg %p2628
      $region190: #{tpu_custom_call.1} parent=5 // pred_check_branch
        %2631 = sbr.rel (%p2629) target = $region192
      $region191: #{tpu_custom_call.1} parent=5 // pred_region
        %s2632 = ssub.s32 %s36, 2
        // Predicated region
        $region193: #{tpu_custom_call.1} parent=191 // pred_check
          %p2633 = pneg %p587
        $region194: #{tpu_custom_call.1} parent=191 // pred_check_branch
          %2635 = sbr.rel (%p2633) target = $region196
        $region195: #{tpu_custom_call.1} parent=191 // pred_region
          %s2636 = sand.u32 %s572, 1
          %s2637 = scalar_lea.sflag [#allocation5], %s2636
          %s2638 = sand.u32 %s572, 1
          %s2639 = smul.addr %s2638, 16
          %s2640 = scalar_lea.vmem [#allocation27], %s2639
          %2641 = dma.done %s2637, 256
        $region196: #{tpu_custom_call.1} parent=191 // pred_fallthru
          _
      $region192: #{tpu_custom_call.1} parent=5 // pred_fallthru
        _
    $region6: #{tpu_custom_call.1} parent=1 // loop_footer
      %s40 = sadd.s32 1, %s36
    $region7: #{tpu_custom_call.1} parent=1 // loop_footer_branch
      %35 = sbr.rel target = $region3
    $region8: #{tpu_custom_call.1} parent=1 // loop_exit
      _
    %2642 = vsyncpa [#allocation4], 1
    %s2643 = scalar_lea.sflag [#allocation4], 1
    %2644 = vsyncpa %s2643, 1
    %2645 = vsyncpa [#allocation7], 1
    %s2646 = scalar_lea.sflag [#allocation7], 1
    %2647 = vsyncpa %s2646, 1
    %2648 = vsyncpa [#allocation10], 1
    %2649 = vsyncpa [#allocation5], 1
    %s2650 = scalar_lea.sflag [#allocation5], 1
    %2651 = vsyncpa %s2650, 1

</llo_original>
